<compile_context>
chip_gen: v7x
topology: tpu7x:2x2x1
jax: 0.10.0
libtpu: 0.0.40
codegen_flags: <defaults>
</compile_context>

<pallas_src>
import jax
import jax.numpy as jnp
from jax import lax
from jax.experimental import pallas as pl
from jax.experimental.pallas import tpu as pltpu

# ----------------------------- config (small) -------------------------------
N_VOCAB = 100
EMBED = 32
HIDDEN = 128          # fixed by the module: nn.LSTM(embed, 128, 2)
NUM_CLASSES0 = 4
NUM_CLASSES1 = 6
BATCH = 2
SEQ = 8
BP = 8                # batch padded to one sublane tile
OUT_PAD = 128         # lane-dense fused head output width


# ------------------------------ Pallas kernel -------------------------------
def myrnn_kernel(xproj_ref,          # (T*BP, 4H) f32  precomputed x@Wih0+b0, time-major
                 wbig_ref,           # (2H, 8H)  bf16  [[Wih1, Whh0],[Whh1, 0]], gates [i,f,o,g]
                 b1_ref,             # (1, 4H)   f32
                 wfc_ref,            # (H, 128)  bf16  fused+padded heads
                 bfc_ref,            # (1, 128)  f32
                 out_ref):           # (BP, 128) f32   lane-dense fused softmax output
    bp = out_ref.shape[0]
    T = xproj_ref.shape[0] // bp
    H4 = b1_ref.shape[1]
    H = H4 // 4
    H3 = 3 * H
    C0, C1 = NUM_CLASSES0, NUM_CLASSES1

    def cell(gates, c):
        # gate columns pre-permuted to [i, f, o, g]:
        # one sigmoid over 3H lanes, one tanh over H lanes (all f32 on VPU/EUP).
        sfo = jax.nn.sigmoid(gates[:, :H3])
        i = sfo[:, :H]
        f = sfo[:, H:2 * H]
        o = sfo[:, 2 * H:H3]
        g = jnp.tanh(gates[:, H3:])
        c_new = f * c + i * g
        h_new = o * jnp.tanh(c_new)
        return h_new, c_new

    def body(t, carry):
        # carry: h0_{t-1}, c0_{t-1}, h1_{t-1}, c1_{t-1}, r0 = h0_{t-1} @ Whh0
        h0, c0, h1, c1, r0 = carry
        off = pl.multiple_of(t * bp, bp)
        # layer-0 gates: precomputed x-projection (+bias) + recurrent term from
        # the PREVIOUS step's fused matmul -> no matmul on this part of the chain.
        g0 = xproj_ref[pl.ds(off, bp), :] + r0
        h0, c0 = cell(g0, c0)
        # single fused matmul per step (bf16 operands, f32 accumulation):
        #   [:, :4H] = h0_t @ Wih1 + h1_{t-1} @ Whh1   (layer-1 gates, pre-bias)
        #   [:, 4H:] = h0_t @ Whh0                      (recurrent part of g0_{t+1})
        lhs = jnp.concatenate([h0, h1], axis=1).astype(jnp.bfloat16)   # (BP, 2H)
        big = jnp.dot(lhs, wbig_ref[...], preferred_element_type=jnp.float32)
        r0 = big[:, H4:]
        g1 = big[:, :H4] + b1_ref[...]
        h1, c1 = cell(g1, c1)           # off the serial chain to the next matmul
        return (h0, c0, h1, c1, r0)

    zeros_h = jnp.zeros((bp, H), jnp.float32)
    zeros_r = jnp.zeros((bp, H4), jnp.float32)
    _, _, h1_last, _, _ = lax.fori_loop(
        0, T, body, (zeros_h, zeros_h, zeros_h, zeros_h, zeros_r), unroll=True)

    # TODO(synk): nn.Dropout is treated as identity (inference mode).

    # Fused + lane-padded classifier heads: one (BP,H)@(H,128) matmul, masked
    # per-head softmax so padded lanes never enter max/sum, one full-width store.
    logits = (jnp.dot(h1_last.astype(jnp.bfloat16), wfc_ref[...],
                      preferred_element_type=jnp.float32)
              + bfc_ref[...])                                  # (BP, 128)

    col = lax.broadcasted_iota(jnp.int32, logits.shape, 1)

    def masked_softmax(lo, hi):
        m = (col >= lo) & (col < hi)
        z = jnp.where(m, logits, -jnp.inf)
        mx = jnp.max(z, axis=1, keepdims=True)
        e = jnp.where(m, jnp.exp(logits - mx), 0.0)
        s = jnp.sum(e, axis=1, keepdims=True)
        return e * pl.reciprocal(s, approx=True)

    out_ref[...] = masked_softmax(0, C0) + masked_softmax(C0, C0 + C1)


# --------------------------- weight prepacking -------------------------------
def _reorder_gates_cols(w):
    # columns are [i | f | g | o] (PyTorch order, already transposed to (in,4H));
    # permute to [i | f | o | g].
    H = HIDDEN
    return jnp.concatenate([w[:, :2 * H], w[:, 3 * H:], w[:, 2 * H:3 * H]], axis=1)


def _reorder_gates_vec(b):
    H = HIDDEN
    return jnp.concatenate([b[:2 * H], b[3 * H:], b[2 * H:3 * H]])


def prepack_params(params):
    """One-time packing (NOT on the per-call path)."""
    H = HIDDEN

    # layer-0 input projection folded into the embedding table:
    #   etab_proj[v] = embedding[v] @ Wih0^T  (+ b0), gate cols [i,f,o,g]
    wih0 = _reorder_gates_cols(params["wih0"].T)                      # (E, 4H)
    b0 = _reorder_gates_vec(params["bih0"] + params["bhh0"])          # (4H,)
    etab_proj = params["embedding"].astype(jnp.float32) @ wih0 + b0   # (V, 4H) f32

    # wavefront-fused recurrent weights: [[Wih1, Whh0],[Whh1, 0]]
    whh0 = _reorder_gates_cols(params["whh0"].T)                      # (H, 4H)
    wih1 = _reorder_gates_cols(params["wih1"].T)                      # (H, 4H)
    whh1 = _reorder_gates_cols(params["whh1"].T)                      # (H, 4H)
    top = jnp.concatenate([wih1, whh0], axis=1)                       # (H, 8H)
    bot = jnp.concatenate([whh1, jnp.zeros_like(whh0)], axis=1)       # (H, 8H)
    wbig = jnp.concatenate([top, bot], axis=0).astype(jnp.bfloat16)   # (2H, 8H)
    b1 = _reorder_gates_vec(params["bih1"] + params["bhh1"]).reshape(1, -1)

    # fused heads, padded lane-dense to 128 columns
    wfc = jnp.zeros((H, OUT_PAD), jnp.float32)
    wfc = wfc.at[:, :NUM_CLASSES0].set(params["wfc0"].T)
    wfc = wfc.at[:, NUM_CLASSES0:NUM_CLASSES0 + NUM_CLASSES1].set(params["wfc1"].T)
    bfc = jnp.zeros((1, OUT_PAD), jnp.float32)
    bfc = bfc.at[0, :NUM_CLASSES0].set(params["bfc0"])
    bfc = bfc.at[0, NUM_CLASSES0:NUM_CLASSES0 + NUM_CLASSES1].set(params["bfc1"])

    return {
        "etab_proj": etab_proj,                    # (V, 4H) f32
        "wbig": wbig,                              # (2H, 8H) bf16
        "b1": b1.astype(jnp.float32),              # (1, 4H) f32
        "wfc": wfc.astype(jnp.bfloat16),           # (H, 128) bf16
        "bfc": bfc,                                # (1, 128) f32
    }


# ------------------------------- forward -------------------------------------
@jax.jit
def myrnn_forward(x_tokens, packed):
    # Only per-call glue: one tiny int pad/transpose + one row gather of the
    # prepacked token->gate-projection table. Everything else is in the kernel.
    B, T = x_tokens.shape
    ids = jnp.pad(x_tokens.T, ((0, 0), (0, BP - B))).reshape(T * BP)   # (T*BP,)
    xproj = jnp.take(packed["etab_proj"], ids, axis=0)                 # (T*BP, 4H)

    vmem = pl.BlockSpec(memory_space=pltpu.MemorySpace.VMEM)
    out = pl.pallas_call(
        myrnn_kernel,
        out_shape=jax.ShapeDtypeStruct((BP, OUT_PAD), jnp.float32),
        in_specs=[vmem] * 5,
        out_specs=vmem,
    )(xproj, packed["wbig"], packed["b1"], packed["wfc"], packed["bfc"])

    out0 = out[:B, :NUM_CLASSES0]
    out1 = out[:B, NUM_CLASSES0:NUM_CLASSES0 + NUM_CLASSES1]
    return out0, out1


# --------------------------- pure-JAX reference ------------------------------
def _lstm_layer_ref(x_seq, wih, whh, bih, bhh):
    B = x_seq.shape[0]
    H = whh.shape[1]

    def step(carry, x_t):
        h, c = carry
        gates = x_t @ wih.T + h @ whh.T + bih + bhh
        i, f, g, o = jnp.split(gates, 4, axis=1)
        i, f, o = jax.nn.sigmoid(i), jax.nn.sigmoid(f), jax.nn.sigmoid(o)
        g = jnp.tanh(g)
        c = f * c + i * g
        h = o * jnp.tanh(c)
        return (h, c), h

    init = (jnp.zeros((B, H), jnp.float32), jnp.zeros((B, H), jnp.float32))
    (_, _), hs = lax.scan(step, init, jnp.transpose(x_seq, (1, 0, 2)))
    return jnp.transpose(hs, (1, 0, 2))


def myrnn_reference(x_tokens, params):
    emb = jnp.take(params["embedding"], x_tokens, axis=0).astype(jnp.float32)
    h0 = _lstm_layer_ref(emb, params["wih0"], params["whh0"],
                         params["bih0"], params["bhh0"])
    h1 = _lstm_layer_ref(h0, params["wih1"], params["whh1"],
                         params["bih1"], params["bhh1"])
    last = h1[:, -1, :]
    l0 = jax.nn.softmax(last @ params["wfc0"].T + params["bfc0"], axis=1)
    l1 = jax.nn.softmax(last @ params["wfc1"].T + params["bfc1"], axis=1)
    return l0, l1


# ---------------------------------- main --------------------------------------
def init_params(key):
    ks = jax.random.split(key, 12)
    s = 0.1
    H4 = 4 * HIDDEN
    return {
        "embedding": jax.random.normal(ks[0], (N_VOCAB, EMBED), jnp.float32) * s,
        # layer 0 (PyTorch shapes: weight_ih (4H,E), weight_hh (4H,H), biases (4H,))
        "wih0": jax.random.normal(ks[1], (H4, EMBED), jnp.float32) * s,
        "whh0": jax.random.normal(ks[2], (H4, HIDDEN), jnp.float32) * s,
        "bih0": jax.random.normal(ks[3], (H4,), jnp.float32) * s,
        "bhh0": jax.random.normal(ks[4], (H4,), jnp.float32) * s,
        # layer 1
        "wih1": jax.random.normal(ks[5], (H4, HIDDEN), jnp.float32) * s,
        "whh1": jax.random.normal(ks[6], (H4, HIDDEN), jnp.float32) * s,
        "bih1": jax.random.normal(ks[7], (H4,), jnp.float32) * s,
        "bhh1": jax.random.normal(ks[8], (H4,), jnp.float32) * s,
        # heads (PyTorch Linear: weight (C,H), bias (C,))
        "wfc0": jax.random.normal(ks[9], (NUM_CLASSES0, HIDDEN), jnp.float32) * s,
        "bfc0": jax.random.normal(ks[10], (NUM_CLASSES0,), jnp.float32) * s,
        "wfc1": jax.random.normal(ks[11], (NUM_CLASSES1, HIDDEN), jnp.float32) * s,
        "bfc1": jnp.zeros((NUM_CLASSES1,), jnp.float32),
    }


if __name__ == "__main__":
    key = jax.random.PRNGKey(0)
    pkey, xkey = jax.random.split(key)
    params = init_params(pkey)
    x = jax.random.randint(xkey, (BATCH, SEQ), 0, N_VOCAB, dtype=jnp.int32)

    # one-time weight packing (off the per-call path)
    packed = jax.tree_util.tree_map(jax.block_until_ready, prepack_params(params))

    out0, out1 = jax.block_until_ready(myrnn_forward(x, packed))
    ref0, ref1 = myrnn_reference(x, params)

    assert out0.shape == (BATCH, NUM_CLASSES0) and out1.shape == (BATCH, NUM_CLASSES1)
    # bf16 matmul operands (f32 accumulation) -> relaxed tolerance vs f32 reference
    assert jnp.allclose(out0, ref0, rtol=2e-2, atol=2e-2)
    assert jnp.allclose(out1, ref1, rtol=2e-2, atol=2e-2)
    print("KERNEL_OK")
</pallas_src>

<mosaic_0001>
module attributes {stable_mosaic.version = 11 : i64} {
  func.func @myrnn_kernel(%arg0: memref<64x512xf32, #tpu.memory_space<vmem>>, %arg1: memref<256x1024xbf16, #tpu.memory_space<vmem>>, %arg2: memref<1x512xf32, #tpu.memory_space<vmem>>, %arg3: memref<128x128xbf16, #tpu.memory_space<vmem>>, %arg4: memref<1x128xf32, #tpu.memory_space<vmem>>, %arg5: memref<8x128xf32, #tpu.memory_space<vmem>>) attributes {dimension_semantics = [], scalar_prefetch = 0 : i64, scratch_operands = 0 : i64, tpu.core_type = #tpu.core_type<tc>} {
    %cst = arith.constant 0.000000e+00 : f32
    %0 = vector.broadcast %cst : f32 to vector<8x128xf32>
    %cst_0 = arith.constant 0.000000e+00 : f32
    %1 = vector.broadcast %cst_0 : f32 to vector<8x512xf32>
    %c0_i32 = arith.constant 0 : i32
    %c8_i32 = arith.constant 8 : i32
    %2 = arith.muli %c0_i32, %c8_i32 : i32
    %3 = tpu.assume_multiple %2, 8 : i32
    %4 = arith.index_cast %3 : i32 to index
    %c0 = arith.constant 0 : index
    %5 = vector.load %arg0[%4, %c0] : memref<64x512xf32, #tpu.memory_space<vmem>>, vector<8x512xf32>
    %6 = arith.addf %5, %1 : vector<8x512xf32>
    %7 = vector.extract_strided_slice %6 {offsets = [0, 0], sizes = [8, 384], strides = [1, 1]} : vector<8x512xf32> to vector<8x384xf32>
    %8 = arith.negf %7 : vector<8x384xf32>
    %9 = math.exp %8 : vector<8x384xf32>
    %cst_1 = arith.constant 1.000000e+00 : f32
    %10 = vector.broadcast %cst_1 : f32 to vector<8x384xf32>
    %11 = arith.addf %10, %9 : vector<8x384xf32>
    %12 = arith.divf %10, %11 : vector<8x384xf32>
    %13 = vector.extract_strided_slice %12 {offsets = [0, 0], sizes = [8, 128], strides = [1, 1]} : vector<8x384xf32> to vector<8x128xf32>
    %14 = vector.extract_strided_slice %12 {offsets = [0, 128], sizes = [8, 128], strides = [1, 1]} : vector<8x384xf32> to vector<8x128xf32>
    %15 = vector.extract_strided_slice %12 {offsets = [0, 256], sizes = [8, 128], strides = [1, 1]} : vector<8x384xf32> to vector<8x128xf32>
    %16 = vector.extract_strided_slice %6 {offsets = [0, 384], sizes = [8, 128], strides = [1, 1]} : vector<8x512xf32> to vector<8x128xf32>
    %17 = math.tanh %16 : vector<8x128xf32>
    %18 = arith.mulf %14, %0 : vector<8x128xf32>
    %19 = arith.mulf %13, %17 : vector<8x128xf32>
    %20 = arith.addf %18, %19 : vector<8x128xf32>
    %21 = math.tanh %20 : vector<8x128xf32>
    %22 = arith.mulf %15, %21 : vector<8x128xf32>
    %23 = tpu.concatenate %22, %0 in 1 : vector<8x128xf32>, vector<8x128xf32> -> vector<8x256xf32>
    %24 = arith.truncf %23 : vector<8x256xf32> to vector<8x256xbf16>
    %c0_2 = arith.constant 0 : index
    %c0_3 = arith.constant 0 : index
    %25 = vector.load %arg1[%c0_2, %c0_3] : memref<256x1024xbf16, #tpu.memory_space<vmem>>, vector<256x1024xbf16>
    %cst_4 = arith.constant dense<0.000000e+00> : vector<8x1024xf32>
    %26 = tpu.matmul %24, %25, %cst_4 {dimension_numbers = #tpu.dot_dimension_numbers<[1], [0], [0], [1], [0, 0, 1, 1], [], []>} : vector<8x256xbf16>, vector<256x1024xbf16>, vector<8x1024xf32> -> vector<8x1024xf32>
    %27 = vector.extract_strided_slice %26 {offsets = [0, 512], sizes = [8, 512], strides = [1, 1]} : vector<8x1024xf32> to vector<8x512xf32>
    %28 = vector.extract_strided_slice %26 {offsets = [0, 0], sizes = [8, 512], strides = [1, 1]} : vector<8x1024xf32> to vector<8x512xf32>
    %c0_5 = arith.constant 0 : index
    %c0_6 = arith.constant 0 : index
    %29 = vector.load %arg2[%c0_5, %c0_6] : memref<1x512xf32, #tpu.memory_space<vmem>>, vector<1x512xf32>
    %30 = vector.broadcast %29 : vector<1x512xf32> to vector<8x512xf32>
    %31 = arith.addf %28, %30 : vector<8x512xf32>
    %32 = vector.extract_strided_slice %31 {offsets = [0, 0], sizes = [8, 384], strides = [1, 1]} : vector<8x512xf32> to vector<8x384xf32>
    %33 = arith.negf %32 : vector<8x384xf32>
    %34 = math.exp %33 : vector<8x384xf32>
    %cst_7 = arith.constant 1.000000e+00 : f32
    %35 = vector.broadcast %cst_7 : f32 to vector<8x384xf32>
    %36 = arith.addf %35, %34 : vector<8x384xf32>
    %37 = arith.divf %35, %36 : vector<8x384xf32>
    %38 = vector.extract_strided_slice %37 {offsets = [0, 0], sizes = [8, 128], strides = [1, 1]} : vector<8x384xf32> to vector<8x128xf32>
    %39 = vector.extract_strided_slice %37 {offsets = [0, 128], sizes = [8, 128], strides = [1, 1]} : vector<8x384xf32> to vector<8x128xf32>
    %40 = vector.extract_strided_slice %37 {offsets = [0, 256], sizes = [8, 128], strides = [1, 1]} : vector<8x384xf32> to vector<8x128xf32>
    %41 = vector.extract_strided_slice %31 {offsets = [0, 384], sizes = [8, 128], strides = [1, 1]} : vector<8x512xf32> to vector<8x128xf32>
    %42 = math.tanh %41 : vector<8x128xf32>
    %43 = arith.mulf %39, %0 : vector<8x128xf32>
    %44 = arith.mulf %38, %42 : vector<8x128xf32>
    %45 = arith.addf %43, %44 : vector<8x128xf32>
    %46 = math.tanh %45 : vector<8x128xf32>
    %47 = arith.mulf %40, %46 : vector<8x128xf32>
    %c1_i32 = arith.constant 1 : i32
    %c8_i32_8 = arith.constant 8 : i32
    %48 = arith.muli %c1_i32, %c8_i32_8 : i32
    %49 = tpu.assume_multiple %48, 8 : i32
    %50 = arith.index_cast %49 : i32 to index
    %c0_9 = arith.constant 0 : index
    %51 = vector.load %arg0[%50, %c0_9] : memref<64x512xf32, #tpu.memory_space<vmem>>, vector<8x512xf32>
    %52 = arith.addf %51, %27 : vector<8x512xf32>
    %53 = vector.extract_strided_slice %52 {offsets = [0, 0], sizes = [8, 384], strides = [1, 1]} : vector<8x512xf32> to vector<8x384xf32>
    %54 = arith.negf %53 : vector<8x384xf32>
    %55 = math.exp %54 : vector<8x384xf32>
    %cst_10 = arith.constant 1.000000e+00 : f32
    %56 = vector.broadcast %cst_10 : f32 to vector<8x384xf32>
    %57 = arith.addf %56, %55 : vector<8x384xf32>
    %58 = arith.divf %56, %57 : vector<8x384xf32>
    %59 = vector.extract_strided_slice %58 {offsets = [0, 0], sizes = [8, 128], strides = [1, 1]} : vector<8x384xf32> to vector<8x128xf32>
    %60 = vector.extract_strided_slice %58 {offsets = [0, 128], sizes = [8, 128], strides = [1, 1]} : vector<8x384xf32> to vector<8x128xf32>
    %61 = vector.extract_strided_slice %58 {offsets = [0, 256], sizes = [8, 128], strides = [1, 1]} : vector<8x384xf32> to vector<8x128xf32>
    %62 = vector.extract_strided_slice %52 {offsets = [0, 384], sizes = [8, 128], strides = [1, 1]} : vector<8x512xf32> to vector<8x128xf32>
    %63 = math.tanh %62 : vector<8x128xf32>
    %64 = arith.mulf %60, %20 : vector<8x128xf32>
    %65 = arith.mulf %59, %63 : vector<8x128xf32>
    %66 = arith.addf %64, %65 : vector<8x128xf32>
    %67 = math.tanh %66 : vector<8x128xf32>
    %68 = arith.mulf %61, %67 : vector<8x128xf32>
    %69 = tpu.concatenate %68, %47 in 1 : vector<8x128xf32>, vector<8x128xf32> -> vector<8x256xf32>
    %70 = arith.truncf %69 : vector<8x256xf32> to vector<8x256xbf16>
    %c0_11 = arith.constant 0 : index
    %c0_12 = arith.constant 0 : index
    %71 = vector.load %arg1[%c0_11, %c0_12] : memref<256x1024xbf16, #tpu.memory_space<vmem>>, vector<256x1024xbf16>
    %cst_13 = arith.constant dense<0.000000e+00> : vector<8x1024xf32>
    %72 = tpu.matmul %70, %71, %cst_13 {dimension_numbers = #tpu.dot_dimension_numbers<[1], [0], [0], [1], [0, 0, 1, 1], [], []>} : vector<8x256xbf16>, vector<256x1024xbf16>, vector<8x1024xf32> -> vector<8x1024xf32>
    %73 = vector.extract_strided_slice %72 {offsets = [0, 512], sizes = [8, 512], strides = [1, 1]} : vector<8x1024xf32> to vector<8x512xf32>
    %74 = vector.extract_strided_slice %72 {offsets = [0, 0], sizes = [8, 512], strides = [1, 1]} : vector<8x1024xf32> to vector<8x512xf32>
    %c0_14 = arith.constant 0 : index
    %c0_15 = arith.constant 0 : index
    %75 = vector.load %arg2[%c0_14, %c0_15] : memref<1x512xf32, #tpu.memory_space<vmem>>, vector<1x512xf32>
    %76 = vector.broadcast %75 : vector<1x512xf32> to vector<8x512xf32>
    %77 = arith.addf %74, %76 : vector<8x512xf32>
    %78 = vector.extract_strided_slice %77 {offsets = [0, 0], sizes = [8, 384], strides = [1, 1]} : vector<8x512xf32> to vector<8x384xf32>
    %79 = arith.negf %78 : vector<8x384xf32>
    %80 = math.exp %79 : vector<8x384xf32>
    %cst_16 = arith.constant 1.000000e+00 : f32
    %81 = vector.broadcast %cst_16 : f32 to vector<8x384xf32>
    %82 = arith.addf %81, %80 : vector<8x384xf32>
    %83 = arith.divf %81, %82 : vector<8x384xf32>
    %84 = vector.extract_strided_slice %83 {offsets = [0, 0], sizes = [8, 128], strides = [1, 1]} : vector<8x384xf32> to vector<8x128xf32>
    %85 = vector.extract_strided_slice %83 {offsets = [0, 128], sizes = [8, 128], strides = [1, 1]} : vector<8x384xf32> to vector<8x128xf32>
    %86 = vector.extract_strided_slice %83 {offsets = [0, 256], sizes = [8, 128], strides = [1, 1]} : vector<8x384xf32> to vector<8x128xf32>
    %87 = vector.extract_strided_slice %77 {offsets = [0, 384], sizes = [8, 128], strides = [1, 1]} : vector<8x512xf32> to vector<8x128xf32>
    %88 = math.tanh %87 : vector<8x128xf32>
    %89 = arith.mulf %85, %45 : vector<8x128xf32>
    %90 = arith.mulf %84, %88 : vector<8x128xf32>
    %91 = arith.addf %89, %90 : vector<8x128xf32>
    %92 = math.tanh %91 : vector<8x128xf32>
    %93 = arith.mulf %86, %92 : vector<8x128xf32>
    %c2_i32 = arith.constant 2 : i32
    %c8_i32_17 = arith.constant 8 : i32
    %94 = arith.muli %c2_i32, %c8_i32_17 : i32
    %95 = tpu.assume_multiple %94, 8 : i32
    %96 = arith.index_cast %95 : i32 to index
    %c0_18 = arith.constant 0 : index
    %97 = vector.load %arg0[%96, %c0_18] : memref<64x512xf32, #tpu.memory_space<vmem>>, vector<8x512xf32>
    %98 = arith.addf %97, %73 : vector<8x512xf32>
    %99 = vector.extract_strided_slice %98 {offsets = [0, 0], sizes = [8, 384], strides = [1, 1]} : vector<8x512xf32> to vector<8x384xf32>
    %100 = arith.negf %99 : vector<8x384xf32>
    %101 = math.exp %100 : vector<8x384xf32>
    %cst_19 = arith.constant 1.000000e+00 : f32
    %102 = vector.broadcast %cst_19 : f32 to vector<8x384xf32>
    %103 = arith.addf %102, %101 : vector<8x384xf32>
    %104 = arith.divf %102, %103 : vector<8x384xf32>
    %105 = vector.extract_strided_slice %104 {offsets = [0, 0], sizes = [8, 128], strides = [1, 1]} : vector<8x384xf32> to vector<8x128xf32>
    %106 = vector.extract_strided_slice %104 {offsets = [0, 128], sizes = [8, 128], strides = [1, 1]} : vector<8x384xf32> to vector<8x128xf32>
    %107 = vector.extract_strided_slice %104 {offsets = [0, 256], sizes = [8, 128], strides = [1, 1]} : vector<8x384xf32> to vector<8x128xf32>
    %108 = vector.extract_strided_slice %98 {offsets = [0, 384], sizes = [8, 128], strides = [1, 1]} : vector<8x512xf32> to vector<8x128xf32>
    %109 = math.tanh %108 : vector<8x128xf32>
    %110 = arith.mulf %106, %66 : vector<8x128xf32>
    %111 = arith.mulf %105, %109 : vector<8x128xf32>
    %112 = arith.addf %110, %111 : vector<8x128xf32>
    %113 = math.tanh %112 : vector<8x128xf32>
    %114 = arith.mulf %107, %113 : vector<8x128xf32>
    %115 = tpu.concatenate %114, %93 in 1 : vector<8x128xf32>, vector<8x128xf32> -> vector<8x256xf32>
    %116 = arith.truncf %115 : vector<8x256xf32> to vector<8x256xbf16>
    %c0_20 = arith.constant 0 : index
    %c0_21 = arith.constant 0 : index
    %117 = vector.load %arg1[%c0_20, %c0_21] : memref<256x1024xbf16, #tpu.memory_space<vmem>>, vector<256x1024xbf16>
    %cst_22 = arith.constant dense<0.000000e+00> : vector<8x1024xf32>
    %118 = tpu.matmul %116, %117, %cst_22 {dimension_numbers = #tpu.dot_dimension_numbers<[1], [0], [0], [1], [0, 0, 1, 1], [], []>} : vector<8x256xbf16>, vector<256x1024xbf16>, vector<8x1024xf32> -> vector<8x1024xf32>
    %119 = vector.extract_strided_slice %118 {offsets = [0, 512], sizes = [8, 512], strides = [1, 1]} : vector<8x1024xf32> to vector<8x512xf32>
    %120 = vector.extract_strided_slice %118 {offsets = [0, 0], sizes = [8, 512], strides = [1, 1]} : vector<8x1024xf32> to vector<8x512xf32>
    %c0_23 = arith.constant 0 : index
    %c0_24 = arith.constant 0 : index
    %121 = vector.load %arg2[%c0_23, %c0_24] : memref<1x512xf32, #tpu.memory_space<vmem>>, vector<1x512xf32>
    %122 = vector.broadcast %121 : vector<1x512xf32> to vector<8x512xf32>
    %123 = arith.addf %120, %122 : vector<8x512xf32>
    %124 = vector.extract_strided_slice %123 {offsets = [0, 0], sizes = [8, 384], strides = [1, 1]} : vector<8x512xf32> to vector<8x384xf32>
    %125 = arith.negf %124 : vector<8x384xf32>
    %126 = math.exp %125 : vector<8x384xf32>
    %cst_25 = arith.constant 1.000000e+00 : f32
    %127 = vector.broadcast %cst_25 : f32 to vector<8x384xf32>
    %128 = arith.addf %127, %126 : vector<8x384xf32>
    %129 = arith.divf %127, %128 : vector<8x384xf32>
    %130 = vector.extract_strided_slice %129 {offsets = [0, 0], sizes = [8, 128], strides = [1, 1]} : vector<8x384xf32> to vector<8x128xf32>
    %131 = vector.extract_strided_slice %129 {offsets = [0, 128], sizes = [8, 128], strides = [1, 1]} : vector<8x384xf32> to vector<8x128xf32>
    %132 = vector.extract_strided_slice %129 {offsets = [0, 256], sizes = [8, 128], strides = [1, 1]} : vector<8x384xf32> to vector<8x128xf32>
    %133 = vector.extract_strided_slice %123 {offsets = [0, 384], sizes = [8, 128], strides = [1, 1]} : vector<8x512xf32> to vector<8x128xf32>
    %134 = math.tanh %133 : vector<8x128xf32>
    %135 = arith.mulf %131, %91 : vector<8x128xf32>
    %136 = arith.mulf %130, %134 : vector<8x128xf32>
    %137 = arith.addf %135, %136 : vector<8x128xf32>
    %138 = math.tanh %137 : vector<8x128xf32>
    %139 = arith.mulf %132, %138 : vector<8x128xf32>
    %c3_i32 = arith.constant 3 : i32
    %c8_i32_26 = arith.constant 8 : i32
    %140 = arith.muli %c3_i32, %c8_i32_26 : i32
    %141 = tpu.assume_multiple %140, 8 : i32
    %142 = arith.index_cast %141 : i32 to index
    %c0_27 = arith.constant 0 : index
    %143 = vector.load %arg0[%142, %c0_27] : memref<64x512xf32, #tpu.memory_space<vmem>>, vector<8x512xf32>
    %144 = arith.addf %143, %119 : vector<8x512xf32>
    %145 = vector.extract_strided_slice %144 {offsets = [0, 0], sizes = [8, 384], strides = [1, 1]} : vector<8x512xf32> to vector<8x384xf32>
    %146 = arith.negf %145 : vector<8x384xf32>
    %147 = math.exp %146 : vector<8x384xf32>
    %cst_28 = arith.constant 1.000000e+00 : f32
    %148 = vector.broadcast %cst_28 : f32 to vector<8x384xf32>
    %149 = arith.addf %148, %147 : vector<8x384xf32>
    %150 = arith.divf %148, %149 : vector<8x384xf32>
    %151 = vector.extract_strided_slice %150 {offsets = [0, 0], sizes = [8, 128], strides = [1, 1]} : vector<8x384xf32> to vector<8x128xf32>
    %152 = vector.extract_strided_slice %150 {offsets = [0, 128], sizes = [8, 128], strides = [1, 1]} : vector<8x384xf32> to vector<8x128xf32>
    %153 = vector.extract_strided_slice %150 {offsets = [0, 256], sizes = [8, 128], strides = [1, 1]} : vector<8x384xf32> to vector<8x128xf32>
    %154 = vector.extract_strided_slice %144 {offsets = [0, 384], sizes = [8, 128], strides = [1, 1]} : vector<8x512xf32> to vector<8x128xf32>
    %155 = math.tanh %154 : vector<8x128xf32>
    %156 = arith.mulf %152, %112 : vector<8x128xf32>
    %157 = arith.mulf %151, %155 : vector<8x128xf32>
    %158 = arith.addf %156, %157 : vector<8x128xf32>
    %159 = math.tanh %158 : vector<8x128xf32>
    %160 = arith.mulf %153, %159 : vector<8x128xf32>
    %161 = tpu.concatenate %160, %139 in 1 : vector<8x128xf32>, vector<8x128xf32> -> vector<8x256xf32>
    %162 = arith.truncf %161 : vector<8x256xf32> to vector<8x256xbf16>
    %c0_29 = arith.constant 0 : index
    %c0_30 = arith.constant 0 : index
    %163 = vector.load %arg1[%c0_29, %c0_30] : memref<256x1024xbf16, #tpu.memory_space<vmem>>, vector<256x1024xbf16>
    %cst_31 = arith.constant dense<0.000000e+00> : vector<8x1024xf32>
    %164 = tpu.matmul %162, %163, %cst_31 {dimension_numbers = #tpu.dot_dimension_numbers<[1], [0], [0], [1], [0, 0, 1, 1], [], []>} : vector<8x256xbf16>, vector<256x1024xbf16>, vector<8x1024xf32> -> vector<8x1024xf32>
    %165 = vector.extract_strided_slice %164 {offsets = [0, 512], sizes = [8, 512], strides = [1, 1]} : vector<8x1024xf32> to vector<8x512xf32>
    %166 = vector.extract_strided_slice %164 {offsets = [0, 0], sizes = [8, 512], strides = [1, 1]} : vector<8x1024xf32> to vector<8x512xf32>
    %c0_32 = arith.constant 0 : index
    %c0_33 = arith.constant 0 : index
    %167 = vector.load %arg2[%c0_32, %c0_33] : memref<1x512xf32, #tpu.memory_space<vmem>>, vector<1x512xf32>
    %168 = vector.broadcast %167 : vector<1x512xf32> to vector<8x512xf32>
    %169 = arith.addf %166, %168 : vector<8x512xf32>
    %170 = vector.extract_strided_slice %169 {offsets = [0, 0], sizes = [8, 384], strides = [1, 1]} : vector<8x512xf32> to vector<8x384xf32>
    %171 = arith.negf %170 : vector<8x384xf32>
    %172 = math.exp %171 : vector<8x384xf32>
    %cst_34 = arith.constant 1.000000e+00 : f32
    %173 = vector.broadcast %cst_34 : f32 to vector<8x384xf32>
    %174 = arith.addf %173, %172 : vector<8x384xf32>
    %175 = arith.divf %173, %174 : vector<8x384xf32>
    %176 = vector.extract_strided_slice %175 {offsets = [0, 0], sizes = [8, 128], strides = [1, 1]} : vector<8x384xf32> to vector<8x128xf32>
    %177 = vector.extract_strided_slice %175 {offsets = [0, 128], sizes = [8, 128], strides = [1, 1]} : vector<8x384xf32> to vector<8x128xf32>
    %178 = vector.extract_strided_slice %175 {offsets = [0, 256], sizes = [8, 128], strides = [1, 1]} : vector<8x384xf32> to vector<8x128xf32>
    %179 = vector.extract_strided_slice %169 {offsets = [0, 384], sizes = [8, 128], strides = [1, 1]} : vector<8x512xf32> to vector<8x128xf32>
    %180 = math.tanh %179 : vector<8x128xf32>
    %181 = arith.mulf %177, %137 : vector<8x128xf32>
    %182 = arith.mulf %176, %180 : vector<8x128xf32>
    %183 = arith.addf %181, %182 : vector<8x128xf32>
    %184 = math.tanh %183 : vector<8x128xf32>
    %185 = arith.mulf %178, %184 : vector<8x128xf32>
    %c4_i32 = arith.constant 4 : i32
    %c8_i32_35 = arith.constant 8 : i32
    %186 = arith.muli %c4_i32, %c8_i32_35 : i32
    %187 = tpu.assume_multiple %186, 8 : i32
    %188 = arith.index_cast %187 : i32 to index
    %c0_36 = arith.constant 0 : index
    %189 = vector.load %arg0[%188, %c0_36] : memref<64x512xf32, #tpu.memory_space<vmem>>, vector<8x512xf32>
    %190 = arith.addf %189, %165 : vector<8x512xf32>
    %191 = vector.extract_strided_slice %190 {offsets = [0, 0], sizes = [8, 384], strides = [1, 1]} : vector<8x512xf32> to vector<8x384xf32>
    %192 = arith.negf %191 : vector<8x384xf32>
    %193 = math.exp %192 : vector<8x384xf32>
    %cst_37 = arith.constant 1.000000e+00 : f32
    %194 = vector.broadcast %cst_37 : f32 to vector<8x384xf32>
    %195 = arith.addf %194, %193 : vector<8x384xf32>
    %196 = arith.divf %194, %195 : vector<8x384xf32>
    %197 = vector.extract_strided_slice %196 {offsets = [0, 0], sizes = [8, 128], strides = [1, 1]} : vector<8x384xf32> to vector<8x128xf32>
    %198 = vector.extract_strided_slice %196 {offsets = [0, 128], sizes = [8, 128], strides = [1, 1]} : vector<8x384xf32> to vector<8x128xf32>
    %199 = vector.extract_strided_slice %196 {offsets = [0, 256], sizes = [8, 128], strides = [1, 1]} : vector<8x384xf32> to vector<8x128xf32>
    %200 = vector.extract_strided_slice %190 {offsets = [0, 384], sizes = [8, 128], strides = [1, 1]} : vector<8x512xf32> to vector<8x128xf32>
    %201 = math.tanh %200 : vector<8x128xf32>
    %202 = arith.mulf %198, %158 : vector<8x128xf32>
    %203 = arith.mulf %197, %201 : vector<8x128xf32>
    %204 = arith.addf %202, %203 : vector<8x128xf32>
    %205 = math.tanh %204 : vector<8x128xf32>
    %206 = arith.mulf %199, %205 : vector<8x128xf32>
    %207 = tpu.concatenate %206, %185 in 1 : vector<8x128xf32>, vector<8x128xf32> -> vector<8x256xf32>
    %208 = arith.truncf %207 : vector<8x256xf32> to vector<8x256xbf16>
    %c0_38 = arith.constant 0 : index
    %c0_39 = arith.constant 0 : index
    %209 = vector.load %arg1[%c0_38, %c0_39] : memref<256x1024xbf16, #tpu.memory_space<vmem>>, vector<256x1024xbf16>
    %cst_40 = arith.constant dense<0.000000e+00> : vector<8x1024xf32>
    %210 = tpu.matmul %208, %209, %cst_40 {dimension_numbers = #tpu.dot_dimension_numbers<[1], [0], [0], [1], [0, 0, 1, 1], [], []>} : vector<8x256xbf16>, vector<256x1024xbf16>, vector<8x1024xf32> -> vector<8x1024xf32>
    %211 = vector.extract_strided_slice %210 {offsets = [0, 512], sizes = [8, 512], strides = [1, 1]} : vector<8x1024xf32> to vector<8x512xf32>
    %212 = vector.extract_strided_slice %210 {offsets = [0, 0], sizes = [8, 512], strides = [1, 1]} : vector<8x1024xf32> to vector<8x512xf32>
    %c0_41 = arith.constant 0 : index
    %c0_42 = arith.constant 0 : index
    %213 = vector.load %arg2[%c0_41, %c0_42] : memref<1x512xf32, #tpu.memory_space<vmem>>, vector<1x512xf32>
    %214 = vector.broadcast %213 : vector<1x512xf32> to vector<8x512xf32>
    %215 = arith.addf %212, %214 : vector<8x512xf32>
    %216 = vector.extract_strided_slice %215 {offsets = [0, 0], sizes = [8, 384], strides = [1, 1]} : vector<8x512xf32> to vector<8x384xf32>
    %217 = arith.negf %216 : vector<8x384xf32>
    %218 = math.exp %217 : vector<8x384xf32>
    %cst_43 = arith.constant 1.000000e+00 : f32
    %219 = vector.broadcast %cst_43 : f32 to vector<8x384xf32>
    %220 = arith.addf %219, %218 : vector<8x384xf32>
    %221 = arith.divf %219, %220 : vector<8x384xf32>
    %222 = vector.extract_strided_slice %221 {offsets = [0, 0], sizes = [8, 128], strides = [1, 1]} : vector<8x384xf32> to vector<8x128xf32>
    %223 = vector.extract_strided_slice %221 {offsets = [0, 128], sizes = [8, 128], strides = [1, 1]} : vector<8x384xf32> to vector<8x128xf32>
    %224 = vector.extract_strided_slice %221 {offsets = [0, 256], sizes = [8, 128], strides = [1, 1]} : vector<8x384xf32> to vector<8x128xf32>
    %225 = vector.extract_strided_slice %215 {offsets = [0, 384], sizes = [8, 128], strides = [1, 1]} : vector<8x512xf32> to vector<8x128xf32>
    %226 = math.tanh %225 : vector<8x128xf32>
    %227 = arith.mulf %223, %183 : vector<8x128xf32>
    %228 = arith.mulf %222, %226 : vector<8x128xf32>
    %229 = arith.addf %227, %228 : vector<8x128xf32>
    %230 = math.tanh %229 : vector<8x128xf32>
    %231 = arith.mulf %224, %230 : vector<8x128xf32>
    %c5_i32 = arith.constant 5 : i32
    %c8_i32_44 = arith.constant 8 : i32
    %232 = arith.muli %c5_i32, %c8_i32_44 : i32
    %233 = tpu.assume_multiple %232, 8 : i32
    %234 = arith.index_cast %233 : i32 to index
    %c0_45 = arith.constant 0 : index
    %235 = vector.load %arg0[%234, %c0_45] : memref<64x512xf32, #tpu.memory_space<vmem>>, vector<8x512xf32>
    %236 = arith.addf %235, %211 : vector<8x512xf32>
    %237 = vector.extract_strided_slice %236 {offsets = [0, 0], sizes = [8, 384], strides = [1, 1]} : vector<8x512xf32> to vector<8x384xf32>
    %238 = arith.negf %237 : vector<8x384xf32>
    %239 = math.exp %238 : vector<8x384xf32>
    %cst_46 = arith.constant 1.000000e+00 : f32
    %240 = vector.broadcast %cst_46 : f32 to vector<8x384xf32>
    %241 = arith.addf %240, %239 : vector<8x384xf32>
    %242 = arith.divf %240, %241 : vector<8x384xf32>
    %243 = vector.extract_strided_slice %242 {offsets = [0, 0], sizes = [8, 128], strides = [1, 1]} : vector<8x384xf32> to vector<8x128xf32>
    %244 = vector.extract_strided_slice %242 {offsets = [0, 128], sizes = [8, 128], strides = [1, 1]} : vector<8x384xf32> to vector<8x128xf32>
    %245 = vector.extract_strided_slice %242 {offsets = [0, 256], sizes = [8, 128], strides = [1, 1]} : vector<8x384xf32> to vector<8x128xf32>
    %246 = vector.extract_strided_slice %236 {offsets = [0, 384], sizes = [8, 128], strides = [1, 1]} : vector<8x512xf32> to vector<8x128xf32>
    %247 = math.tanh %246 : vector<8x128xf32>
    %248 = arith.mulf %244, %204 : vector<8x128xf32>
    %249 = arith.mulf %243, %247 : vector<8x128xf32>
    %250 = arith.addf %248, %249 : vector<8x128xf32>
    %251 = math.tanh %250 : vector<8x128xf32>
    %252 = arith.mulf %245, %251 : vector<8x128xf32>
    %253 = tpu.concatenate %252, %231 in 1 : vector<8x128xf32>, vector<8x128xf32> -> vector<8x256xf32>
    %254 = arith.truncf %253 : vector<8x256xf32> to vector<8x256xbf16>
    %c0_47 = arith.constant 0 : index
    %c0_48 = arith.constant 0 : index
    %255 = vector.load %arg1[%c0_47, %c0_48] : memref<256x1024xbf16, #tpu.memory_space<vmem>>, vector<256x1024xbf16>
    %cst_49 = arith.constant dense<0.000000e+00> : vector<8x1024xf32>
    %256 = tpu.matmul %254, %255, %cst_49 {dimension_numbers = #tpu.dot_dimension_numbers<[1], [0], [0], [1], [0, 0, 1, 1], [], []>} : vector<8x256xbf16>, vector<256x1024xbf16>, vector<8x1024xf32> -> vector<8x1024xf32>
    %257 = vector.extract_strided_slice %256 {offsets = [0, 512], sizes = [8, 512], strides = [1, 1]} : vector<8x1024xf32> to vector<8x512xf32>
    %258 = vector.extract_strided_slice %256 {offsets = [0, 0], sizes = [8, 512], strides = [1, 1]} : vector<8x1024xf32> to vector<8x512xf32>
    %c0_50 = arith.constant 0 : index
    %c0_51 = arith.constant 0 : index
    %259 = vector.load %arg2[%c0_50, %c0_51] : memref<1x512xf32, #tpu.memory_space<vmem>>, vector<1x512xf32>
    %260 = vector.broadcast %259 : vector<1x512xf32> to vector<8x512xf32>
    %261 = arith.addf %258, %260 : vector<8x512xf32>
    %262 = vector.extract_strided_slice %261 {offsets = [0, 0], sizes = [8, 384], strides = [1, 1]} : vector<8x512xf32> to vector<8x384xf32>
    %263 = arith.negf %262 : vector<8x384xf32>
    %264 = math.exp %263 : vector<8x384xf32>
    %cst_52 = arith.constant 1.000000e+00 : f32
    %265 = vector.broadcast %cst_52 : f32 to vector<8x384xf32>
    %266 = arith.addf %265, %264 : vector<8x384xf32>
    %267 = arith.divf %265, %266 : vector<8x384xf32>
    %268 = vector.extract_strided_slice %267 {offsets = [0, 0], sizes = [8, 128], strides = [1, 1]} : vector<8x384xf32> to vector<8x128xf32>
    %269 = vector.extract_strided_slice %267 {offsets = [0, 128], sizes = [8, 128], strides = [1, 1]} : vector<8x384xf32> to vector<8x128xf32>
    %270 = vector.extract_strided_slice %267 {offsets = [0, 256], sizes = [8, 128], strides = [1, 1]} : vector<8x384xf32> to vector<8x128xf32>
    %271 = vector.extract_strided_slice %261 {offsets = [0, 384], sizes = [8, 128], strides = [1, 1]} : vector<8x512xf32> to vector<8x128xf32>
    %272 = math.tanh %271 : vector<8x128xf32>
    %273 = arith.mulf %269, %229 : vector<8x128xf32>
    %274 = arith.mulf %268, %272 : vector<8x128xf32>
    %275 = arith.addf %273, %274 : vector<8x128xf32>
    %276 = math.tanh %275 : vector<8x128xf32>
    %277 = arith.mulf %270, %276 : vector<8x128xf32>
    %c6_i32 = arith.constant 6 : i32
    %c8_i32_53 = arith.constant 8 : i32
    %278 = arith.muli %c6_i32, %c8_i32_53 : i32
    %279 = tpu.assume_multiple %278, 8 : i32
    %280 = arith.index_cast %279 : i32 to index
    %c0_54 = arith.constant 0 : index
    %281 = vector.load %arg0[%280, %c0_54] : memref<64x512xf32, #tpu.memory_space<vmem>>, vector<8x512xf32>
    %282 = arith.addf %281, %257 : vector<8x512xf32>
    %283 = vector.extract_strided_slice %282 {offsets = [0, 0], sizes = [8, 384], strides = [1, 1]} : vector<8x512xf32> to vector<8x384xf32>
    %284 = arith.negf %283 : vector<8x384xf32>
    %285 = math.exp %284 : vector<8x384xf32>
    %cst_55 = arith.constant 1.000000e+00 : f32
    %286 = vector.broadcast %cst_55 : f32 to vector<8x384xf32>
    %287 = arith.addf %286, %285 : vector<8x384xf32>
    %288 = arith.divf %286, %287 : vector<8x384xf32>
    %289 = vector.extract_strided_slice %288 {offsets = [0, 0], sizes = [8, 128], strides = [1, 1]} : vector<8x384xf32> to vector<8x128xf32>
    %290 = vector.extract_strided_slice %288 {offsets = [0, 128], sizes = [8, 128], strides = [1, 1]} : vector<8x384xf32> to vector<8x128xf32>
    %291 = vector.extract_strided_slice %288 {offsets = [0, 256], sizes = [8, 128], strides = [1, 1]} : vector<8x384xf32> to vector<8x128xf32>
    %292 = vector.extract_strided_slice %282 {offsets = [0, 384], sizes = [8, 128], strides = [1, 1]} : vector<8x512xf32> to vector<8x128xf32>
    %293 = math.tanh %292 : vector<8x128xf32>
    %294 = arith.mulf %290, %250 : vector<8x128xf32>
    %295 = arith.mulf %289, %293 : vector<8x128xf32>
    %296 = arith.addf %294, %295 : vector<8x128xf32>
    %297 = math.tanh %296 : vector<8x128xf32>
    %298 = arith.mulf %291, %297 : vector<8x128xf32>
    %299 = tpu.concatenate %298, %277 in 1 : vector<8x128xf32>, vector<8x128xf32> -> vector<8x256xf32>
    %300 = arith.truncf %299 : vector<8x256xf32> to vector<8x256xbf16>
    %c0_56 = arith.constant 0 : index
    %c0_57 = arith.constant 0 : index
    %301 = vector.load %arg1[%c0_56, %c0_57] : memref<256x1024xbf16, #tpu.memory_space<vmem>>, vector<256x1024xbf16>
    %cst_58 = arith.constant dense<0.000000e+00> : vector<8x1024xf32>
    %302 = tpu.matmul %300, %301, %cst_58 {dimension_numbers = #tpu.dot_dimension_numbers<[1], [0], [0], [1], [0, 0, 1, 1], [], []>} : vector<8x256xbf16>, vector<256x1024xbf16>, vector<8x1024xf32> -> vector<8x1024xf32>
    %303 = vector.extract_strided_slice %302 {offsets = [0, 512], sizes = [8, 512], strides = [1, 1]} : vector<8x1024xf32> to vector<8x512xf32>
    %304 = vector.extract_strided_slice %302 {offsets = [0, 0], sizes = [8, 512], strides = [1, 1]} : vector<8x1024xf32> to vector<8x512xf32>
    %c0_59 = arith.constant 0 : index
    %c0_60 = arith.constant 0 : index
    %305 = vector.load %arg2[%c0_59, %c0_60] : memref<1x512xf32, #tpu.memory_space<vmem>>, vector<1x512xf32>
    %306 = vector.broadcast %305 : vector<1x512xf32> to vector<8x512xf32>
    %307 = arith.addf %304, %306 : vector<8x512xf32>
    %308 = vector.extract_strided_slice %307 {offsets = [0, 0], sizes = [8, 384], strides = [1, 1]} : vector<8x512xf32> to vector<8x384xf32>
    %309 = arith.negf %308 : vector<8x384xf32>
    %310 = math.exp %309 : vector<8x384xf32>
    %cst_61 = arith.constant 1.000000e+00 : f32
    %311 = vector.broadcast %cst_61 : f32 to vector<8x384xf32>
    %312 = arith.addf %311, %310 : vector<8x384xf32>
    %313 = arith.divf %311, %312 : vector<8x384xf32>
    %314 = vector.extract_strided_slice %313 {offsets = [0, 0], sizes = [8, 128], strides = [1, 1]} : vector<8x384xf32> to vector<8x128xf32>
    %315 = vector.extract_strided_slice %313 {offsets = [0, 128], sizes = [8, 128], strides = [1, 1]} : vector<8x384xf32> to vector<8x128xf32>
    %316 = vector.extract_strided_slice %313 {offsets = [0, 256], sizes = [8, 128], strides = [1, 1]} : vector<8x384xf32> to vector<8x128xf32>
    %317 = vector.extract_strided_slice %307 {offsets = [0, 384], sizes = [8, 128], strides = [1, 1]} : vector<8x512xf32> to vector<8x128xf32>
    %318 = math.tanh %317 : vector<8x128xf32>
    %319 = arith.mulf %315, %275 : vector<8x128xf32>
    %320 = arith.mulf %314, %318 : vector<8x128xf32>
    %321 = arith.addf %319, %320 : vector<8x128xf32>
    %322 = math.tanh %321 : vector<8x128xf32>
    %323 = arith.mulf %316, %322 : vector<8x128xf32>
    %c7_i32 = arith.constant 7 : i32
    %c8_i32_62 = arith.constant 8 : i32
    %324 = arith.muli %c7_i32, %c8_i32_62 : i32
    %325 = tpu.assume_multiple %324, 8 : i32
    %326 = arith.index_cast %325 : i32 to index
    %c0_63 = arith.constant 0 : index
    %327 = vector.load %arg0[%326, %c0_63] : memref<64x512xf32, #tpu.memory_space<vmem>>, vector<8x512xf32>
    %328 = arith.addf %327, %303 : vector<8x512xf32>
    %329 = vector.extract_strided_slice %328 {offsets = [0, 0], sizes = [8, 384], strides = [1, 1]} : vector<8x512xf32> to vector<8x384xf32>
    %330 = arith.negf %329 : vector<8x384xf32>
    %331 = math.exp %330 : vector<8x384xf32>
    %cst_64 = arith.constant 1.000000e+00 : f32
    %332 = vector.broadcast %cst_64 : f32 to vector<8x384xf32>
    %333 = arith.addf %332, %331 : vector<8x384xf32>
    %334 = arith.divf %332, %333 : vector<8x384xf32>
    %335 = vector.extract_strided_slice %334 {offsets = [0, 0], sizes = [8, 128], strides = [1, 1]} : vector<8x384xf32> to vector<8x128xf32>
    %336 = vector.extract_strided_slice %334 {offsets = [0, 128], sizes = [8, 128], strides = [1, 1]} : vector<8x384xf32> to vector<8x128xf32>
    %337 = vector.extract_strided_slice %334 {offsets = [0, 256], sizes = [8, 128], strides = [1, 1]} : vector<8x384xf32> to vector<8x128xf32>
    %338 = vector.extract_strided_slice %328 {offsets = [0, 384], sizes = [8, 128], strides = [1, 1]} : vector<8x512xf32> to vector<8x128xf32>
    %339 = math.tanh %338 : vector<8x128xf32>
    %340 = arith.mulf %336, %296 : vector<8x128xf32>
    %341 = arith.mulf %335, %339 : vector<8x128xf32>
    %342 = arith.addf %340, %341 : vector<8x128xf32>
    %343 = math.tanh %342 : vector<8x128xf32>
    %344 = arith.mulf %337, %343 : vector<8x128xf32>
    %345 = tpu.concatenate %344, %323 in 1 : vector<8x128xf32>, vector<8x128xf32> -> vector<8x256xf32>
    %346 = arith.truncf %345 : vector<8x256xf32> to vector<8x256xbf16>
    %c0_65 = arith.constant 0 : index
    %c0_66 = arith.constant 0 : index
    %347 = vector.load %arg1[%c0_65, %c0_66] : memref<256x1024xbf16, #tpu.memory_space<vmem>>, vector<256x1024xbf16>
    %cst_67 = arith.constant dense<0.000000e+00> : vector<8x1024xf32>
    %348 = tpu.matmul %346, %347, %cst_67 {dimension_numbers = #tpu.dot_dimension_numbers<[1], [0], [0], [1], [0, 0, 1, 1], [], []>} : vector<8x256xbf16>, vector<256x1024xbf16>, vector<8x1024xf32> -> vector<8x1024xf32>
    %349 = vector.extract_strided_slice %348 {offsets = [0, 512], sizes = [8, 512], strides = [1, 1]} : vector<8x1024xf32> to vector<8x512xf32>
    %350 = vector.extract_strided_slice %348 {offsets = [0, 0], sizes = [8, 512], strides = [1, 1]} : vector<8x1024xf32> to vector<8x512xf32>
    %c0_68 = arith.constant 0 : index
    %c0_69 = arith.constant 0 : index
    %351 = vector.load %arg2[%c0_68, %c0_69] : memref<1x512xf32, #tpu.memory_space<vmem>>, vector<1x512xf32>
    %352 = vector.broadcast %351 : vector<1x512xf32> to vector<8x512xf32>
    %353 = arith.addf %350, %352 : vector<8x512xf32>
    %354 = vector.extract_strided_slice %353 {offsets = [0, 0], sizes = [8, 384], strides = [1, 1]} : vector<8x512xf32> to vector<8x384xf32>
    %355 = arith.negf %354 : vector<8x384xf32>
    %356 = math.exp %355 : vector<8x384xf32>
    %cst_70 = arith.constant 1.000000e+00 : f32
    %357 = vector.broadcast %cst_70 : f32 to vector<8x384xf32>
    %358 = arith.addf %357, %356 : vector<8x384xf32>
    %359 = arith.divf %357, %358 : vector<8x384xf32>
    %360 = vector.extract_strided_slice %359 {offsets = [0, 0], sizes = [8, 128], strides = [1, 1]} : vector<8x384xf32> to vector<8x128xf32>
    %361 = vector.extract_strided_slice %359 {offsets = [0, 128], sizes = [8, 128], strides = [1, 1]} : vector<8x384xf32> to vector<8x128xf32>
    %362 = vector.extract_strided_slice %359 {offsets = [0, 256], sizes = [8, 128], strides = [1, 1]} : vector<8x384xf32> to vector<8x128xf32>
    %363 = vector.extract_strided_slice %353 {offsets = [0, 384], sizes = [8, 128], strides = [1, 1]} : vector<8x512xf32> to vector<8x128xf32>
    %364 = math.tanh %363 : vector<8x128xf32>
    %365 = arith.mulf %361, %321 : vector<8x128xf32>
    %366 = arith.mulf %360, %364 : vector<8x128xf32>
    %367 = arith.addf %365, %366 : vector<8x128xf32>
    %368 = math.tanh %367 : vector<8x128xf32>
    %369 = arith.mulf %362, %368 : vector<8x128xf32>
    %c8_i32_71 = arith.constant 8 : i32
    %370 = arith.truncf %369 : vector<8x128xf32> to vector<8x128xbf16>
    %c0_72 = arith.constant 0 : index
    %c0_73 = arith.constant 0 : index
    %371 = vector.load %arg3[%c0_72, %c0_73] : memref<128x128xbf16, #tpu.memory_space<vmem>>, vector<128x128xbf16>
    %cst_74 = arith.constant dense<0.000000e+00> : vector<8x128xf32>
    %372 = tpu.matmul %370, %371, %cst_74 {dimension_numbers = #tpu.dot_dimension_numbers<[1], [0], [0], [1], [0, 0, 1, 1], [], []>} : vector<8x128xbf16>, vector<128x128xbf16>, vector<8x128xf32> -> vector<8x128xf32>
    %c0_75 = arith.constant 0 : index
    %c0_76 = arith.constant 0 : index
    %373 = vector.load %arg4[%c0_75, %c0_76] : memref<1x128xf32, #tpu.memory_space<vmem>>, vector<1x128xf32>
    %374 = vector.broadcast %373 : vector<1x128xf32> to vector<8x128xf32>
    %375 = arith.addf %372, %374 : vector<8x128xf32>
    %376 = tpu.iota {dimensions = array<i32: 1>} : vector<8x128xi32>
    %c0_i32_77 = arith.constant 0 : i32
    %377 = vector.broadcast %c0_i32_77 : i32 to vector<8x128xi32>
    %378 = arith.cmpi sge, %376, %377 : vector<8x128xi32>
    %c4_i32_78 = arith.constant 4 : i32
    %379 = vector.broadcast %c4_i32_78 : i32 to vector<8x128xi32>
    %380 = arith.cmpi slt, %376, %379 : vector<8x128xi32>
    %381 = arith.andi %378, %380 : vector<8x128xi1>
    %cst_79 = arith.constant 0xFF800000 : f32
    %382 = vector.broadcast %cst_79 : f32 to vector<8x128xf32>
    %383 = arith.select %381, %375, %382 : vector<8x128xi1>, vector<8x128xf32>
    %cst_80 = arith.constant dense<0xFF800000> : vector<8xf32>
    %384 = vector.multi_reduction <maximumf>, %383, %cst_80 [1] : vector<8x128xf32> to vector<8xf32>
    %385 = vector.shape_cast %384 : vector<8xf32> to vector<8x1xf32>
    %386 = vector.broadcast %385 : vector<8x1xf32> to vector<8x128xf32>
    %387 = arith.subf %375, %386 : vector<8x128xf32>
    %388 = math.exp %387 : vector<8x128xf32>
    %cst_81 = arith.constant 0.000000e+00 : f32
    %389 = vector.broadcast %cst_81 : f32 to vector<8x128xf32>
    %390 = arith.select %381, %388, %389 : vector<8x128xi1>, vector<8x128xf32>
    %cst_82 = arith.constant dense<0.000000e+00> : vector<8xf32>
    %391 = vector.multi_reduction <add>, %390, %cst_82 [1] : vector<8x128xf32> to vector<8xf32>
    %392 = vector.shape_cast %391 : vector<8xf32> to vector<8x1xf32>
    %393 = tpu.reciprocal %392 {approx = true} : vector<8x1xf32> -> vector<8x1xf32>
    %394 = vector.broadcast %393 : vector<8x1xf32> to vector<8x128xf32>
    %395 = arith.mulf %390, %394 : vector<8x128xf32>
    %c4_i32_83 = arith.constant 4 : i32
    %396 = vector.broadcast %c4_i32_83 : i32 to vector<8x128xi32>
    %397 = arith.cmpi sge, %376, %396 : vector<8x128xi32>
    %c10_i32 = arith.constant 10 : i32
    %398 = vector.broadcast %c10_i32 : i32 to vector<8x128xi32>
    %399 = arith.cmpi slt, %376, %398 : vector<8x128xi32>
    %400 = arith.andi %397, %399 : vector<8x128xi1>
    %cst_84 = arith.constant 0xFF800000 : f32
    %401 = vector.broadcast %cst_84 : f32 to vector<8x128xf32>
    %402 = arith.select %400, %375, %401 : vector<8x128xi1>, vector<8x128xf32>
    %cst_85 = arith.constant dense<0xFF800000> : vector<8xf32>
    %403 = vector.multi_reduction <maximumf>, %402, %cst_85 [1] : vector<8x128xf32> to vector<8xf32>
    %404 = vector.shape_cast %403 : vector<8xf32> to vector<8x1xf32>
    %405 = vector.broadcast %404 : vector<8x1xf32> to vector<8x128xf32>
    %406 = arith.subf %375, %405 : vector<8x128xf32>
    %407 = math.exp %406 : vector<8x128xf32>
    %cst_86 = arith.constant 0.000000e+00 : f32
    %408 = vector.broadcast %cst_86 : f32 to vector<8x128xf32>
    %409 = arith.select %400, %407, %408 : vector<8x128xi1>, vector<8x128xf32>
    %cst_87 = arith.constant dense<0.000000e+00> : vector<8xf32>
    %410 = vector.multi_reduction <add>, %409, %cst_87 [1] : vector<8x128xf32> to vector<8xf32>
    %411 = vector.shape_cast %410 : vector<8xf32> to vector<8x1xf32>
    %412 = tpu.reciprocal %411 {approx = true} : vector<8x1xf32> -> vector<8x1xf32>
    %413 = vector.broadcast %412 : vector<8x1xf32> to vector<8x128xf32>
    %414 = arith.mulf %409, %413 : vector<8x128xf32>
    %415 = arith.addf %395, %414 : vector<8x128xf32>
    %c0_88 = arith.constant 0 : index
    %c0_89 = arith.constant 0 : index
    %416 = vector.load %arg5[%c0_88, %c0_89] : memref<8x128xf32, #tpu.memory_space<vmem>>, vector<8x128xf32>
    tpu.vector_store %arg5[%c0_88, %c0_89], %415 {strides = array<i32>} : memref<8x128xf32, #tpu.memory_space<vmem>>, vector<8x128xf32>,
    return
  }
}

</mosaic_0001>

<llo_original>
// kernel: myrnn_forward.1
$region0: #{myrnn_forward.1}
  #allocation0 [shape = 'u32[]', space=smem, size = 0x4, offset = 0x4, fixed_abs, tag = 'smem constant byte address 0x4 - core index']
  #allocation1 [shape = 'u32[144,128]{1,0:T(1,128)}', space=vmem, size = 0x12000, scoped, tag = 'internal scratch']
  %s0 = inlined_call_operand.vmem [shape: f32[64,512], index: 0, kind: input, shape index: {}]
  %s1 = inlined_call_operand.vmem [shape: bf16[256,1024], index: 1, kind: input, shape index: {}]
  %s2 = inlined_call_operand.vmem [shape: f32[1,512], index: 2, kind: input, shape index: {}]
  %s3 = inlined_call_operand.vmem [shape: bf16[128,128], index: 3, kind: input, shape index: {}]
  %s4 = inlined_call_operand.vmem [shape: f32[1,128], index: 4, kind: input, shape index: {}]
  %s5 = inlined_call_operand.vmem [shape: f32[8,128], index: 5, kind: output, shape index: {}]
  %s6 = sld [smem:[#allocation0]]
  $region30: #{myrnn_forward.1} parent=0
    _
  %s8 = ssub.s32 1, %s6
  %s9 = scalar_select 0, %s8, %s6
  // Predicated region
  $region2: #{myrnn_forward.1} parent=0 // pred_check
    _
  $region3: #{myrnn_forward.1} parent=0 // pred_check_branch
    %11 = sbr.rel (0) target = $region5
  $region4: #{myrnn_forward.1} parent=0 // pred_region
    _
  $region5: #{myrnn_forward.1} parent=0 // pred_fallthru
    _
  // Predicated region
  $region6: #{myrnn_forward.1} parent=0 // pred_check
    _
  $region7: #{myrnn_forward.1} parent=0 // pred_check_branch
    %13 = sbr.rel (0) target = $region9
  $region8: #{myrnn_forward.1} parent=0 // pred_region
    _
  $region9: #{myrnn_forward.1} parent=0 // pred_fallthru
    _
  // Predicated region
  $region10: #{myrnn_forward.1} parent=0 // pred_check
    _
  $region11: #{myrnn_forward.1} parent=0 // pred_check_branch
    %15 = sbr.rel (0) target = $region13
  $region12: #{myrnn_forward.1} parent=0 // pred_region
    _
  $region13: #{myrnn_forward.1} parent=0 // pred_fallthru
    _
  // Predicated region
  $region14: #{myrnn_forward.1} parent=0 // pred_check
    _
  $region15: #{myrnn_forward.1} parent=0 // pred_check_branch
    %17 = sbr.rel (0) target = $region17
  $region16: #{myrnn_forward.1} parent=0 // pred_region
    _
  $region17: #{myrnn_forward.1} parent=0 // pred_fallthru
    _
  // Predicated region
  $region18: #{myrnn_forward.1} parent=0 // pred_check
    _
  $region19: #{myrnn_forward.1} parent=0 // pred_check_branch
    %19 = sbr.rel (0) target = $region21
  $region20: #{myrnn_forward.1} parent=0 // pred_region
    _
  $region21: #{myrnn_forward.1} parent=0 // pred_fallthru
    _
  %s21 = smul.u32 0, 4
  %s22 = smul.addr %s21, 8
  %s23 = scalar_lea.vmem %s0, %s22
  %v24 = vld [vmem:[%s23] sm:$0xff]
  %v25 = vld [vmem:[%s23 + $0x8] sm:$0xff]
  %v26 = vld [vmem:[%s23 + $0x10] sm:$0xff]
  %v27 = vld [vmem:[%s23 + $0x18] sm:$0xff]
  %v28 = vadd.f32 %v24, 0.0
  %v29 = vadd.f32 %v25, 0.0
  %v30 = vadd.f32 %v26, 0.0
  %v31 = vadd.f32 %v27, 0.0
  %v32 = vxor.u32 %v28, 2147483648
  %v33 = vxor.u32 %v29, 2147483648
  %v34 = vxor.u32 %v30, 2147483648
  %v35 = vmul.f32 %v32, 1.442695
  %v36 = vpow.pop %v35
  %v37 = vmul.f32 %v33, 1.442695
  %v38 = vpow.pop %v37
  %v39 = vmul.f32 %v34, 1.442695
  %v40 = vpow.pop %v39
  %v41 = vadd.f32 %v36, 1.0
  %v42 = vadd.f32 %v38, 1.0
  %v43 = vadd.f32 %v40, 1.0
  %v44 = vrcp.pop %v41
  %v45 = vmul.f32 1.0, %v44
  %v46 = vrcp.pop %v42
  %v47 = vmul.f32 1.0, %v46
  %v48 = vrcp.pop %v43
  %v49 = vmul.f32 1.0, %v48
  %v50 = vtanh.pop %v31
  %v51 = vmul.f32 %v47, 0.0
  %v52 = vmul.f32 %v45, %v50
  %v53 = vadd.f32 %v51, %v52
  %v54 = vtanh.pop %v53
  %v55 = vmul.f32 %v49, %v54
  %v56 = vpack.c.bf16 %v55, %v55
  %v57 = vpack.c.bf16 0.0, 0.0
  %v58 = vld [vmem:[%s1] sm:$0xff]
  %v59 = vld [vmem:[%s1 + $0x8] sm:$0xff]
  %v60 = vld [vmem:[%s1 + $0x10] sm:$0xff]
  %v61 = vld [vmem:[%s1 + $0x18] sm:$0xff]
  %v62 = vld [vmem:[%s1 + $0x20] sm:$0xff]
  %v63 = vld [vmem:[%s1 + $0x28] sm:$0xff]
  %v64 = vld [vmem:[%s1 + $0x30] sm:$0xff]
  %v65 = vld [vmem:[%s1 + $0x38] sm:$0xff]
  %v66 = vld [vmem:[%s1 + $0x40] sm:$0xff]
  %v67 = vld [vmem:[%s1 + $0x48] sm:$0xff]
  %v68 = vld [vmem:[%s1 + $0x50] sm:$0xff]
  %v69 = vld [vmem:[%s1 + $0x58] sm:$0xff]
  %v70 = vld [vmem:[%s1 + $0x60] sm:$0xff]
  %v71 = vld [vmem:[%s1 + $0x68] sm:$0xff]
  %v72 = vld [vmem:[%s1 + $0x70] sm:$0xff]
  %v73 = vld [vmem:[%s1 + $0x78] sm:$0xff]
  %v74 = vld [vmem:[%s1 + $0x80] sm:$0xff]
  %v75 = vld [vmem:[%s1 + $0x88] sm:$0xff]
  %v76 = vld [vmem:[%s1 + $0x90] sm:$0xff]
  %v77 = vld [vmem:[%s1 + $0x98] sm:$0xff]
  %v78 = vld [vmem:[%s1 + $0xa0] sm:$0xff]
  %v79 = vld [vmem:[%s1 + $0xa8] sm:$0xff]
  %v80 = vld [vmem:[%s1 + $0xb0] sm:$0xff]
  %v81 = vld [vmem:[%s1 + $0xb8] sm:$0xff]
  %v82 = vld [vmem:[%s1 + $0xc0] sm:$0xff]
  %v83 = vld [vmem:[%s1 + $0xc8] sm:$0xff]
  %v84 = vld [vmem:[%s1 + $0xd0] sm:$0xff]
  %v85 = vld [vmem:[%s1 + $0xd8] sm:$0xff]
  %v86 = vld [vmem:[%s1 + $0xe0] sm:$0xff]
  %v87 = vld [vmem:[%s1 + $0xe8] sm:$0xff]
  %v88 = vld [vmem:[%s1 + $0xf0] sm:$0xff]
  %v89 = vld [vmem:[%s1 + $0xf8] sm:$0xff]
  %v90 = vld [vmem:[%s1 + $0x100] sm:$0xff]
  %v91 = vld [vmem:[%s1 + $0x108] sm:$0xff]
  %v92 = vld [vmem:[%s1 + $0x110] sm:$0xff]
  %v93 = vld [vmem:[%s1 + $0x118] sm:$0xff]
  %v94 = vld [vmem:[%s1 + $0x120] sm:$0xff]
  %v95 = vld [vmem:[%s1 + $0x128] sm:$0xff]
  %v96 = vld [vmem:[%s1 + $0x130] sm:$0xff]
  %v97 = vld [vmem:[%s1 + $0x138] sm:$0xff]
  %v98 = vld [vmem:[%s1 + $0x140] sm:$0xff]
  %v99 = vld [vmem:[%s1 + $0x148] sm:$0xff]
  %v100 = vld [vmem:[%s1 + $0x150] sm:$0xff]
  %v101 = vld [vmem:[%s1 + $0x158] sm:$0xff]
  %v102 = vld [vmem:[%s1 + $0x160] sm:$0xff]
  %v103 = vld [vmem:[%s1 + $0x168] sm:$0xff]
  %v104 = vld [vmem:[%s1 + $0x170] sm:$0xff]
  %v105 = vld [vmem:[%s1 + $0x178] sm:$0xff]
  %v106 = vld [vmem:[%s1 + $0x180] sm:$0xff]
  %v107 = vld [vmem:[%s1 + $0x188] sm:$0xff]
  %v108 = vld [vmem:[%s1 + $0x190] sm:$0xff]
  %v109 = vld [vmem:[%s1 + $0x198] sm:$0xff]
  %v110 = vld [vmem:[%s1 + $0x1a0] sm:$0xff]
  %v111 = vld [vmem:[%s1 + $0x1a8] sm:$0xff]
  %v112 = vld [vmem:[%s1 + $0x1b0] sm:$0xff]
  %v113 = vld [vmem:[%s1 + $0x1b8] sm:$0xff]
  %v114 = vld [vmem:[%s1 + $0x1c0] sm:$0xff]
  %v115 = vld [vmem:[%s1 + $0x1c8] sm:$0xff]
  %v116 = vld [vmem:[%s1 + $0x1d0] sm:$0xff]
  %v117 = vld [vmem:[%s1 + $0x1d8] sm:$0xff]
  %v118 = vld [vmem:[%s1 + $0x1e0] sm:$0xff]
  %v119 = vld [vmem:[%s1 + $0x1e8] sm:$0xff]
  %v120 = vld [vmem:[%s1 + $0x1f0] sm:$0xff]
  %v121 = vld [vmem:[%s1 + $0x1f8] sm:$0xff]
  %v122 = vld [vmem:[%s1 + $0x200] sm:$0xff]
  %v123 = vld [vmem:[%s1 + $0x208] sm:$0xff]
  %v124 = vld [vmem:[%s1 + $0x210] sm:$0xff]
  %v125 = vld [vmem:[%s1 + $0x218] sm:$0xff]
  %v126 = vld [vmem:[%s1 + $0x220] sm:$0xff]
  %v127 = vld [vmem:[%s1 + $0x228] sm:$0xff]
  %v128 = vld [vmem:[%s1 + $0x230] sm:$0xff]
  %v129 = vld [vmem:[%s1 + $0x238] sm:$0xff]
  %v130 = vld [vmem:[%s1 + $0x240] sm:$0xff]
  %v131 = vld [vmem:[%s1 + $0x248] sm:$0xff]
  %v132 = vld [vmem:[%s1 + $0x250] sm:$0xff]
  %v133 = vld [vmem:[%s1 + $0x258] sm:$0xff]
  %v134 = vld [vmem:[%s1 + $0x260] sm:$0xff]
  %v135 = vld [vmem:[%s1 + $0x268] sm:$0xff]
  %v136 = vld [vmem:[%s1 + $0x270] sm:$0xff]
  %v137 = vld [vmem:[%s1 + $0x278] sm:$0xff]
  %v138 = vld [vmem:[%s1 + $0x280] sm:$0xff]
  %v139 = vld [vmem:[%s1 + $0x288] sm:$0xff]
  %v140 = vld [vmem:[%s1 + $0x290] sm:$0xff]
  %v141 = vld [vmem:[%s1 + $0x298] sm:$0xff]
  %v142 = vld [vmem:[%s1 + $0x2a0] sm:$0xff]
  %v143 = vld [vmem:[%s1 + $0x2a8] sm:$0xff]
  %v144 = vld [vmem:[%s1 + $0x2b0] sm:$0xff]
  %v145 = vld [vmem:[%s1 + $0x2b8] sm:$0xff]
  %v146 = vld [vmem:[%s1 + $0x2c0] sm:$0xff]
  %v147 = vld [vmem:[%s1 + $0x2c8] sm:$0xff]
  %v148 = vld [vmem:[%s1 + $0x2d0] sm:$0xff]
  %v149 = vld [vmem:[%s1 + $0x2d8] sm:$0xff]
  %v150 = vld [vmem:[%s1 + $0x2e0] sm:$0xff]
  %v151 = vld [vmem:[%s1 + $0x2e8] sm:$0xff]
  %v152 = vld [vmem:[%s1 + $0x2f0] sm:$0xff]
  %v153 = vld [vmem:[%s1 + $0x2f8] sm:$0xff]
  %v154 = vld [vmem:[%s1 + $0x300] sm:$0xff]
  %v155 = vld [vmem:[%s1 + $0x308] sm:$0xff]
  %v156 = vld [vmem:[%s1 + $0x310] sm:$0xff]
  %v157 = vld [vmem:[%s1 + $0x318] sm:$0xff]
  %v158 = vld [vmem:[%s1 + $0x320] sm:$0xff]
  %v159 = vld [vmem:[%s1 + $0x328] sm:$0xff]
  %v160 = vld [vmem:[%s1 + $0x330] sm:$0xff]
  %v161 = vld [vmem:[%s1 + $0x338] sm:$0xff]
  %v162 = vld [vmem:[%s1 + $0x340] sm:$0xff]
  %v163 = vld [vmem:[%s1 + $0x348] sm:$0xff]
  %v164 = vld [vmem:[%s1 + $0x350] sm:$0xff]
  %v165 = vld [vmem:[%s1 + $0x358] sm:$0xff]
  %v166 = vld [vmem:[%s1 + $0x360] sm:$0xff]
  %v167 = vld [vmem:[%s1 + $0x368] sm:$0xff]
  %v168 = vld [vmem:[%s1 + $0x370] sm:$0xff]
  %v169 = vld [vmem:[%s1 + $0x378] sm:$0xff]
  %v170 = vld [vmem:[%s1 + $0x380] sm:$0xff]
  %v171 = vld [vmem:[%s1 + $0x388] sm:$0xff]
  %v172 = vld [vmem:[%s1 + $0x390] sm:$0xff]
  %v173 = vld [vmem:[%s1 + $0x398] sm:$0xff]
  %v174 = vld [vmem:[%s1 + $0x3a0] sm:$0xff]
  %v175 = vld [vmem:[%s1 + $0x3a8] sm:$0xff]
  %v176 = vld [vmem:[%s1 + $0x3b0] sm:$0xff]
  %v177 = vld [vmem:[%s1 + $0x3b8] sm:$0xff]
  %v178 = vld [vmem:[%s1 + $0x3c0] sm:$0xff]
  %v179 = vld [vmem:[%s1 + $0x3c8] sm:$0xff]
  %v180 = vld [vmem:[%s1 + $0x3d0] sm:$0xff]
  %v181 = vld [vmem:[%s1 + $0x3d8] sm:$0xff]
  %v182 = vld [vmem:[%s1 + $0x3e0] sm:$0xff]
  %v183 = vld [vmem:[%s1 + $0x3e8] sm:$0xff]
  %v184 = vld [vmem:[%s1 + $0x3f0] sm:$0xff]
  %v185 = vld [vmem:[%s1 + $0x3f8] sm:$0xff]
  %v314 = vunpack.c.l.b16 %v58
  %v315 = vunpack.c.h.b16 %v58
  %v316 = vunpack.c.l.b16 %v59
  %v317 = vunpack.c.h.b16 %v59
  %v318 = vunpack.c.l.b16 %v60
  %v319 = vunpack.c.h.b16 %v60
  %v320 = vunpack.c.l.b16 %v61
  %v321 = vunpack.c.h.b16 %v61
  %v322 = vunpack.c.l.b16 %v62
  %v323 = vunpack.c.h.b16 %v62
  %v324 = vunpack.c.l.b16 %v63
  %v325 = vunpack.c.h.b16 %v63
  %v326 = vunpack.c.l.b16 %v64
  %v327 = vunpack.c.h.b16 %v64
  %v328 = vunpack.c.l.b16 %v65
  %v329 = vunpack.c.h.b16 %v65
  %v330 = vunpack.c.l.b16 %v66
  %v331 = vunpack.c.h.b16 %v66
  %v332 = vunpack.c.l.b16 %v67
  %v333 = vunpack.c.h.b16 %v67
  %v334 = vunpack.c.l.b16 %v68
  %v335 = vunpack.c.h.b16 %v68
  %v336 = vunpack.c.l.b16 %v69
  %v337 = vunpack.c.h.b16 %v69
  %v338 = vunpack.c.l.b16 %v70
  %v339 = vunpack.c.h.b16 %v70
  %v340 = vunpack.c.l.b16 %v71
  %v341 = vunpack.c.h.b16 %v71
  %v342 = vunpack.c.l.b16 %v72
  %v343 = vunpack.c.h.b16 %v72
  %v344 = vunpack.c.l.b16 %v73
  %v345 = vunpack.c.h.b16 %v73
  %v346 = vunpack.c.l.b16 %v74
  %v347 = vunpack.c.h.b16 %v74
  %v348 = vunpack.c.l.b16 %v75
  %v349 = vunpack.c.h.b16 %v75
  %v350 = vunpack.c.l.b16 %v76
  %v351 = vunpack.c.h.b16 %v76
  %v352 = vunpack.c.l.b16 %v77
  %v353 = vunpack.c.h.b16 %v77
  %v354 = vunpack.c.l.b16 %v78
  %v355 = vunpack.c.h.b16 %v78
  %v356 = vunpack.c.l.b16 %v79
  %v357 = vunpack.c.h.b16 %v79
  %v358 = vunpack.c.l.b16 %v80
  %v359 = vunpack.c.h.b16 %v80
  %v360 = vunpack.c.l.b16 %v81
  %v361 = vunpack.c.h.b16 %v81
  %v362 = vunpack.c.l.b16 %v82
  %v363 = vunpack.c.h.b16 %v82
  %v364 = vunpack.c.l.b16 %v83
  %v365 = vunpack.c.h.b16 %v83
  %v366 = vunpack.c.l.b16 %v84
  %v367 = vunpack.c.h.b16 %v84
  %v368 = vunpack.c.l.b16 %v85
  %v369 = vunpack.c.h.b16 %v85
  %v370 = vunpack.c.l.b16 %v86
  %v371 = vunpack.c.h.b16 %v86
  %v372 = vunpack.c.l.b16 %v87
  %v373 = vunpack.c.h.b16 %v87
  %v374 = vunpack.c.l.b16 %v88
  %v375 = vunpack.c.h.b16 %v88
  %v376 = vunpack.c.l.b16 %v89
  %v377 = vunpack.c.h.b16 %v89
  %v378 = vunpack.c.l.b16 %v90
  %v379 = vunpack.c.h.b16 %v90
  %v380 = vunpack.c.l.b16 %v91
  %v381 = vunpack.c.h.b16 %v91
  %v382 = vunpack.c.l.b16 %v92
  %v383 = vunpack.c.h.b16 %v92
  %v384 = vunpack.c.l.b16 %v93
  %v385 = vunpack.c.h.b16 %v93
  %v386 = vunpack.c.l.b16 %v94
  %v387 = vunpack.c.h.b16 %v94
  %v388 = vunpack.c.l.b16 %v95
  %v389 = vunpack.c.h.b16 %v95
  %v390 = vunpack.c.l.b16 %v96
  %v391 = vunpack.c.h.b16 %v96
  %v392 = vunpack.c.l.b16 %v97
  %v393 = vunpack.c.h.b16 %v97
  %v394 = vunpack.c.l.b16 %v98
  %v395 = vunpack.c.h.b16 %v98
  %v396 = vunpack.c.l.b16 %v99
  %v397 = vunpack.c.h.b16 %v99
  %v398 = vunpack.c.l.b16 %v100
  %v399 = vunpack.c.h.b16 %v100
  %v400 = vunpack.c.l.b16 %v101
  %v401 = vunpack.c.h.b16 %v101
  %v402 = vunpack.c.l.b16 %v102
  %v403 = vunpack.c.h.b16 %v102
  %v404 = vunpack.c.l.b16 %v103
  %v405 = vunpack.c.h.b16 %v103
  %v406 = vunpack.c.l.b16 %v104
  %v407 = vunpack.c.h.b16 %v104
  %v408 = vunpack.c.l.b16 %v105
  %v409 = vunpack.c.h.b16 %v105
  %v410 = vunpack.c.l.b16 %v106
  %v411 = vunpack.c.h.b16 %v106
  %v412 = vunpack.c.l.b16 %v107
  %v413 = vunpack.c.h.b16 %v107
  %v414 = vunpack.c.l.b16 %v108
  %v415 = vunpack.c.h.b16 %v108
  %v416 = vunpack.c.l.b16 %v109
  %v417 = vunpack.c.h.b16 %v109
  %v418 = vunpack.c.l.b16 %v110
  %v419 = vunpack.c.h.b16 %v110
  %v420 = vunpack.c.l.b16 %v111
  %v421 = vunpack.c.h.b16 %v111
  %v422 = vunpack.c.l.b16 %v112
  %v423 = vunpack.c.h.b16 %v112
  %v424 = vunpack.c.l.b16 %v113
  %v425 = vunpack.c.h.b16 %v113
  %v426 = vunpack.c.l.b16 %v114
  %v427 = vunpack.c.h.b16 %v114
  %v428 = vunpack.c.l.b16 %v115
  %v429 = vunpack.c.h.b16 %v115
  %v430 = vunpack.c.l.b16 %v116
  %v431 = vunpack.c.h.b16 %v116
  %v432 = vunpack.c.l.b16 %v117
  %v433 = vunpack.c.h.b16 %v117
  %v434 = vunpack.c.l.b16 %v118
  %v435 = vunpack.c.h.b16 %v118
  %v436 = vunpack.c.l.b16 %v119
  %v437 = vunpack.c.h.b16 %v119
  %v438 = vunpack.c.l.b16 %v120
  %v439 = vunpack.c.h.b16 %v120
  %v440 = vunpack.c.l.b16 %v121
  %v441 = vunpack.c.h.b16 %v121
  %v442 = vunpack.c.l.b16 %v122
  %v443 = vunpack.c.h.b16 %v122
  %v444 = vunpack.c.l.b16 %v123
  %v445 = vunpack.c.h.b16 %v123
  %v446 = vunpack.c.l.b16 %v124
  %v447 = vunpack.c.h.b16 %v124
  %v448 = vunpack.c.l.b16 %v125
  %v449 = vunpack.c.h.b16 %v125
  %v450 = vunpack.c.l.b16 %v126
  %v451 = vunpack.c.h.b16 %v126
  %v452 = vunpack.c.l.b16 %v127
  %v453 = vunpack.c.h.b16 %v127
  %v454 = vunpack.c.l.b16 %v128
  %v455 = vunpack.c.h.b16 %v128
  %v456 = vunpack.c.l.b16 %v129
  %v457 = vunpack.c.h.b16 %v129
  %v458 = vunpack.c.l.b16 %v130
  %v459 = vunpack.c.h.b16 %v130
  %v460 = vunpack.c.l.b16 %v131
  %v461 = vunpack.c.h.b16 %v131
  %v462 = vunpack.c.l.b16 %v132
  %v463 = vunpack.c.h.b16 %v132
  %v464 = vunpack.c.l.b16 %v133
  %v465 = vunpack.c.h.b16 %v133
  %v466 = vunpack.c.l.b16 %v134
  %v467 = vunpack.c.h.b16 %v134
  %v468 = vunpack.c.l.b16 %v135
  %v469 = vunpack.c.h.b16 %v135
  %v470 = vunpack.c.l.b16 %v136
  %v471 = vunpack.c.h.b16 %v136
  %v472 = vunpack.c.l.b16 %v137
  %v473 = vunpack.c.h.b16 %v137
  %v474 = vunpack.c.l.b16 %v138
  %v475 = vunpack.c.h.b16 %v138
  %v476 = vunpack.c.l.b16 %v139
  %v477 = vunpack.c.h.b16 %v139
  %v478 = vunpack.c.l.b16 %v140
  %v479 = vunpack.c.h.b16 %v140
  %v480 = vunpack.c.l.b16 %v141
  %v481 = vunpack.c.h.b16 %v141
  %v482 = vunpack.c.l.b16 %v142
  %v483 = vunpack.c.h.b16 %v142
  %v484 = vunpack.c.l.b16 %v143
  %v485 = vunpack.c.h.b16 %v143
  %v486 = vunpack.c.l.b16 %v144
  %v487 = vunpack.c.h.b16 %v144
  %v488 = vunpack.c.l.b16 %v145
  %v489 = vunpack.c.h.b16 %v145
  %v490 = vunpack.c.l.b16 %v146
  %v491 = vunpack.c.h.b16 %v146
  %v492 = vunpack.c.l.b16 %v147
  %v493 = vunpack.c.h.b16 %v147
  %v494 = vunpack.c.l.b16 %v148
  %v495 = vunpack.c.h.b16 %v148
  %v496 = vunpack.c.l.b16 %v149
  %v497 = vunpack.c.h.b16 %v149
  %v498 = vunpack.c.l.b16 %v150
  %v499 = vunpack.c.h.b16 %v150
  %v500 = vunpack.c.l.b16 %v151
  %v501 = vunpack.c.h.b16 %v151
  %v502 = vunpack.c.l.b16 %v152
  %v503 = vunpack.c.h.b16 %v152
  %v504 = vunpack.c.l.b16 %v153
  %v505 = vunpack.c.h.b16 %v153
  %v506 = vunpack.c.l.b16 %v154
  %v507 = vunpack.c.h.b16 %v154
  %v508 = vunpack.c.l.b16 %v155
  %v509 = vunpack.c.h.b16 %v155
  %v510 = vunpack.c.l.b16 %v156
  %v511 = vunpack.c.h.b16 %v156
  %v512 = vunpack.c.l.b16 %v157
  %v513 = vunpack.c.h.b16 %v157
  %v514 = vunpack.c.l.b16 %v158
  %v515 = vunpack.c.h.b16 %v158
  %v516 = vunpack.c.l.b16 %v159
  %v517 = vunpack.c.h.b16 %v159
  %v518 = vunpack.c.l.b16 %v160
  %v519 = vunpack.c.h.b16 %v160
  %v520 = vunpack.c.l.b16 %v161
  %v521 = vunpack.c.h.b16 %v161
  %v522 = vunpack.c.l.b16 %v162
  %v523 = vunpack.c.h.b16 %v162
  %v524 = vunpack.c.l.b16 %v163
  %v525 = vunpack.c.h.b16 %v163
  %v526 = vunpack.c.l.b16 %v164
  %v527 = vunpack.c.h.b16 %v164
  %v528 = vunpack.c.l.b16 %v165
  %v529 = vunpack.c.h.b16 %v165
  %v530 = vunpack.c.l.b16 %v166
  %v531 = vunpack.c.h.b16 %v166
  %v532 = vunpack.c.l.b16 %v167
  %v533 = vunpack.c.h.b16 %v167
  %v534 = vunpack.c.l.b16 %v168
  %v535 = vunpack.c.h.b16 %v168
  %v536 = vunpack.c.l.b16 %v169
  %v537 = vunpack.c.h.b16 %v169
  %v538 = vunpack.c.l.b16 %v170
  %v539 = vunpack.c.h.b16 %v170
  %v540 = vunpack.c.l.b16 %v171
  %v541 = vunpack.c.h.b16 %v171
  %v542 = vunpack.c.l.b16 %v172
  %v543 = vunpack.c.h.b16 %v172
  %v544 = vunpack.c.l.b16 %v173
  %v545 = vunpack.c.h.b16 %v173
  %v546 = vunpack.c.l.b16 %v174
  %v547 = vunpack.c.h.b16 %v174
  %v548 = vunpack.c.l.b16 %v175
  %v549 = vunpack.c.h.b16 %v175
  %v550 = vunpack.c.l.b16 %v176
  %v551 = vunpack.c.h.b16 %v176
  %v552 = vunpack.c.l.b16 %v177
  %v553 = vunpack.c.h.b16 %v177
  %v554 = vunpack.c.l.b16 %v178
  %v555 = vunpack.c.h.b16 %v178
  %v556 = vunpack.c.l.b16 %v179
  %v557 = vunpack.c.h.b16 %v179
  %v558 = vunpack.c.l.b16 %v180
  %v559 = vunpack.c.h.b16 %v180
  %v560 = vunpack.c.l.b16 %v181
  %v561 = vunpack.c.h.b16 %v181
  %v562 = vunpack.c.l.b16 %v182
  %v563 = vunpack.c.h.b16 %v182
  %v564 = vunpack.c.l.b16 %v183
  %v565 = vunpack.c.h.b16 %v183
  %v566 = vunpack.c.l.b16 %v184
  %v567 = vunpack.c.h.b16 %v184
  %v568 = vunpack.c.l.b16 %v185
  %v569 = vunpack.c.h.b16 %v185
  %v570 = vpack.c.b16 %v322, %v314
  %v571 = vpack.c.b16 %v323, %v315
  %v572 = vpack.c.b16 %v324, %v316
  %v573 = vpack.c.b16 %v325, %v317
  %v574 = vpack.c.b16 %v326, %v318
  %v575 = vpack.c.b16 %v327, %v319
  %v576 = vpack.c.b16 %v328, %v320
  %v577 = vpack.c.b16 %v329, %v321
  %v578 = vpack.c.b16 %v338, %v330
  %v579 = vpack.c.b16 %v339, %v331
  %v580 = vpack.c.b16 %v340, %v332
  %v581 = vpack.c.b16 %v341, %v333
  %v582 = vpack.c.b16 %v342, %v334
  %v583 = vpack.c.b16 %v343, %v335
  %v584 = vpack.c.b16 %v344, %v336
  %v585 = vpack.c.b16 %v345, %v337
  %v586 = vpack.c.b16 %v354, %v346
  %v587 = vpack.c.b16 %v355, %v347
  %v588 = vpack.c.b16 %v356, %v348
  %v589 = vpack.c.b16 %v357, %v349
  %v590 = vpack.c.b16 %v358, %v350
  %v591 = vpack.c.b16 %v359, %v351
  %v592 = vpack.c.b16 %v360, %v352
  %v593 = vpack.c.b16 %v361, %v353
  %v594 = vpack.c.b16 %v370, %v362
  %v595 = vpack.c.b16 %v371, %v363
  %v596 = vpack.c.b16 %v372, %v364
  %v597 = vpack.c.b16 %v373, %v365
  %v598 = vpack.c.b16 %v374, %v366
  %v599 = vpack.c.b16 %v375, %v367
  %v600 = vpack.c.b16 %v376, %v368
  %v601 = vpack.c.b16 %v377, %v369
  %v602 = vpack.c.b16 %v386, %v378
  %v603 = vpack.c.b16 %v387, %v379
  %v604 = vpack.c.b16 %v388, %v380
  %v605 = vpack.c.b16 %v389, %v381
  %v606 = vpack.c.b16 %v390, %v382
  %v607 = vpack.c.b16 %v391, %v383
  %v608 = vpack.c.b16 %v392, %v384
  %v609 = vpack.c.b16 %v393, %v385
  %v610 = vpack.c.b16 %v402, %v394
  %v611 = vpack.c.b16 %v403, %v395
  %v612 = vpack.c.b16 %v404, %v396
  %v613 = vpack.c.b16 %v405, %v397
  %v614 = vpack.c.b16 %v406, %v398
  %v615 = vpack.c.b16 %v407, %v399
  %v616 = vpack.c.b16 %v408, %v400
  %v617 = vpack.c.b16 %v409, %v401
  %v618 = vpack.c.b16 %v418, %v410
  %v619 = vpack.c.b16 %v419, %v411
  %v620 = vpack.c.b16 %v420, %v412
  %v621 = vpack.c.b16 %v421, %v413
  %v622 = vpack.c.b16 %v422, %v414
  %v623 = vpack.c.b16 %v423, %v415
  %v624 = vpack.c.b16 %v424, %v416
  %v625 = vpack.c.b16 %v425, %v417
  %v626 = vpack.c.b16 %v434, %v426
  %v627 = vpack.c.b16 %v435, %v427
  %v628 = vpack.c.b16 %v436, %v428
  %v629 = vpack.c.b16 %v437, %v429
  %v630 = vpack.c.b16 %v438, %v430
  %v631 = vpack.c.b16 %v439, %v431
  %v632 = vpack.c.b16 %v440, %v432
  %v633 = vpack.c.b16 %v441, %v433
  %v634 = vpack.c.b16 %v450, %v442
  %v635 = vpack.c.b16 %v451, %v443
  %v636 = vpack.c.b16 %v452, %v444
  %v637 = vpack.c.b16 %v453, %v445
  %v638 = vpack.c.b16 %v454, %v446
  %v639 = vpack.c.b16 %v455, %v447
  %v640 = vpack.c.b16 %v456, %v448
  %v641 = vpack.c.b16 %v457, %v449
  %v642 = vpack.c.b16 %v466, %v458
  %v643 = vpack.c.b16 %v467, %v459
  %v644 = vpack.c.b16 %v468, %v460
  %v645 = vpack.c.b16 %v469, %v461
  %v646 = vpack.c.b16 %v470, %v462
  %v647 = vpack.c.b16 %v471, %v463
  %v648 = vpack.c.b16 %v472, %v464
  %v649 = vpack.c.b16 %v473, %v465
  %v650 = vpack.c.b16 %v482, %v474
  %v651 = vpack.c.b16 %v483, %v475
  %v652 = vpack.c.b16 %v484, %v476
  %v653 = vpack.c.b16 %v485, %v477
  %v654 = vpack.c.b16 %v486, %v478
  %v655 = vpack.c.b16 %v487, %v479
  %v656 = vpack.c.b16 %v488, %v480
  %v657 = vpack.c.b16 %v489, %v481
  %v658 = vpack.c.b16 %v498, %v490
  %v659 = vpack.c.b16 %v499, %v491
  %v660 = vpack.c.b16 %v500, %v492
  %v661 = vpack.c.b16 %v501, %v493
  %v662 = vpack.c.b16 %v502, %v494
  %v663 = vpack.c.b16 %v503, %v495
  %v664 = vpack.c.b16 %v504, %v496
  %v665 = vpack.c.b16 %v505, %v497
  %v666 = vpack.c.b16 %v514, %v506
  %v667 = vpack.c.b16 %v515, %v507
  %v668 = vpack.c.b16 %v516, %v508
  %v669 = vpack.c.b16 %v517, %v509
  %v670 = vpack.c.b16 %v518, %v510
  %v671 = vpack.c.b16 %v519, %v511
  %v672 = vpack.c.b16 %v520, %v512
  %v673 = vpack.c.b16 %v521, %v513
  %v674 = vpack.c.b16 %v530, %v522
  %v675 = vpack.c.b16 %v531, %v523
  %v676 = vpack.c.b16 %v532, %v524
  %v677 = vpack.c.b16 %v533, %v525
  %v678 = vpack.c.b16 %v534, %v526
  %v679 = vpack.c.b16 %v535, %v527
  %v680 = vpack.c.b16 %v536, %v528
  %v681 = vpack.c.b16 %v537, %v529
  %v682 = vpack.c.b16 %v546, %v538
  %v683 = vpack.c.b16 %v547, %v539
  %v684 = vpack.c.b16 %v548, %v540
  %v685 = vpack.c.b16 %v549, %v541
  %v686 = vpack.c.b16 %v550, %v542
  %v687 = vpack.c.b16 %v551, %v543
  %v688 = vpack.c.b16 %v552, %v544
  %v689 = vpack.c.b16 %v553, %v545
  %v690 = vpack.c.b16 %v562, %v554
  %v691 = vpack.c.b16 %v563, %v555
  %v692 = vpack.c.b16 %v564, %v556
  %v693 = vpack.c.b16 %v565, %v557
  %v694 = vpack.c.b16 %v566, %v558
  %v695 = vpack.c.b16 %v567, %v559
  %v696 = vpack.c.b16 %v568, %v560
  %v697 = vpack.c.b16 %v569, %v561
  %826 = vmatprep.subr.bf16.mxu0 %v571
  %827 = vmatpush1.bf16.msra.mxu0 %v570
  %828 = vmatprep.subr.bf16.mxu0 %v579
  %829 = vmatpush1.bf16.msra.mxu0 %v578
  %830 = vmatprep.subr.bf16.mxu0 %v587
  %831 = vmatpush1.bf16.msra.mxu0 %v586
  %832 = vmatprep.subr.bf16.mxu0 %v595
  %833 = vmatpush1.bf16.msra.mxu0 %v594
  %834 = vmatprep.subr.bf16.mxu0 %v603
  %835 = vmatpush1.bf16.msra.mxu0 %v602
  %836 = vmatprep.subr.bf16.mxu0 %v611
  %837 = vmatpush1.bf16.msra.mxu0 %v610
  %838 = vmatprep.subr.bf16.mxu0 %v619
  %839 = vmatpush1.bf16.msra.mxu0 %v618
  %840 = vmatprep.subr.bf16.mxu0 %v627
  %841 = vmatpush1.bf16.msra.mxu0 %v626
  %842 = vmatprep.subr.bf16.mxu0 %v635
  %843 = vmatpush1.bf16.msra.mxu0 %v634
  %844 = vmatprep.subr.bf16.mxu0 %v643
  %845 = vmatpush1.bf16.msra.mxu0 %v642
  %846 = vmatprep.subr.bf16.mxu0 %v651
  %847 = vmatpush1.bf16.msra.mxu0 %v650
  %848 = vmatprep.subr.bf16.mxu0 %v659
  %849 = vmatpush1.bf16.msra.mxu0 %v658
  %850 = vmatprep.subr.bf16.mxu0 %v667
  %851 = vmatpush1.bf16.msra.mxu0 %v666
  %852 = vmatprep.subr.bf16.mxu0 %v675
  %853 = vmatpush1.bf16.msra.mxu0 %v674
  %854 = vmatprep.subr.bf16.mxu0 %v683
  %855 = vmatpush1.bf16.msra.mxu0 %v682
  %856 = vmatprep.subr.bf16.mxu0 %v691
  %857 = vmatpush1.bf16.msra.mxu0 %v690
  %858 = vmatprep.mubr.bf16.mxu0 %v57
  %859 = vmatmul.mubr.bf16.gmra.mrb[0].mxu0 %v56
  %v860 = vpop.f32.mrb[0].mxu0
  %v861 = vadd.f32 0.0, %v860
  %v862 = vpop.f32.mrb[0].mxu0
  %v863 = vadd.f32 0.0, %v862
  %v864 = vpop.f32.mrb[0].mxu0
  %v865 = vpop.f32.mrb[0].mxu0
  %866 = vdwg.mxu0
  %867 = vmatprep.subr.bf16.mxu0 %v573
  %868 = vmatpush1.bf16.msra.mxu0 %v572
  %869 = vmatprep.subr.bf16.mxu0 %v581
  %870 = vmatpush1.bf16.msra.mxu0 %v580
  %871 = vmatprep.subr.bf16.mxu0 %v589
  %872 = vmatpush1.bf16.msra.mxu0 %v588
  %873 = vmatprep.subr.bf16.mxu0 %v597
  %874 = vmatpush1.bf16.msra.mxu0 %v596
  %875 = vmatprep.subr.bf16.mxu0 %v605
  %876 = vmatpush1.bf16.msra.mxu0 %v604
  %877 = vmatprep.subr.bf16.mxu0 %v613
  %878 = vmatpush1.bf16.msra.mxu0 %v612
  %879 = vmatprep.subr.bf16.mxu0 %v621
  %880 = vmatpush1.bf16.msra.mxu0 %v620
  %881 = vmatprep.subr.bf16.mxu0 %v629
  %882 = vmatpush1.bf16.msra.mxu0 %v628
  %883 = vmatprep.subr.bf16.mxu0 %v637
  %884 = vmatpush1.bf16.msra.mxu0 %v636
  %885 = vmatprep.subr.bf16.mxu0 %v645
  %886 = vmatpush1.bf16.msra.mxu0 %v644
  %887 = vmatprep.subr.bf16.mxu0 %v653
  %888 = vmatpush1.bf16.msra.mxu0 %v652
  %889 = vmatprep.subr.bf16.mxu0 %v661
  %890 = vmatpush1.bf16.msra.mxu0 %v660
  %891 = vmatprep.subr.bf16.mxu0 %v669
  %892 = vmatpush1.bf16.msra.mxu0 %v668
  %893 = vmatprep.subr.bf16.mxu0 %v677
  %894 = vmatpush1.bf16.msra.mxu0 %v676
  %895 = vmatprep.subr.bf16.mxu0 %v685
  %896 = vmatpush1.bf16.msra.mxu0 %v684
  %897 = vmatprep.subr.bf16.mxu0 %v693
  %898 = vmatpush1.bf16.msra.mxu0 %v692
  %899 = vmatprep.mubr.bf16.mxu0 %v57
  %900 = vmatmul.mubr.bf16.gmra.mrb[0].mxu0 %v56
  %v901 = vpop.f32.mrb[0].mxu0
  %v902 = vadd.f32 0.0, %v901
  %v903 = vpop.f32.mrb[0].mxu0
  %v904 = vadd.f32 0.0, %v903
  %v905 = vpop.f32.mrb[0].mxu0
  %v906 = vpop.f32.mrb[0].mxu0
  %907 = vdwg.mxu0
  %908 = vmatprep.subr.bf16.mxu0 %v575
  %909 = vmatpush1.bf16.msra.mxu0 %v574
  %910 = vmatprep.subr.bf16.mxu0 %v583
  %911 = vmatpush1.bf16.msra.mxu0 %v582
  %912 = vmatprep.subr.bf16.mxu0 %v591
  %913 = vmatpush1.bf16.msra.mxu0 %v590
  %914 = vmatprep.subr.bf16.mxu0 %v599
  %915 = vmatpush1.bf16.msra.mxu0 %v598
  %916 = vmatprep.subr.bf16.mxu0 %v607
  %917 = vmatpush1.bf16.msra.mxu0 %v606
  %918 = vmatprep.subr.bf16.mxu0 %v615
  %919 = vmatpush1.bf16.msra.mxu0 %v614
  %920 = vmatprep.subr.bf16.mxu0 %v623
  %921 = vmatpush1.bf16.msra.mxu0 %v622
  %922 = vmatprep.subr.bf16.mxu0 %v631
  %923 = vmatpush1.bf16.msra.mxu0 %v630
  %924 = vmatprep.subr.bf16.mxu0 %v639
  %925 = vmatpush1.bf16.msra.mxu0 %v638
  %926 = vmatprep.subr.bf16.mxu0 %v647
  %927 = vmatpush1.bf16.msra.mxu0 %v646
  %928 = vmatprep.subr.bf16.mxu0 %v655
  %929 = vmatpush1.bf16.msra.mxu0 %v654
  %930 = vmatprep.subr.bf16.mxu0 %v663
  %931 = vmatpush1.bf16.msra.mxu0 %v662
  %932 = vmatprep.subr.bf16.mxu0 %v671
  %933 = vmatpush1.bf16.msra.mxu0 %v670
  %934 = vmatprep.subr.bf16.mxu0 %v679
  %935 = vmatpush1.bf16.msra.mxu0 %v678
  %936 = vmatprep.subr.bf16.mxu0 %v687
  %937 = vmatpush1.bf16.msra.mxu0 %v686
  %938 = vmatprep.subr.bf16.mxu0 %v695
  %939 = vmatpush1.bf16.msra.mxu0 %v694
  %940 = vmatprep.mubr.bf16.mxu0 %v57
  %941 = vmatmul.mubr.bf16.gmra.mrb[0].mxu0 %v56
  %v942 = vpop.f32.mrb[0].mxu0
  %v943 = vadd.f32 0.0, %v942
  %v944 = vpop.f32.mrb[0].mxu0
  %v945 = vadd.f32 0.0, %v944
  %v946 = vpop.f32.mrb[0].mxu0
  %v947 = vpop.f32.mrb[0].mxu0
  %948 = vdwg.mxu0
  %949 = vmatprep.subr.bf16.mxu0 %v577
  %950 = vmatpush1.bf16.msra.mxu0 %v576
  %951 = vmatprep.subr.bf16.mxu0 %v585
  %952 = vmatpush1.bf16.msra.mxu0 %v584
  %953 = vmatprep.subr.bf16.mxu0 %v593
  %954 = vmatpush1.bf16.msra.mxu0 %v592
  %955 = vmatprep.subr.bf16.mxu0 %v601
  %956 = vmatpush1.bf16.msra.mxu0 %v600
  %957 = vmatprep.subr.bf16.mxu0 %v609
  %958 = vmatpush1.bf16.msra.mxu0 %v608
  %959 = vmatprep.subr.bf16.mxu0 %v617
  %960 = vmatpush1.bf16.msra.mxu0 %v616
  %961 = vmatprep.subr.bf16.mxu0 %v625
  %962 = vmatpush1.bf16.msra.mxu0 %v624
  %963 = vmatprep.subr.bf16.mxu0 %v633
  %964 = vmatpush1.bf16.msra.mxu0 %v632
  %965 = vmatprep.subr.bf16.mxu0 %v641
  %966 = vmatpush1.bf16.msra.mxu0 %v640
  %967 = vmatprep.subr.bf16.mxu0 %v649
  %968 = vmatpush1.bf16.msra.mxu0 %v648
  %969 = vmatprep.subr.bf16.mxu0 %v657
  %970 = vmatpush1.bf16.msra.mxu0 %v656
  %971 = vmatprep.subr.bf16.mxu0 %v665
  %972 = vmatpush1.bf16.msra.mxu0 %v664
  %973 = vmatprep.subr.bf16.mxu0 %v673
  %974 = vmatpush1.bf16.msra.mxu0 %v672
  %975 = vmatprep.subr.bf16.mxu0 %v681
  %976 = vmatpush1.bf16.msra.mxu0 %v680
  %977 = vmatprep.subr.bf16.mxu0 %v689
  %978 = vmatpush1.bf16.msra.mxu0 %v688
  %979 = vmatprep.subr.bf16.mxu0 %v697
  %980 = vmatpush1.bf16.msra.mxu0 %v696
  %981 = vmatprep.mubr.bf16.mxu0 %v57
  %982 = vmatmul.mubr.bf16.gmra.mrb[0].mxu0 %v56
  %v983 = vpop.f32.mrb[0].mxu0
  %v984 = vadd.f32 0.0, %v983
  %v985 = vpop.f32.mrb[0].mxu0
  %v986 = vadd.f32 0.0, %v985
  %v987 = vpop.f32.mrb[0].mxu0
  %v988 = vpop.f32.mrb[0].mxu0
  %989 = vdwg.mxu0
  %v990 = vld [vmem:[%s2] sm:$0xf]
  %v992 = vlaneseq
  %v993 = vshrl.u32 %v992, 7
  %v994 = vsub.s32 0, %v993
  %v995 = vrot.slane %v990, %v994
  %v996 = vlaneseq
  %v997 = vshrl.u32 %v996, 7
  %v998 = vsub.s32 1, %v997
  %v999 = vrot.slane %v990, %v998
  %v1000 = vlaneseq
  %v1001 = vshrl.u32 %v1000, 7
  %v1002 = vsub.s32 2, %v1001
  %v1003 = vrot.slane %v990, %v1002
  %v1004 = vlaneseq
  %v1005 = vshrl.u32 %v1004, 7
  %v1006 = vsub.s32 3, %v1005
  %v1007 = vrot.slane %v990, %v1006
  %v1012 = vadd.f32 %v861, %v995
  %v1013 = vadd.f32 %v863, %v999
  %v1014 = vadd.f32 %v902, %v1003
  %v1015 = vadd.f32 %v904, %v1007
  %v1016 = vxor.u32 %v1012, 2147483648
  %v1017 = vxor.u32 %v1013, 2147483648
  %v1018 = vxor.u32 %v1014, 2147483648
  %v1019 = vmul.f32 %v1016, 1.442695
  %v1020 = vpow.pop %v1019
  %v1021 = vmul.f32 %v1017, 1.442695
  %v1022 = vpow.pop %v1021
  %v1023 = vmul.f32 %v1018, 1.442695
  %v1024 = vpow.pop %v1023
  %v1025 = vadd.f32 %v1020, 1.0
  %v1026 = vadd.f32 %v1022, 1.0
  %v1027 = vadd.f32 %v1024, 1.0
  %v1028 = vrcp.pop %v1025
  %v1029 = vmul.f32 1.0, %v1028
  %v1030 = vrcp.pop %v1026
  %v1031 = vmul.f32 1.0, %v1030
  %v1032 = vrcp.pop %v1027
  %v1033 = vmul.f32 1.0, %v1032
  %v1034 = vtanh.pop %v1015
  %v1035 = vmul.f32 %v1031, 0.0
  %v1036 = vmul.f32 %v1029, %v1034
  %v1037 = vadd.f32 %v1035, %v1036
  %v1038 = vtanh.pop %v1037
  %v1039 = vmul.f32 %v1033, %v1038
  %s1040 = smul.u32 1, 4
  %s1041 = smul.addr %s1040, 8
  %s1042 = scalar_lea.vmem %s0, %s1041
  %v1043 = vld [vmem:[%s1042] sm:$0xff]
  %v1044 = vld [vmem:[%s1042 + $0x8] sm:$0xff]
  %v1045 = vld [vmem:[%s1042 + $0x10] sm:$0xff]
  %v1046 = vld [vmem:[%s1042 + $0x18] sm:$0xff]
  %v1047 = vadd.f32 %v1043, %v943
  %v1048 = vadd.f32 %v1044, %v945
  %v1049 = vadd.f32 %v1045, %v984
  %v1050 = vadd.f32 %v1046, %v986
  %v1051 = vxor.u32 %v1047, 2147483648
  %v1052 = vxor.u32 %v1048, 2147483648
  %v1053 = vxor.u32 %v1049, 2147483648
  %v1054 = vmul.f32 %v1051, 1.442695
  %v1055 = vpow.pop %v1054
  %v1056 = vmul.f32 %v1052, 1.442695
  %v1057 = vpow.pop %v1056
  %v1058 = vmul.f32 %v1053, 1.442695
  %v1059 = vpow.pop %v1058
  %v1060 = vadd.f32 %v1055, 1.0
  %v1061 = vadd.f32 %v1057, 1.0
  %v1062 = vadd.f32 %v1059, 1.0
  %v1063 = vrcp.pop %v1060
  %v1064 = vmul.f32 1.0, %v1063
  %v1065 = vrcp.pop %v1061
  %v1066 = vmul.f32 1.0, %v1065
  %v1067 = vrcp.pop %v1062
  %v1068 = vmul.f32 1.0, %v1067
  %v1069 = vtanh.pop %v1050
  %v1070 = vmul.f32 %v1066, %v53
  %v1071 = vmul.f32 %v1064, %v1069
  %v1072 = vadd.f32 %v1070, %v1071
  %v1073 = vtanh.pop %v1072
  %v1074 = vmul.f32 %v1068, %v1073
  %v1075 = vpack.c.bf16 %v1074, %v1074
  %v1076 = vpack.c.bf16 %v1039, %v1039
  %1077 = vmatprep.subr.bf16.mxu0 %v571
  %1078 = vmatpush1.bf16.msra.mxu0 %v570
  %1079 = vmatprep.subr.bf16.mxu0 %v579
  %1080 = vmatpush1.bf16.msra.mxu0 %v578
  %1081 = vmatprep.subr.bf16.mxu0 %v587
  %1082 = vmatpush1.bf16.msra.mxu0 %v586
  %1083 = vmatprep.subr.bf16.mxu0 %v595
  %1084 = vmatpush1.bf16.msra.mxu0 %v594
  %1085 = vmatprep.subr.bf16.mxu0 %v603
  %1086 = vmatpush1.bf16.msra.mxu0 %v602
  %1087 = vmatprep.subr.bf16.mxu0 %v611
  %1088 = vmatpush1.bf16.msra.mxu0 %v610
  %1089 = vmatprep.subr.bf16.mxu0 %v619
  %1090 = vmatpush1.bf16.msra.mxu0 %v618
  %1091 = vmatprep.subr.bf16.mxu0 %v627
  %1092 = vmatpush1.bf16.msra.mxu0 %v626
  %1093 = vmatprep.subr.bf16.mxu0 %v635
  %1094 = vmatpush1.bf16.msra.mxu0 %v634
  %1095 = vmatprep.subr.bf16.mxu0 %v643
  %1096 = vmatpush1.bf16.msra.mxu0 %v642
  %1097 = vmatprep.subr.bf16.mxu0 %v651
  %1098 = vmatpush1.bf16.msra.mxu0 %v650
  %1099 = vmatprep.subr.bf16.mxu0 %v659
  %1100 = vmatpush1.bf16.msra.mxu0 %v658
  %1101 = vmatprep.subr.bf16.mxu0 %v667
  %1102 = vmatpush1.bf16.msra.mxu0 %v666
  %1103 = vmatprep.subr.bf16.mxu0 %v675
  %1104 = vmatpush1.bf16.msra.mxu0 %v674
  %1105 = vmatprep.subr.bf16.mxu0 %v683
  %1106 = vmatpush1.bf16.msra.mxu0 %v682
  %1107 = vmatprep.subr.bf16.mxu0 %v691
  %1108 = vmatpush1.bf16.msra.mxu0 %v690
  %1109 = vmatprep.mubr.bf16.mxu0 %v1076
  %1110 = vmatmul.mubr.bf16.gmra.mrb[0].mxu0 %v1075
  %v1111 = vpop.f32.mrb[0].mxu0
  %v1112 = vadd.f32 0.0, %v1111
  %v1113 = vpop.f32.mrb[0].mxu0
  %v1114 = vadd.f32 0.0, %v1113
  %v1115 = vpop.f32.mrb[0].mxu0
  %v1116 = vpop.f32.mrb[0].mxu0
  %1117 = vdwg.mxu0
  %1118 = vmatprep.subr.bf16.mxu0 %v573
  %1119 = vmatpush1.bf16.msra.mxu0 %v572
  %1120 = vmatprep.subr.bf16.mxu0 %v581
  %1121 = vmatpush1.bf16.msra.mxu0 %v580
  %1122 = vmatprep.subr.bf16.mxu0 %v589
  %1123 = vmatpush1.bf16.msra.mxu0 %v588
  %1124 = vmatprep.subr.bf16.mxu0 %v597
  %1125 = vmatpush1.bf16.msra.mxu0 %v596
  %1126 = vmatprep.subr.bf16.mxu0 %v605
  %1127 = vmatpush1.bf16.msra.mxu0 %v604
  %1128 = vmatprep.subr.bf16.mxu0 %v613
  %1129 = vmatpush1.bf16.msra.mxu0 %v612
  %1130 = vmatprep.subr.bf16.mxu0 %v621
  %1131 = vmatpush1.bf16.msra.mxu0 %v620
  %1132 = vmatprep.subr.bf16.mxu0 %v629
  %1133 = vmatpush1.bf16.msra.mxu0 %v628
  %1134 = vmatprep.subr.bf16.mxu0 %v637
  %1135 = vmatpush1.bf16.msra.mxu0 %v636
  %1136 = vmatprep.subr.bf16.mxu0 %v645
  %1137 = vmatpush1.bf16.msra.mxu0 %v644
  %1138 = vmatprep.subr.bf16.mxu0 %v653
  %1139 = vmatpush1.bf16.msra.mxu0 %v652
  %1140 = vmatprep.subr.bf16.mxu0 %v661
  %1141 = vmatpush1.bf16.msra.mxu0 %v660
  %1142 = vmatprep.subr.bf16.mxu0 %v669
  %1143 = vmatpush1.bf16.msra.mxu0 %v668
  %1144 = vmatprep.subr.bf16.mxu0 %v677
  %1145 = vmatpush1.bf16.msra.mxu0 %v676
  %1146 = vmatprep.subr.bf16.mxu0 %v685
  %1147 = vmatpush1.bf16.msra.mxu0 %v684
  %1148 = vmatprep.subr.bf16.mxu0 %v693
  %1149 = vmatpush1.bf16.msra.mxu0 %v692
  %1150 = vmatprep.mubr.bf16.mxu0 %v1076
  %1151 = vmatmul.mubr.bf16.gmra.mrb[0].mxu0 %v1075
  %v1152 = vpop.f32.mrb[0].mxu0
  %v1153 = vadd.f32 0.0, %v1152
  %v1154 = vpop.f32.mrb[0].mxu0
  %v1155 = vadd.f32 0.0, %v1154
  %v1156 = vpop.f32.mrb[0].mxu0
  %v1157 = vpop.f32.mrb[0].mxu0
  %1158 = vdwg.mxu0
  %1159 = vmatprep.subr.bf16.mxu0 %v575
  %1160 = vmatpush1.bf16.msra.mxu0 %v574
  %1161 = vmatprep.subr.bf16.mxu0 %v583
  %1162 = vmatpush1.bf16.msra.mxu0 %v582
  %1163 = vmatprep.subr.bf16.mxu0 %v591
  %1164 = vmatpush1.bf16.msra.mxu0 %v590
  %1165 = vmatprep.subr.bf16.mxu0 %v599
  %1166 = vmatpush1.bf16.msra.mxu0 %v598
  %1167 = vmatprep.subr.bf16.mxu0 %v607
  %1168 = vmatpush1.bf16.msra.mxu0 %v606
  %1169 = vmatprep.subr.bf16.mxu0 %v615
  %1170 = vmatpush1.bf16.msra.mxu0 %v614
  %1171 = vmatprep.subr.bf16.mxu0 %v623
  %1172 = vmatpush1.bf16.msra.mxu0 %v622
  %1173 = vmatprep.subr.bf16.mxu0 %v631
  %1174 = vmatpush1.bf16.msra.mxu0 %v630
  %1175 = vmatprep.subr.bf16.mxu0 %v639
  %1176 = vmatpush1.bf16.msra.mxu0 %v638
  %1177 = vmatprep.subr.bf16.mxu0 %v647
  %1178 = vmatpush1.bf16.msra.mxu0 %v646
  %1179 = vmatprep.subr.bf16.mxu0 %v655
  %1180 = vmatpush1.bf16.msra.mxu0 %v654
  %1181 = vmatprep.subr.bf16.mxu0 %v663
  %1182 = vmatpush1.bf16.msra.mxu0 %v662
  %1183 = vmatprep.subr.bf16.mxu0 %v671
  %1184 = vmatpush1.bf16.msra.mxu0 %v670
  %1185 = vmatprep.subr.bf16.mxu0 %v679
  %1186 = vmatpush1.bf16.msra.mxu0 %v678
  %1187 = vmatprep.subr.bf16.mxu0 %v687
  %1188 = vmatpush1.bf16.msra.mxu0 %v686
  %1189 = vmatprep.subr.bf16.mxu0 %v695
  %1190 = vmatpush1.bf16.msra.mxu0 %v694
  %1191 = vmatprep.mubr.bf16.mxu0 %v1076
  %1192 = vmatmul.mubr.bf16.gmra.mrb[0].mxu0 %v1075
  %v1193 = vpop.f32.mrb[0].mxu0
  %v1194 = vadd.f32 0.0, %v1193
  %v1195 = vpop.f32.mrb[0].mxu0
  %v1196 = vadd.f32 0.0, %v1195
  %v1197 = vpop.f32.mrb[0].mxu0
  %v1198 = vpop.f32.mrb[0].mxu0
  %1199 = vdwg.mxu0
  %1200 = vmatprep.subr.bf16.mxu0 %v577
  %1201 = vmatpush1.bf16.msra.mxu0 %v576
  %1202 = vmatprep.subr.bf16.mxu0 %v585
  %1203 = vmatpush1.bf16.msra.mxu0 %v584
  %1204 = vmatprep.subr.bf16.mxu0 %v593
  %1205 = vmatpush1.bf16.msra.mxu0 %v592
  %1206 = vmatprep.subr.bf16.mxu0 %v601
  %1207 = vmatpush1.bf16.msra.mxu0 %v600
  %1208 = vmatprep.subr.bf16.mxu0 %v609
  %1209 = vmatpush1.bf16.msra.mxu0 %v608
  %1210 = vmatprep.subr.bf16.mxu0 %v617
  %1211 = vmatpush1.bf16.msra.mxu0 %v616
  %1212 = vmatprep.subr.bf16.mxu0 %v625
  %1213 = vmatpush1.bf16.msra.mxu0 %v624
  %1214 = vmatprep.subr.bf16.mxu0 %v633
  %1215 = vmatpush1.bf16.msra.mxu0 %v632
  %1216 = vmatprep.subr.bf16.mxu0 %v641
  %1217 = vmatpush1.bf16.msra.mxu0 %v640
  %1218 = vmatprep.subr.bf16.mxu0 %v649
  %1219 = vmatpush1.bf16.msra.mxu0 %v648
  %1220 = vmatprep.subr.bf16.mxu0 %v657
  %1221 = vmatpush1.bf16.msra.mxu0 %v656
  %1222 = vmatprep.subr.bf16.mxu0 %v665
  %1223 = vmatpush1.bf16.msra.mxu0 %v664
  %1224 = vmatprep.subr.bf16.mxu0 %v673
  %1225 = vmatpush1.bf16.msra.mxu0 %v672
  %1226 = vmatprep.subr.bf16.mxu0 %v681
  %1227 = vmatpush1.bf16.msra.mxu0 %v680
  %1228 = vmatprep.subr.bf16.mxu0 %v689
  %1229 = vmatpush1.bf16.msra.mxu0 %v688
  %1230 = vmatprep.subr.bf16.mxu0 %v697
  %1231 = vmatpush1.bf16.msra.mxu0 %v696
  %1232 = vmatprep.mubr.bf16.mxu0 %v1076
  %1233 = vmatmul.mubr.bf16.gmra.mrb[0].mxu0 %v1075
  %v1234 = vpop.f32.mrb[0].mxu0
  %v1235 = vadd.f32 0.0, %v1234
  %v1236 = vpop.f32.mrb[0].mxu0
  %v1237 = vadd.f32 0.0, %v1236
  %v1238 = vpop.f32.mrb[0].mxu0
  %v1239 = vpop.f32.mrb[0].mxu0
  %1240 = vdwg.mxu0
  %v1241 = vadd.f32 %v1112, %v995
  %v1242 = vadd.f32 %v1114, %v999
  %v1243 = vadd.f32 %v1153, %v1003
  %v1244 = vadd.f32 %v1155, %v1007
  %v1245 = vxor.u32 %v1241, 2147483648
  %v1246 = vxor.u32 %v1242, 2147483648
  %v1247 = vxor.u32 %v1243, 2147483648
  %v1248 = vmul.f32 %v1245, 1.442695
  %v1249 = vpow.pop %v1248
  %v1250 = vmul.f32 %v1246, 1.442695
  %v1251 = vpow.pop %v1250
  %v1252 = vmul.f32 %v1247, 1.442695
  %v1253 = vpow.pop %v1252
  %v1254 = vadd.f32 %v1249, 1.0
  %v1255 = vadd.f32 %v1251, 1.0
  %v1256 = vadd.f32 %v1253, 1.0
  %v1257 = vrcp.pop %v1254
  %v1258 = vmul.f32 1.0, %v1257
  %v1259 = vrcp.pop %v1255
  %v1260 = vmul.f32 1.0, %v1259
  %v1261 = vrcp.pop %v1256
  %v1262 = vmul.f32 1.0, %v1261
  %v1263 = vtanh.pop %v1244
  %v1264 = vmul.f32 %v1260, %v1037
  %v1265 = vmul.f32 %v1258, %v1263
  %v1266 = vadd.f32 %v1264, %v1265
  %v1267 = vtanh.pop %v1266
  %v1268 = vmul.f32 %v1262, %v1267
  %s1269 = smul.u32 2, 4
  %s1270 = smul.addr %s1269, 8
  %s1271 = scalar_lea.vmem %s0, %s1270
  %v1272 = vld [vmem:[%s1271] sm:$0xff]
  %v1273 = vld [vmem:[%s1271 + $0x8] sm:$0xff]
  %v1274 = vld [vmem:[%s1271 + $0x10] sm:$0xff]
  %v1275 = vld [vmem:[%s1271 + $0x18] sm:$0xff]
  %v1276 = vadd.f32 %v1272, %v1194
  %v1277 = vadd.f32 %v1273, %v1196
  %v1278 = vadd.f32 %v1274, %v1235
  %v1279 = vadd.f32 %v1275, %v1237
  %v1280 = vxor.u32 %v1276, 2147483648
  %v1281 = vxor.u32 %v1277, 2147483648
  %v1282 = vxor.u32 %v1278, 2147483648
  %v1283 = vmul.f32 %v1280, 1.442695
  %v1284 = vpow.pop %v1283
  %v1285 = vmul.f32 %v1281, 1.442695
  %v1286 = vpow.pop %v1285
  %v1287 = vmul.f32 %v1282, 1.442695
  %v1288 = vpow.pop %v1287
  %v1289 = vadd.f32 %v1284, 1.0
  %v1290 = vadd.f32 %v1286, 1.0
  %v1291 = vadd.f32 %v1288, 1.0
  %v1292 = vrcp.pop %v1289
  %v1293 = vmul.f32 1.0, %v1292
  %v1294 = vrcp.pop %v1290
  %v1295 = vmul.f32 1.0, %v1294
  %v1296 = vrcp.pop %v1291
  %v1297 = vmul.f32 1.0, %v1296
  %v1298 = vtanh.pop %v1279
  %v1299 = vmul.f32 %v1295, %v1072
  %v1300 = vmul.f32 %v1293, %v1298
  %v1301 = vadd.f32 %v1299, %v1300
  %v1302 = vtanh.pop %v1301
  %v1303 = vmul.f32 %v1297, %v1302
  %v1304 = vpack.c.bf16 %v1303, %v1303
  %v1305 = vpack.c.bf16 %v1268, %v1268
  %1306 = vmatprep.subr.bf16.mxu0 %v571
  %1307 = vmatpush1.bf16.msra.mxu0 %v570
  %1308 = vmatprep.subr.bf16.mxu0 %v579
  %1309 = vmatpush1.bf16.msra.mxu0 %v578
  %1310 = vmatprep.subr.bf16.mxu0 %v587
  %1311 = vmatpush1.bf16.msra.mxu0 %v586
  %1312 = vmatprep.subr.bf16.mxu0 %v595
  %1313 = vmatpush1.bf16.msra.mxu0 %v594
  %1314 = vmatprep.subr.bf16.mxu0 %v603
  %1315 = vmatpush1.bf16.msra.mxu0 %v602
  %1316 = vmatprep.subr.bf16.mxu0 %v611
  %1317 = vmatpush1.bf16.msra.mxu0 %v610
  %1318 = vmatprep.subr.bf16.mxu0 %v619
  %1319 = vmatpush1.bf16.msra.mxu0 %v618
  %1320 = vmatprep.subr.bf16.mxu0 %v627
  %1321 = vmatpush1.bf16.msra.mxu0 %v626
  %1322 = vmatprep.subr.bf16.mxu0 %v635
  %1323 = vmatpush1.bf16.msra.mxu0 %v634
  %1324 = vmatprep.subr.bf16.mxu0 %v643
  %1325 = vmatpush1.bf16.msra.mxu0 %v642
  %1326 = vmatprep.subr.bf16.mxu0 %v651
  %1327 = vmatpush1.bf16.msra.mxu0 %v650
  %1328 = vmatprep.subr.bf16.mxu0 %v659
  %1329 = vmatpush1.bf16.msra.mxu0 %v658
  %1330 = vmatprep.subr.bf16.mxu0 %v667
  %1331 = vmatpush1.bf16.msra.mxu0 %v666
  %1332 = vmatprep.subr.bf16.mxu0 %v675
  %1333 = vmatpush1.bf16.msra.mxu0 %v674
  %1334 = vmatprep.subr.bf16.mxu0 %v683
  %1335 = vmatpush1.bf16.msra.mxu0 %v682
  %1336 = vmatprep.subr.bf16.mxu0 %v691
  %1337 = vmatpush1.bf16.msra.mxu0 %v690
  %1338 = vmatprep.mubr.bf16.mxu0 %v1305
  %1339 = vmatmul.mubr.bf16.gmra.mrb[0].mxu0 %v1304
  %v1340 = vpop.f32.mrb[0].mxu0
  %v1341 = vadd.f32 0.0, %v1340
  %v1342 = vpop.f32.mrb[0].mxu0
  %v1343 = vadd.f32 0.0, %v1342
  %v1344 = vpop.f32.mrb[0].mxu0
  %v1345 = vpop.f32.mrb[0].mxu0
  %1346 = vdwg.mxu0
  %1347 = vmatprep.subr.bf16.mxu0 %v573
  %1348 = vmatpush1.bf16.msra.mxu0 %v572
  %1349 = vmatprep.subr.bf16.mxu0 %v581
  %1350 = vmatpush1.bf16.msra.mxu0 %v580
  %1351 = vmatprep.subr.bf16.mxu0 %v589
  %1352 = vmatpush1.bf16.msra.mxu0 %v588
  %1353 = vmatprep.subr.bf16.mxu0 %v597
  %1354 = vmatpush1.bf16.msra.mxu0 %v596
  %1355 = vmatprep.subr.bf16.mxu0 %v605
  %1356 = vmatpush1.bf16.msra.mxu0 %v604
  %1357 = vmatprep.subr.bf16.mxu0 %v613
  %1358 = vmatpush1.bf16.msra.mxu0 %v612
  %1359 = vmatprep.subr.bf16.mxu0 %v621
  %1360 = vmatpush1.bf16.msra.mxu0 %v620
  %1361 = vmatprep.subr.bf16.mxu0 %v629
  %1362 = vmatpush1.bf16.msra.mxu0 %v628
  %1363 = vmatprep.subr.bf16.mxu0 %v637
  %1364 = vmatpush1.bf16.msra.mxu0 %v636
  %1365 = vmatprep.subr.bf16.mxu0 %v645
  %1366 = vmatpush1.bf16.msra.mxu0 %v644
  %1367 = vmatprep.subr.bf16.mxu0 %v653
  %1368 = vmatpush1.bf16.msra.mxu0 %v652
  %1369 = vmatprep.subr.bf16.mxu0 %v661
  %1370 = vmatpush1.bf16.msra.mxu0 %v660
  %1371 = vmatprep.subr.bf16.mxu0 %v669
  %1372 = vmatpush1.bf16.msra.mxu0 %v668
  %1373 = vmatprep.subr.bf16.mxu0 %v677
  %1374 = vmatpush1.bf16.msra.mxu0 %v676
  %1375 = vmatprep.subr.bf16.mxu0 %v685
  %1376 = vmatpush1.bf16.msra.mxu0 %v684
  %1377 = vmatprep.subr.bf16.mxu0 %v693
  %1378 = vmatpush1.bf16.msra.mxu0 %v692
  %1379 = vmatprep.mubr.bf16.mxu0 %v1305
  %1380 = vmatmul.mubr.bf16.gmra.mrb[0].mxu0 %v1304
  %v1381 = vpop.f32.mrb[0].mxu0
  %v1382 = vadd.f32 0.0, %v1381
  %v1383 = vpop.f32.mrb[0].mxu0
  %v1384 = vadd.f32 0.0, %v1383
  %v1385 = vpop.f32.mrb[0].mxu0
  %v1386 = vpop.f32.mrb[0].mxu0
  %1387 = vdwg.mxu0
  %1388 = vmatprep.subr.bf16.mxu0 %v575
  %1389 = vmatpush1.bf16.msra.mxu0 %v574
  %1390 = vmatprep.subr.bf16.mxu0 %v583
  %1391 = vmatpush1.bf16.msra.mxu0 %v582
  %1392 = vmatprep.subr.bf16.mxu0 %v591
  %1393 = vmatpush1.bf16.msra.mxu0 %v590
  %1394 = vmatprep.subr.bf16.mxu0 %v599
  %1395 = vmatpush1.bf16.msra.mxu0 %v598
  %1396 = vmatprep.subr.bf16.mxu0 %v607
  %1397 = vmatpush1.bf16.msra.mxu0 %v606
  %1398 = vmatprep.subr.bf16.mxu0 %v615
  %1399 = vmatpush1.bf16.msra.mxu0 %v614
  %1400 = vmatprep.subr.bf16.mxu0 %v623
  %1401 = vmatpush1.bf16.msra.mxu0 %v622
  %1402 = vmatprep.subr.bf16.mxu0 %v631
  %1403 = vmatpush1.bf16.msra.mxu0 %v630
  %1404 = vmatprep.subr.bf16.mxu0 %v639
  %1405 = vmatpush1.bf16.msra.mxu0 %v638
  %1406 = vmatprep.subr.bf16.mxu0 %v647
  %1407 = vmatpush1.bf16.msra.mxu0 %v646
  %1408 = vmatprep.subr.bf16.mxu0 %v655
  %1409 = vmatpush1.bf16.msra.mxu0 %v654
  %1410 = vmatprep.subr.bf16.mxu0 %v663
  %1411 = vmatpush1.bf16.msra.mxu0 %v662
  %1412 = vmatprep.subr.bf16.mxu0 %v671
  %1413 = vmatpush1.bf16.msra.mxu0 %v670
  %1414 = vmatprep.subr.bf16.mxu0 %v679
  %1415 = vmatpush1.bf16.msra.mxu0 %v678
  %1416 = vmatprep.subr.bf16.mxu0 %v687
  %1417 = vmatpush1.bf16.msra.mxu0 %v686
  %1418 = vmatprep.subr.bf16.mxu0 %v695
  %1419 = vmatpush1.bf16.msra.mxu0 %v694
  %1420 = vmatprep.mubr.bf16.mxu0 %v1305
  %1421 = vmatmul.mubr.bf16.gmra.mrb[0].mxu0 %v1304
  %v1422 = vpop.f32.mrb[0].mxu0
  %v1423 = vadd.f32 0.0, %v1422
  %v1424 = vpop.f32.mrb[0].mxu0
  %v1425 = vadd.f32 0.0, %v1424
  %v1426 = vpop.f32.mrb[0].mxu0
  %v1427 = vpop.f32.mrb[0].mxu0
  %1428 = vdwg.mxu0
  %1429 = vmatprep.subr.bf16.mxu0 %v577
  %1430 = vmatpush1.bf16.msra.mxu0 %v576
  %1431 = vmatprep.subr.bf16.mxu0 %v585
  %1432 = vmatpush1.bf16.msra.mxu0 %v584
  %1433 = vmatprep.subr.bf16.mxu0 %v593
  %1434 = vmatpush1.bf16.msra.mxu0 %v592
  %1435 = vmatprep.subr.bf16.mxu0 %v601
  %1436 = vmatpush1.bf16.msra.mxu0 %v600
  %1437 = vmatprep.subr.bf16.mxu0 %v609
  %1438 = vmatpush1.bf16.msra.mxu0 %v608
  %1439 = vmatprep.subr.bf16.mxu0 %v617
  %1440 = vmatpush1.bf16.msra.mxu0 %v616
  %1441 = vmatprep.subr.bf16.mxu0 %v625
  %1442 = vmatpush1.bf16.msra.mxu0 %v624
  %1443 = vmatprep.subr.bf16.mxu0 %v633
  %1444 = vmatpush1.bf16.msra.mxu0 %v632
  %1445 = vmatprep.subr.bf16.mxu0 %v641
  %1446 = vmatpush1.bf16.msra.mxu0 %v640
  %1447 = vmatprep.subr.bf16.mxu0 %v649
  %1448 = vmatpush1.bf16.msra.mxu0 %v648
  %1449 = vmatprep.subr.bf16.mxu0 %v657
  %1450 = vmatpush1.bf16.msra.mxu0 %v656
  %1451 = vmatprep.subr.bf16.mxu0 %v665
  %1452 = vmatpush1.bf16.msra.mxu0 %v664
  %1453 = vmatprep.subr.bf16.mxu0 %v673
  %1454 = vmatpush1.bf16.msra.mxu0 %v672
  %1455 = vmatprep.subr.bf16.mxu0 %v681
  %1456 = vmatpush1.bf16.msra.mxu0 %v680
  %1457 = vmatprep.subr.bf16.mxu0 %v689
  %1458 = vmatpush1.bf16.msra.mxu0 %v688
  %1459 = vmatprep.subr.bf16.mxu0 %v697
  %1460 = vmatpush1.bf16.msra.mxu0 %v696
  %1461 = vmatprep.mubr.bf16.mxu0 %v1305
  %1462 = vmatmul.mubr.bf16.gmra.mrb[0].mxu0 %v1304
  %v1463 = vpop.f32.mrb[0].mxu0
  %v1464 = vadd.f32 0.0, %v1463
  %v1465 = vpop.f32.mrb[0].mxu0
  %v1466 = vadd.f32 0.0, %v1465
  %v1467 = vpop.f32.mrb[0].mxu0
  %v1468 = vpop.f32.mrb[0].mxu0
  %1469 = vdwg.mxu0
  %v1470 = vadd.f32 %v1341, %v995
  %v1471 = vadd.f32 %v1343, %v999
  %v1472 = vadd.f32 %v1382, %v1003
  %v1473 = vadd.f32 %v1384, %v1007
  %v1474 = vxor.u32 %v1470, 2147483648
  %v1475 = vxor.u32 %v1471, 2147483648
  %v1476 = vxor.u32 %v1472, 2147483648
  %v1477 = vmul.f32 %v1474, 1.442695
  %v1478 = vpow.pop %v1477
  %v1479 = vmul.f32 %v1475, 1.442695
  %v1480 = vpow.pop %v1479
  %v1481 = vmul.f32 %v1476, 1.442695
  %v1482 = vpow.pop %v1481
  %v1483 = vadd.f32 %v1478, 1.0
  %v1484 = vadd.f32 %v1480, 1.0
  %v1485 = vadd.f32 %v1482, 1.0
  %v1486 = vrcp.pop %v1483
  %v1487 = vmul.f32 1.0, %v1486
  %v1488 = vrcp.pop %v1484
  %v1489 = vmul.f32 1.0, %v1488
  %v1490 = vrcp.pop %v1485
  %v1491 = vmul.f32 1.0, %v1490
  %v1492 = vtanh.pop %v1473
  %v1493 = vmul.f32 %v1489, %v1266
  %v1494 = vmul.f32 %v1487, %v1492
  %v1495 = vadd.f32 %v1493, %v1494
  %v1496 = vtanh.pop %v1495
  %v1497 = vmul.f32 %v1491, %v1496
  %s1498 = smul.u32 3, 4
  %s1499 = smul.addr %s1498, 8
  %s1500 = scalar_lea.vmem %s0, %s1499
  %v1501 = vld [vmem:[%s1500] sm:$0xff]
  %v1502 = vld [vmem:[%s1500 + $0x8] sm:$0xff]
  %v1503 = vld [vmem:[%s1500 + $0x10] sm:$0xff]
  %v1504 = vld [vmem:[%s1500 + $0x18] sm:$0xff]
  %v1505 = vadd.f32 %v1501, %v1423
  %v1506 = vadd.f32 %v1502, %v1425
  %v1507 = vadd.f32 %v1503, %v1464
  %v1508 = vadd.f32 %v1504, %v1466
  %v1509 = vxor.u32 %v1505, 2147483648
  %v1510 = vxor.u32 %v1506, 2147483648
  %v1511 = vxor.u32 %v1507, 2147483648
  %v1512 = vmul.f32 %v1509, 1.442695
  %v1513 = vpow.pop %v1512
  %v1514 = vmul.f32 %v1510, 1.442695
  %v1515 = vpow.pop %v1514
  %v1516 = vmul.f32 %v1511, 1.442695
  %v1517 = vpow.pop %v1516
  %v1518 = vadd.f32 %v1513, 1.0
  %v1519 = vadd.f32 %v1515, 1.0
  %v1520 = vadd.f32 %v1517, 1.0
  %v1521 = vrcp.pop %v1518
  %v1522 = vmul.f32 1.0, %v1521
  %v1523 = vrcp.pop %v1519
  %v1524 = vmul.f32 1.0, %v1523
  %v1525 = vrcp.pop %v1520
  %v1526 = vmul.f32 1.0, %v1525
  %v1527 = vtanh.pop %v1508
  %v1528 = vmul.f32 %v1524, %v1301
  %v1529 = vmul.f32 %v1522, %v1527
  %v1530 = vadd.f32 %v1528, %v1529
  %v1531 = vtanh.pop %v1530
  %v1532 = vmul.f32 %v1526, %v1531
  %v1533 = vpack.c.bf16 %v1532, %v1532
  %v1534 = vpack.c.bf16 %v1497, %v1497
  %1535 = vmatprep.subr.bf16.mxu0 %v571
  %1536 = vmatpush1.bf16.msra.mxu0 %v570
  %1537 = vmatprep.subr.bf16.mxu0 %v579
  %1538 = vmatpush1.bf16.msra.mxu0 %v578
  %1539 = vmatprep.subr.bf16.mxu0 %v587
  %1540 = vmatpush1.bf16.msra.mxu0 %v586
  %1541 = vmatprep.subr.bf16.mxu0 %v595
  %1542 = vmatpush1.bf16.msra.mxu0 %v594
  %1543 = vmatprep.subr.bf16.mxu0 %v603
  %1544 = vmatpush1.bf16.msra.mxu0 %v602
  %1545 = vmatprep.subr.bf16.mxu0 %v611
  %1546 = vmatpush1.bf16.msra.mxu0 %v610
  %1547 = vmatprep.subr.bf16.mxu0 %v619
  %1548 = vmatpush1.bf16.msra.mxu0 %v618
  %1549 = vmatprep.subr.bf16.mxu0 %v627
  %1550 = vmatpush1.bf16.msra.mxu0 %v626
  %1551 = vmatprep.subr.bf16.mxu0 %v635
  %1552 = vmatpush1.bf16.msra.mxu0 %v634
  %1553 = vmatprep.subr.bf16.mxu0 %v643
  %1554 = vmatpush1.bf16.msra.mxu0 %v642
  %1555 = vmatprep.subr.bf16.mxu0 %v651
  %1556 = vmatpush1.bf16.msra.mxu0 %v650
  %1557 = vmatprep.subr.bf16.mxu0 %v659
  %1558 = vmatpush1.bf16.msra.mxu0 %v658
  %1559 = vmatprep.subr.bf16.mxu0 %v667
  %1560 = vmatpush1.bf16.msra.mxu0 %v666
  %1561 = vmatprep.subr.bf16.mxu0 %v675
  %1562 = vmatpush1.bf16.msra.mxu0 %v674
  %1563 = vmatprep.subr.bf16.mxu0 %v683
  %1564 = vmatpush1.bf16.msra.mxu0 %v682
  %1565 = vmatprep.subr.bf16.mxu0 %v691
  %1566 = vmatpush1.bf16.msra.mxu0 %v690
  %1567 = vmatprep.mubr.bf16.mxu0 %v1534
  %1568 = vmatmul.mubr.bf16.gmra.mrb[0].mxu0 %v1533
  %v1569 = vpop.f32.mrb[0].mxu0
  %v1570 = vadd.f32 0.0, %v1569
  %v1571 = vpop.f32.mrb[0].mxu0
  %v1572 = vadd.f32 0.0, %v1571
  %v1573 = vpop.f32.mrb[0].mxu0
  %v1574 = vpop.f32.mrb[0].mxu0
  %1575 = vdwg.mxu0
  %1576 = vmatprep.subr.bf16.mxu0 %v573
  %1577 = vmatpush1.bf16.msra.mxu0 %v572
  %1578 = vmatprep.subr.bf16.mxu0 %v581
  %1579 = vmatpush1.bf16.msra.mxu0 %v580
  %1580 = vmatprep.subr.bf16.mxu0 %v589
  %1581 = vmatpush1.bf16.msra.mxu0 %v588
  %1582 = vmatprep.subr.bf16.mxu0 %v597
  %1583 = vmatpush1.bf16.msra.mxu0 %v596
  %1584 = vmatprep.subr.bf16.mxu0 %v605
  %1585 = vmatpush1.bf16.msra.mxu0 %v604
  %1586 = vmatprep.subr.bf16.mxu0 %v613
  %1587 = vmatpush1.bf16.msra.mxu0 %v612
  %1588 = vmatprep.subr.bf16.mxu0 %v621
  %1589 = vmatpush1.bf16.msra.mxu0 %v620
  %1590 = vmatprep.subr.bf16.mxu0 %v629
  %1591 = vmatpush1.bf16.msra.mxu0 %v628
  %1592 = vmatprep.subr.bf16.mxu0 %v637
  %1593 = vmatpush1.bf16.msra.mxu0 %v636
  %1594 = vmatprep.subr.bf16.mxu0 %v645
  %1595 = vmatpush1.bf16.msra.mxu0 %v644
  %1596 = vmatprep.subr.bf16.mxu0 %v653
  %1597 = vmatpush1.bf16.msra.mxu0 %v652
  %1598 = vmatprep.subr.bf16.mxu0 %v661
  %1599 = vmatpush1.bf16.msra.mxu0 %v660
  %1600 = vmatprep.subr.bf16.mxu0 %v669
  %1601 = vmatpush1.bf16.msra.mxu0 %v668
  %1602 = vmatprep.subr.bf16.mxu0 %v677
  %1603 = vmatpush1.bf16.msra.mxu0 %v676
  %1604 = vmatprep.subr.bf16.mxu0 %v685
  %1605 = vmatpush1.bf16.msra.mxu0 %v684
  %1606 = vmatprep.subr.bf16.mxu0 %v693
  %1607 = vmatpush1.bf16.msra.mxu0 %v692
  %1608 = vmatprep.mubr.bf16.mxu0 %v1534
  %1609 = vmatmul.mubr.bf16.gmra.mrb[0].mxu0 %v1533
  %v1610 = vpop.f32.mrb[0].mxu0
  %v1611 = vadd.f32 0.0, %v1610
  %v1612 = vpop.f32.mrb[0].mxu0
  %v1613 = vadd.f32 0.0, %v1612
  %v1614 = vpop.f32.mrb[0].mxu0
  %v1615 = vpop.f32.mrb[0].mxu0
  %1616 = vdwg.mxu0
  %1617 = vmatprep.subr.bf16.mxu0 %v575
  %1618 = vmatpush1.bf16.msra.mxu0 %v574
  %1619 = vmatprep.subr.bf16.mxu0 %v583
  %1620 = vmatpush1.bf16.msra.mxu0 %v582
  %1621 = vmatprep.subr.bf16.mxu0 %v591
  %1622 = vmatpush1.bf16.msra.mxu0 %v590
  %1623 = vmatprep.subr.bf16.mxu0 %v599
  %1624 = vmatpush1.bf16.msra.mxu0 %v598
  %1625 = vmatprep.subr.bf16.mxu0 %v607
  %1626 = vmatpush1.bf16.msra.mxu0 %v606
  %1627 = vmatprep.subr.bf16.mxu0 %v615
  %1628 = vmatpush1.bf16.msra.mxu0 %v614
  %1629 = vmatprep.subr.bf16.mxu0 %v623
  %1630 = vmatpush1.bf16.msra.mxu0 %v622
  %1631 = vmatprep.subr.bf16.mxu0 %v631
  %1632 = vmatpush1.bf16.msra.mxu0 %v630
  %1633 = vmatprep.subr.bf16.mxu0 %v639
  %1634 = vmatpush1.bf16.msra.mxu0 %v638
  %1635 = vmatprep.subr.bf16.mxu0 %v647
  %1636 = vmatpush1.bf16.msra.mxu0 %v646
  %1637 = vmatprep.subr.bf16.mxu0 %v655
  %1638 = vmatpush1.bf16.msra.mxu0 %v654
  %1639 = vmatprep.subr.bf16.mxu0 %v663
  %1640 = vmatpush1.bf16.msra.mxu0 %v662
  %1641 = vmatprep.subr.bf16.mxu0 %v671
  %1642 = vmatpush1.bf16.msra.mxu0 %v670
  %1643 = vmatprep.subr.bf16.mxu0 %v679
  %1644 = vmatpush1.bf16.msra.mxu0 %v678
  %1645 = vmatprep.subr.bf16.mxu0 %v687
  %1646 = vmatpush1.bf16.msra.mxu0 %v686
  %1647 = vmatprep.subr.bf16.mxu0 %v695
  %1648 = vmatpush1.bf16.msra.mxu0 %v694
  %1649 = vmatprep.mubr.bf16.mxu0 %v1534
  %1650 = vmatmul.mubr.bf16.gmra.mrb[0].mxu0 %v1533
  %v1651 = vpop.f32.mrb[0].mxu0
  %v1652 = vadd.f32 0.0, %v1651
  %v1653 = vpop.f32.mrb[0].mxu0
  %v1654 = vadd.f32 0.0, %v1653
  %v1655 = vpop.f32.mrb[0].mxu0
  %v1656 = vpop.f32.mrb[0].mxu0
  %1657 = vdwg.mxu0
  %1658 = vmatprep.subr.bf16.mxu0 %v577
  %1659 = vmatpush1.bf16.msra.mxu0 %v576
  %1660 = vmatprep.subr.bf16.mxu0 %v585
  %1661 = vmatpush1.bf16.msra.mxu0 %v584
  %1662 = vmatprep.subr.bf16.mxu0 %v593
  %1663 = vmatpush1.bf16.msra.mxu0 %v592
  %1664 = vmatprep.subr.bf16.mxu0 %v601
  %1665 = vmatpush1.bf16.msra.mxu0 %v600
  %1666 = vmatprep.subr.bf16.mxu0 %v609
  %1667 = vmatpush1.bf16.msra.mxu0 %v608
  %1668 = vmatprep.subr.bf16.mxu0 %v617
  %1669 = vmatpush1.bf16.msra.mxu0 %v616
  %1670 = vmatprep.subr.bf16.mxu0 %v625
  %1671 = vmatpush1.bf16.msra.mxu0 %v624
  %1672 = vmatprep.subr.bf16.mxu0 %v633
  %1673 = vmatpush1.bf16.msra.mxu0 %v632
  %1674 = vmatprep.subr.bf16.mxu0 %v641
  %1675 = vmatpush1.bf16.msra.mxu0 %v640
  %1676 = vmatprep.subr.bf16.mxu0 %v649
  %1677 = vmatpush1.bf16.msra.mxu0 %v648
  %1678 = vmatprep.subr.bf16.mxu0 %v657
  %1679 = vmatpush1.bf16.msra.mxu0 %v656
  %1680 = vmatprep.subr.bf16.mxu0 %v665
  %1681 = vmatpush1.bf16.msra.mxu0 %v664
  %1682 = vmatprep.subr.bf16.mxu0 %v673
  %1683 = vmatpush1.bf16.msra.mxu0 %v672
  %1684 = vmatprep.subr.bf16.mxu0 %v681
  %1685 = vmatpush1.bf16.msra.mxu0 %v680
  %1686 = vmatprep.subr.bf16.mxu0 %v689
  %1687 = vmatpush1.bf16.msra.mxu0 %v688
  %1688 = vmatprep.subr.bf16.mxu0 %v697
  %1689 = vmatpush1.bf16.msra.mxu0 %v696
  %1690 = vmatprep.mubr.bf16.mxu0 %v1534
  %1691 = vmatmul.mubr.bf16.gmra.mrb[0].mxu0 %v1533
  %v1692 = vpop.f32.mrb[0].mxu0
  %v1693 = vadd.f32 0.0, %v1692
  %v1694 = vpop.f32.mrb[0].mxu0
  %v1695 = vadd.f32 0.0, %v1694
  %v1696 = vpop.f32.mrb[0].mxu0
  %v1697 = vpop.f32.mrb[0].mxu0
  %1698 = vdwg.mxu0
  %v1699 = vadd.f32 %v1570, %v995
  %v1700 = vadd.f32 %v1572, %v999
  %v1701 = vadd.f32 %v1611, %v1003
  %v1702 = vadd.f32 %v1613, %v1007
  %v1703 = vxor.u32 %v1699, 2147483648
  %v1704 = vxor.u32 %v1700, 2147483648
  %v1705 = vxor.u32 %v1701, 2147483648
  %v1706 = vmul.f32 %v1703, 1.442695
  %v1707 = vpow.pop %v1706
  %v1708 = vmul.f32 %v1704, 1.442695
  %v1709 = vpow.pop %v1708
  %v1710 = vmul.f32 %v1705, 1.442695
  %v1711 = vpow.pop %v1710
  %v1712 = vadd.f32 %v1707, 1.0
  %v1713 = vadd.f32 %v1709, 1.0
  %v1714 = vadd.f32 %v1711, 1.0
  %v1715 = vrcp.pop %v1712
  %v1716 = vmul.f32 1.0, %v1715
  %v1717 = vrcp.pop %v1713
  %v1718 = vmul.f32 1.0, %v1717
  %v1719 = vrcp.pop %v1714
  %v1720 = vmul.f32 1.0, %v1719
  %v1721 = vtanh.pop %v1702
  %v1722 = vmul.f32 %v1718, %v1495
  %v1723 = vmul.f32 %v1716, %v1721
  %v1724 = vadd.f32 %v1722, %v1723
  %v1725 = vtanh.pop %v1724
  %v1726 = vmul.f32 %v1720, %v1725
  %s1727 = smul.u32 4, 4
  %s1728 = smul.addr %s1727, 8
  %s1729 = scalar_lea.vmem %s0, %s1728
  %v1730 = vld [vmem:[%s1729] sm:$0xff]
  %v1731 = vld [vmem:[%s1729 + $0x8] sm:$0xff]
  %v1732 = vld [vmem:[%s1729 + $0x10] sm:$0xff]
  %v1733 = vld [vmem:[%s1729 + $0x18] sm:$0xff]
  %v1734 = vadd.f32 %v1730, %v1652
  %v1735 = vadd.f32 %v1731, %v1654
  %v1736 = vadd.f32 %v1732, %v1693
  %v1737 = vadd.f32 %v1733, %v1695
  %v1738 = vxor.u32 %v1734, 2147483648
  %v1739 = vxor.u32 %v1735, 2147483648
  %v1740 = vxor.u32 %v1736, 2147483648
  %v1741 = vmul.f32 %v1738, 1.442695
  %v1742 = vpow.pop %v1741
  %v1743 = vmul.f32 %v1739, 1.442695
  %v1744 = vpow.pop %v1743
  %v1745 = vmul.f32 %v1740, 1.442695
  %v1746 = vpow.pop %v1745
  %v1747 = vadd.f32 %v1742, 1.0
  %v1748 = vadd.f32 %v1744, 1.0
  %v1749 = vadd.f32 %v1746, 1.0
  %v1750 = vrcp.pop %v1747
  %v1751 = vmul.f32 1.0, %v1750
  %v1752 = vrcp.pop %v1748
  %v1753 = vmul.f32 1.0, %v1752
  %v1754 = vrcp.pop %v1749
  %v1755 = vmul.f32 1.0, %v1754
  %v1756 = vtanh.pop %v1737
  %v1757 = vmul.f32 %v1753, %v1530
  %v1758 = vmul.f32 %v1751, %v1756
  %v1759 = vadd.f32 %v1757, %v1758
  %v1760 = vtanh.pop %v1759
  %v1761 = vmul.f32 %v1755, %v1760
  %v1762 = vpack.c.bf16 %v1761, %v1761
  %v1763 = vpack.c.bf16 %v1726, %v1726
  %1764 = vmatprep.subr.bf16.mxu0 %v571
  %1765 = vmatpush1.bf16.msra.mxu0 %v570
  %1766 = vmatprep.subr.bf16.mxu0 %v579
  %1767 = vmatpush1.bf16.msra.mxu0 %v578
  %1768 = vmatprep.subr.bf16.mxu0 %v587
  %1769 = vmatpush1.bf16.msra.mxu0 %v586
  %1770 = vmatprep.subr.bf16.mxu0 %v595
  %1771 = vmatpush1.bf16.msra.mxu0 %v594
  %1772 = vmatprep.subr.bf16.mxu0 %v603
  %1773 = vmatpush1.bf16.msra.mxu0 %v602
  %1774 = vmatprep.subr.bf16.mxu0 %v611
  %1775 = vmatpush1.bf16.msra.mxu0 %v610
  %1776 = vmatprep.subr.bf16.mxu0 %v619
  %1777 = vmatpush1.bf16.msra.mxu0 %v618
  %1778 = vmatprep.subr.bf16.mxu0 %v627
  %1779 = vmatpush1.bf16.msra.mxu0 %v626
  %1780 = vmatprep.subr.bf16.mxu0 %v635
  %1781 = vmatpush1.bf16.msra.mxu0 %v634
  %1782 = vmatprep.subr.bf16.mxu0 %v643
  %1783 = vmatpush1.bf16.msra.mxu0 %v642
  %1784 = vmatprep.subr.bf16.mxu0 %v651
  %1785 = vmatpush1.bf16.msra.mxu0 %v650
  %1786 = vmatprep.subr.bf16.mxu0 %v659
  %1787 = vmatpush1.bf16.msra.mxu0 %v658
  %1788 = vmatprep.subr.bf16.mxu0 %v667
  %1789 = vmatpush1.bf16.msra.mxu0 %v666
  %1790 = vmatprep.subr.bf16.mxu0 %v675
  %1791 = vmatpush1.bf16.msra.mxu0 %v674
  %1792 = vmatprep.subr.bf16.mxu0 %v683
  %1793 = vmatpush1.bf16.msra.mxu0 %v682
  %1794 = vmatprep.subr.bf16.mxu0 %v691
  %1795 = vmatpush1.bf16.msra.mxu0 %v690
  %1796 = vmatprep.mubr.bf16.mxu0 %v1763
  %1797 = vmatmul.mubr.bf16.gmra.mrb[0].mxu0 %v1762
  %v1798 = vpop.f32.mrb[0].mxu0
  %v1799 = vadd.f32 0.0, %v1798
  %v1800 = vpop.f32.mrb[0].mxu0
  %v1801 = vadd.f32 0.0, %v1800
  %v1802 = vpop.f32.mrb[0].mxu0
  %v1803 = vpop.f32.mrb[0].mxu0
  %1804 = vdwg.mxu0
  %1805 = vmatprep.subr.bf16.mxu0 %v573
  %1806 = vmatpush1.bf16.msra.mxu0 %v572
  %1807 = vmatprep.subr.bf16.mxu0 %v581
  %1808 = vmatpush1.bf16.msra.mxu0 %v580
  %1809 = vmatprep.subr.bf16.mxu0 %v589
  %1810 = vmatpush1.bf16.msra.mxu0 %v588
  %1811 = vmatprep.subr.bf16.mxu0 %v597
  %1812 = vmatpush1.bf16.msra.mxu0 %v596
  %1813 = vmatprep.subr.bf16.mxu0 %v605
  %1814 = vmatpush1.bf16.msra.mxu0 %v604
  %1815 = vmatprep.subr.bf16.mxu0 %v613
  %1816 = vmatpush1.bf16.msra.mxu0 %v612
  %1817 = vmatprep.subr.bf16.mxu0 %v621
  %1818 = vmatpush1.bf16.msra.mxu0 %v620
  %1819 = vmatprep.subr.bf16.mxu0 %v629
  %1820 = vmatpush1.bf16.msra.mxu0 %v628
  %1821 = vmatprep.subr.bf16.mxu0 %v637
  %1822 = vmatpush1.bf16.msra.mxu0 %v636
  %1823 = vmatprep.subr.bf16.mxu0 %v645
  %1824 = vmatpush1.bf16.msra.mxu0 %v644
  %1825 = vmatprep.subr.bf16.mxu0 %v653
  %1826 = vmatpush1.bf16.msra.mxu0 %v652
  %1827 = vmatprep.subr.bf16.mxu0 %v661
  %1828 = vmatpush1.bf16.msra.mxu0 %v660
  %1829 = vmatprep.subr.bf16.mxu0 %v669
  %1830 = vmatpush1.bf16.msra.mxu0 %v668
  %1831 = vmatprep.subr.bf16.mxu0 %v677
  %1832 = vmatpush1.bf16.msra.mxu0 %v676
  %1833 = vmatprep.subr.bf16.mxu0 %v685
  %1834 = vmatpush1.bf16.msra.mxu0 %v684
  %1835 = vmatprep.subr.bf16.mxu0 %v693
  %1836 = vmatpush1.bf16.msra.mxu0 %v692
  %1837 = vmatprep.mubr.bf16.mxu0 %v1763
  %1838 = vmatmul.mubr.bf16.gmra.mrb[0].mxu0 %v1762
  %v1839 = vpop.f32.mrb[0].mxu0
  %v1840 = vadd.f32 0.0, %v1839
  %v1841 = vpop.f32.mrb[0].mxu0
  %v1842 = vadd.f32 0.0, %v1841
  %v1843 = vpop.f32.mrb[0].mxu0
  %v1844 = vpop.f32.mrb[0].mxu0
  %1845 = vdwg.mxu0
  %1846 = vmatprep.subr.bf16.mxu0 %v575
  %1847 = vmatpush1.bf16.msra.mxu0 %v574
  %1848 = vmatprep.subr.bf16.mxu0 %v583
  %1849 = vmatpush1.bf16.msra.mxu0 %v582
  %1850 = vmatprep.subr.bf16.mxu0 %v591
  %1851 = vmatpush1.bf16.msra.mxu0 %v590
  %1852 = vmatprep.subr.bf16.mxu0 %v599
  %1853 = vmatpush1.bf16.msra.mxu0 %v598
  %1854 = vmatprep.subr.bf16.mxu0 %v607
  %1855 = vmatpush1.bf16.msra.mxu0 %v606
  %1856 = vmatprep.subr.bf16.mxu0 %v615
  %1857 = vmatpush1.bf16.msra.mxu0 %v614
  %1858 = vmatprep.subr.bf16.mxu0 %v623
  %1859 = vmatpush1.bf16.msra.mxu0 %v622
  %1860 = vmatprep.subr.bf16.mxu0 %v631
  %1861 = vmatpush1.bf16.msra.mxu0 %v630
  %1862 = vmatprep.subr.bf16.mxu0 %v639
  %1863 = vmatpush1.bf16.msra.mxu0 %v638
  %1864 = vmatprep.subr.bf16.mxu0 %v647
  %1865 = vmatpush1.bf16.msra.mxu0 %v646
  %1866 = vmatprep.subr.bf16.mxu0 %v655
  %1867 = vmatpush1.bf16.msra.mxu0 %v654
  %1868 = vmatprep.subr.bf16.mxu0 %v663
  %1869 = vmatpush1.bf16.msra.mxu0 %v662
  %1870 = vmatprep.subr.bf16.mxu0 %v671
  %1871 = vmatpush1.bf16.msra.mxu0 %v670
  %1872 = vmatprep.subr.bf16.mxu0 %v679
  %1873 = vmatpush1.bf16.msra.mxu0 %v678
  %1874 = vmatprep.subr.bf16.mxu0 %v687
  %1875 = vmatpush1.bf16.msra.mxu0 %v686
  %1876 = vmatprep.subr.bf16.mxu0 %v695
  %1877 = vmatpush1.bf16.msra.mxu0 %v694
  %1878 = vmatprep.mubr.bf16.mxu0 %v1763
  %1879 = vmatmul.mubr.bf16.gmra.mrb[0].mxu0 %v1762
  %v1880 = vpop.f32.mrb[0].mxu0
  %v1881 = vadd.f32 0.0, %v1880
  %v1882 = vpop.f32.mrb[0].mxu0
  %v1883 = vadd.f32 0.0, %v1882
  %v1884 = vpop.f32.mrb[0].mxu0
  %v1885 = vpop.f32.mrb[0].mxu0
  %1886 = vdwg.mxu0
  %1887 = vmatprep.subr.bf16.mxu0 %v577
  %1888 = vmatpush1.bf16.msra.mxu0 %v576
  %1889 = vmatprep.subr.bf16.mxu0 %v585
  %1890 = vmatpush1.bf16.msra.mxu0 %v584
  %1891 = vmatprep.subr.bf16.mxu0 %v593
  %1892 = vmatpush1.bf16.msra.mxu0 %v592
  %1893 = vmatprep.subr.bf16.mxu0 %v601
  %1894 = vmatpush1.bf16.msra.mxu0 %v600
  %1895 = vmatprep.subr.bf16.mxu0 %v609
  %1896 = vmatpush1.bf16.msra.mxu0 %v608
  %1897 = vmatprep.subr.bf16.mxu0 %v617
  %1898 = vmatpush1.bf16.msra.mxu0 %v616
  %1899 = vmatprep.subr.bf16.mxu0 %v625
  %1900 = vmatpush1.bf16.msra.mxu0 %v624
  %1901 = vmatprep.subr.bf16.mxu0 %v633
  %1902 = vmatpush1.bf16.msra.mxu0 %v632
  %1903 = vmatprep.subr.bf16.mxu0 %v641
  %1904 = vmatpush1.bf16.msra.mxu0 %v640
  %1905 = vmatprep.subr.bf16.mxu0 %v649
  %1906 = vmatpush1.bf16.msra.mxu0 %v648
  %1907 = vmatprep.subr.bf16.mxu0 %v657
  %1908 = vmatpush1.bf16.msra.mxu0 %v656
  %1909 = vmatprep.subr.bf16.mxu0 %v665
  %1910 = vmatpush1.bf16.msra.mxu0 %v664
  %1911 = vmatprep.subr.bf16.mxu0 %v673
  %1912 = vmatpush1.bf16.msra.mxu0 %v672
  %1913 = vmatprep.subr.bf16.mxu0 %v681
  %1914 = vmatpush1.bf16.msra.mxu0 %v680
  %1915 = vmatprep.subr.bf16.mxu0 %v689
  %1916 = vmatpush1.bf16.msra.mxu0 %v688
  %1917 = vmatprep.subr.bf16.mxu0 %v697
  %1918 = vmatpush1.bf16.msra.mxu0 %v696
  %1919 = vmatprep.mubr.bf16.mxu0 %v1763
  %1920 = vmatmul.mubr.bf16.gmra.mrb[0].mxu0 %v1762
  %v1921 = vpop.f32.mrb[0].mxu0
  %v1922 = vadd.f32 0.0, %v1921
  %v1923 = vpop.f32.mrb[0].mxu0
  %v1924 = vadd.f32 0.0, %v1923
  %v1925 = vpop.f32.mrb[0].mxu0
  %v1926 = vpop.f32.mrb[0].mxu0
  %1927 = vdwg.mxu0
  %v1928 = vadd.f32 %v1799, %v995
  %v1929 = vadd.f32 %v1801, %v999
  %v1930 = vadd.f32 %v1840, %v1003
  %v1931 = vadd.f32 %v1842, %v1007
  %v1932 = vxor.u32 %v1928, 2147483648
  %v1933 = vxor.u32 %v1929, 2147483648
  %v1934 = vxor.u32 %v1930, 2147483648
  %v1935 = vmul.f32 %v1932, 1.442695
  %v1936 = vpow.pop %v1935
  %v1937 = vmul.f32 %v1933, 1.442695
  %v1938 = vpow.pop %v1937
  %v1939 = vmul.f32 %v1934, 1.442695
  %v1940 = vpow.pop %v1939
  %v1941 = vadd.f32 %v1936, 1.0
  %v1942 = vadd.f32 %v1938, 1.0
  %v1943 = vadd.f32 %v1940, 1.0
  %v1944 = vrcp.pop %v1941
  %v1945 = vmul.f32 1.0, %v1944
  %v1946 = vrcp.pop %v1942
  %v1947 = vmul.f32 1.0, %v1946
  %v1948 = vrcp.pop %v1943
  %v1949 = vmul.f32 1.0, %v1948
  %v1950 = vtanh.pop %v1931
  %v1951 = vmul.f32 %v1947, %v1724
  %v1952 = vmul.f32 %v1945, %v1950
  %v1953 = vadd.f32 %v1951, %v1952
  %v1954 = vtanh.pop %v1953
  %v1955 = vmul.f32 %v1949, %v1954
  %s1956 = smul.u32 5, 4
  %s1957 = smul.addr %s1956, 8
  %s1958 = scalar_lea.vmem %s0, %s1957
  %v1959 = vld [vmem:[%s1958] sm:$0xff]
  %v1960 = vld [vmem:[%s1958 + $0x8] sm:$0xff]
  %v1961 = vld [vmem:[%s1958 + $0x10] sm:$0xff]
  %v1962 = vld [vmem:[%s1958 + $0x18] sm:$0xff]
  %v1963 = vadd.f32 %v1959, %v1881
  %v1964 = vadd.f32 %v1960, %v1883
  %v1965 = vadd.f32 %v1961, %v1922
  %v1966 = vadd.f32 %v1962, %v1924
  %v1967 = vxor.u32 %v1963, 2147483648
  %v1968 = vxor.u32 %v1964, 2147483648
  %v1969 = vxor.u32 %v1965, 2147483648
  %v1970 = vmul.f32 %v1967, 1.442695
  %v1971 = vpow.pop %v1970
  %v1972 = vmul.f32 %v1968, 1.442695
  %v1973 = vpow.pop %v1972
  %v1974 = vmul.f32 %v1969, 1.442695
  %v1975 = vpow.pop %v1974
  %v1976 = vadd.f32 %v1971, 1.0
  %v1977 = vadd.f32 %v1973, 1.0
  %v1978 = vadd.f32 %v1975, 1.0
  %v1979 = vrcp.pop %v1976
  %v1980 = vmul.f32 1.0, %v1979
  %v1981 = vrcp.pop %v1977
  %v1982 = vmul.f32 1.0, %v1981
  %v1983 = vrcp.pop %v1978
  %v1984 = vmul.f32 1.0, %v1983
  %v1985 = vtanh.pop %v1966
  %v1986 = vmul.f32 %v1982, %v1759
  %v1987 = vmul.f32 %v1980, %v1985
  %v1988 = vadd.f32 %v1986, %v1987
  %v1989 = vtanh.pop %v1988
  %v1990 = vmul.f32 %v1984, %v1989
  %v1991 = vpack.c.bf16 %v1990, %v1990
  %v1992 = vpack.c.bf16 %v1955, %v1955
  %1993 = vmatprep.subr.bf16.mxu0 %v571
  %1994 = vmatpush1.bf16.msra.mxu0 %v570
  %1995 = vmatprep.subr.bf16.mxu0 %v579
  %1996 = vmatpush1.bf16.msra.mxu0 %v578
  %1997 = vmatprep.subr.bf16.mxu0 %v587
  %1998 = vmatpush1.bf16.msra.mxu0 %v586
  %1999 = vmatprep.subr.bf16.mxu0 %v595
  %2000 = vmatpush1.bf16.msra.mxu0 %v594
  %2001 = vmatprep.subr.bf16.mxu0 %v603
  %2002 = vmatpush1.bf16.msra.mxu0 %v602
  %2003 = vmatprep.subr.bf16.mxu0 %v611
  %2004 = vmatpush1.bf16.msra.mxu0 %v610
  %2005 = vmatprep.subr.bf16.mxu0 %v619
  %2006 = vmatpush1.bf16.msra.mxu0 %v618
  %2007 = vmatprep.subr.bf16.mxu0 %v627
  %2008 = vmatpush1.bf16.msra.mxu0 %v626
  %2009 = vmatprep.subr.bf16.mxu0 %v635
  %2010 = vmatpush1.bf16.msra.mxu0 %v634
  %2011 = vmatprep.subr.bf16.mxu0 %v643
  %2012 = vmatpush1.bf16.msra.mxu0 %v642
  %2013 = vmatprep.subr.bf16.mxu0 %v651
  %2014 = vmatpush1.bf16.msra.mxu0 %v650
  %2015 = vmatprep.subr.bf16.mxu0 %v659
  %2016 = vmatpush1.bf16.msra.mxu0 %v658
  %2017 = vmatprep.subr.bf16.mxu0 %v667
  %2018 = vmatpush1.bf16.msra.mxu0 %v666
  %2019 = vmatprep.subr.bf16.mxu0 %v675
  %2020 = vmatpush1.bf16.msra.mxu0 %v674
  %2021 = vmatprep.subr.bf16.mxu0 %v683
  %2022 = vmatpush1.bf16.msra.mxu0 %v682
  %2023 = vmatprep.subr.bf16.mxu0 %v691
  %2024 = vmatpush1.bf16.msra.mxu0 %v690
  %2025 = vmatprep.mubr.bf16.mxu0 %v1992
  %2026 = vmatmul.mubr.bf16.gmra.mrb[0].mxu0 %v1991
  %v2027 = vpop.f32.mrb[0].mxu0
  %v2028 = vadd.f32 0.0, %v2027
  %v2029 = vpop.f32.mrb[0].mxu0
  %v2030 = vadd.f32 0.0, %v2029
  %v2031 = vpop.f32.mrb[0].mxu0
  %v2032 = vpop.f32.mrb[0].mxu0
  %2033 = vdwg.mxu0
  %2034 = vmatprep.subr.bf16.mxu0 %v573
  %2035 = vmatpush1.bf16.msra.mxu0 %v572
  %2036 = vmatprep.subr.bf16.mxu0 %v581
  %2037 = vmatpush1.bf16.msra.mxu0 %v580
  %2038 = vmatprep.subr.bf16.mxu0 %v589
  %2039 = vmatpush1.bf16.msra.mxu0 %v588
  %2040 = vmatprep.subr.bf16.mxu0 %v597
  %2041 = vmatpush1.bf16.msra.mxu0 %v596
  %2042 = vmatprep.subr.bf16.mxu0 %v605
  %2043 = vmatpush1.bf16.msra.mxu0 %v604
  %2044 = vmatprep.subr.bf16.mxu0 %v613
  %2045 = vmatpush1.bf16.msra.mxu0 %v612
  %2046 = vmatprep.subr.bf16.mxu0 %v621
  %2047 = vmatpush1.bf16.msra.mxu0 %v620
  %2048 = vmatprep.subr.bf16.mxu0 %v629
  %2049 = vmatpush1.bf16.msra.mxu0 %v628
  %2050 = vmatprep.subr.bf16.mxu0 %v637
  %2051 = vmatpush1.bf16.msra.mxu0 %v636
  %2052 = vmatprep.subr.bf16.mxu0 %v645
  %2053 = vmatpush1.bf16.msra.mxu0 %v644
  %2054 = vmatprep.subr.bf16.mxu0 %v653
  %2055 = vmatpush1.bf16.msra.mxu0 %v652
  %2056 = vmatprep.subr.bf16.mxu0 %v661
  %2057 = vmatpush1.bf16.msra.mxu0 %v660
  %2058 = vmatprep.subr.bf16.mxu0 %v669
  %2059 = vmatpush1.bf16.msra.mxu0 %v668
  %2060 = vmatprep.subr.bf16.mxu0 %v677
  %2061 = vmatpush1.bf16.msra.mxu0 %v676
  %2062 = vmatprep.subr.bf16.mxu0 %v685
  %2063 = vmatpush1.bf16.msra.mxu0 %v684
  %2064 = vmatprep.subr.bf16.mxu0 %v693
  %2065 = vmatpush1.bf16.msra.mxu0 %v692
  %2066 = vmatprep.mubr.bf16.mxu0 %v1992
  %2067 = vmatmul.mubr.bf16.gmra.mrb[0].mxu0 %v1991
  %v2068 = vpop.f32.mrb[0].mxu0
  %v2069 = vadd.f32 0.0, %v2068
  %v2070 = vpop.f32.mrb[0].mxu0
  %v2071 = vadd.f32 0.0, %v2070
  %v2072 = vpop.f32.mrb[0].mxu0
  %v2073 = vpop.f32.mrb[0].mxu0
  %2074 = vdwg.mxu0
  %2075 = vmatprep.subr.bf16.mxu0 %v575
  %2076 = vmatpush1.bf16.msra.mxu0 %v574
  %2077 = vmatprep.subr.bf16.mxu0 %v583
  %2078 = vmatpush1.bf16.msra.mxu0 %v582
  %2079 = vmatprep.subr.bf16.mxu0 %v591
  %2080 = vmatpush1.bf16.msra.mxu0 %v590
  %2081 = vmatprep.subr.bf16.mxu0 %v599
  %2082 = vmatpush1.bf16.msra.mxu0 %v598
  %2083 = vmatprep.subr.bf16.mxu0 %v607
  %2084 = vmatpush1.bf16.msra.mxu0 %v606
  %2085 = vmatprep.subr.bf16.mxu0 %v615
  %2086 = vmatpush1.bf16.msra.mxu0 %v614
  %2087 = vmatprep.subr.bf16.mxu0 %v623
  %2088 = vmatpush1.bf16.msra.mxu0 %v622
  %2089 = vmatprep.subr.bf16.mxu0 %v631
  %2090 = vmatpush1.bf16.msra.mxu0 %v630
  %2091 = vmatprep.subr.bf16.mxu0 %v639
  %2092 = vmatpush1.bf16.msra.mxu0 %v638
  %2093 = vmatprep.subr.bf16.mxu0 %v647
  %2094 = vmatpush1.bf16.msra.mxu0 %v646
  %2095 = vmatprep.subr.bf16.mxu0 %v655
  %2096 = vmatpush1.bf16.msra.mxu0 %v654
  %2097 = vmatprep.subr.bf16.mxu0 %v663
  %2098 = vmatpush1.bf16.msra.mxu0 %v662
  %2099 = vmatprep.subr.bf16.mxu0 %v671
  %2100 = vmatpush1.bf16.msra.mxu0 %v670
  %2101 = vmatprep.subr.bf16.mxu0 %v679
  %2102 = vmatpush1.bf16.msra.mxu0 %v678
  %2103 = vmatprep.subr.bf16.mxu0 %v687
  %2104 = vmatpush1.bf16.msra.mxu0 %v686
  %2105 = vmatprep.subr.bf16.mxu0 %v695
  %2106 = vmatpush1.bf16.msra.mxu0 %v694
  %2107 = vmatprep.mubr.bf16.mxu0 %v1992
  %2108 = vmatmul.mubr.bf16.gmra.mrb[0].mxu0 %v1991
  %v2109 = vpop.f32.mrb[0].mxu0
  %v2110 = vadd.f32 0.0, %v2109
  %v2111 = vpop.f32.mrb[0].mxu0
  %v2112 = vadd.f32 0.0, %v2111
  %v2113 = vpop.f32.mrb[0].mxu0
  %v2114 = vpop.f32.mrb[0].mxu0
  %2115 = vdwg.mxu0
  %2116 = vmatprep.subr.bf16.mxu0 %v577
  %2117 = vmatpush1.bf16.msra.mxu0 %v576
  %2118 = vmatprep.subr.bf16.mxu0 %v585
  %2119 = vmatpush1.bf16.msra.mxu0 %v584
  %2120 = vmatprep.subr.bf16.mxu0 %v593
  %2121 = vmatpush1.bf16.msra.mxu0 %v592
  %2122 = vmatprep.subr.bf16.mxu0 %v601
  %2123 = vmatpush1.bf16.msra.mxu0 %v600
  %2124 = vmatprep.subr.bf16.mxu0 %v609
  %2125 = vmatpush1.bf16.msra.mxu0 %v608
  %2126 = vmatprep.subr.bf16.mxu0 %v617
  %2127 = vmatpush1.bf16.msra.mxu0 %v616
  %2128 = vmatprep.subr.bf16.mxu0 %v625
  %2129 = vmatpush1.bf16.msra.mxu0 %v624
  %2130 = vmatprep.subr.bf16.mxu0 %v633
  %2131 = vmatpush1.bf16.msra.mxu0 %v632
  %2132 = vmatprep.subr.bf16.mxu0 %v641
  %2133 = vmatpush1.bf16.msra.mxu0 %v640
  %2134 = vmatprep.subr.bf16.mxu0 %v649
  %2135 = vmatpush1.bf16.msra.mxu0 %v648
  %2136 = vmatprep.subr.bf16.mxu0 %v657
  %2137 = vmatpush1.bf16.msra.mxu0 %v656
  %2138 = vmatprep.subr.bf16.mxu0 %v665
  %2139 = vmatpush1.bf16.msra.mxu0 %v664
  %2140 = vmatprep.subr.bf16.mxu0 %v673
  %2141 = vmatpush1.bf16.msra.mxu0 %v672
  %2142 = vmatprep.subr.bf16.mxu0 %v681
  %2143 = vmatpush1.bf16.msra.mxu0 %v680
  %2144 = vmatprep.subr.bf16.mxu0 %v689
  %2145 = vmatpush1.bf16.msra.mxu0 %v688
  %2146 = vmatprep.subr.bf16.mxu0 %v697
  %2147 = vmatpush1.bf16.msra.mxu0 %v696
  %2148 = vmatprep.mubr.bf16.mxu0 %v1992
  %2149 = vmatmul.mubr.bf16.gmra.mrb[0].mxu0 %v1991
  %v2150 = vpop.f32.mrb[0].mxu0
  %v2151 = vadd.f32 0.0, %v2150
  %v2152 = vpop.f32.mrb[0].mxu0
  %v2153 = vadd.f32 0.0, %v2152
  %v2154 = vpop.f32.mrb[0].mxu0
  %v2155 = vpop.f32.mrb[0].mxu0
  %2156 = vdwg.mxu0
  %v2157 = vadd.f32 %v2028, %v995
  %v2158 = vadd.f32 %v2030, %v999
  %v2159 = vadd.f32 %v2069, %v1003
  %v2160 = vadd.f32 %v2071, %v1007
  %v2161 = vxor.u32 %v2157, 2147483648
  %v2162 = vxor.u32 %v2158, 2147483648
  %v2163 = vxor.u32 %v2159, 2147483648
  %v2164 = vmul.f32 %v2161, 1.442695
  %v2165 = vpow.pop %v2164
  %v2166 = vmul.f32 %v2162, 1.442695
  %v2167 = vpow.pop %v2166
  %v2168 = vmul.f32 %v2163, 1.442695
  %v2169 = vpow.pop %v2168
  %v2170 = vadd.f32 %v2165, 1.0
  %v2171 = vadd.f32 %v2167, 1.0
  %v2172 = vadd.f32 %v2169, 1.0
  %v2173 = vrcp.pop %v2170
  %v2174 = vmul.f32 1.0, %v2173
  %v2175 = vrcp.pop %v2171
  %v2176 = vmul.f32 1.0, %v2175
  %v2177 = vrcp.pop %v2172
  %v2178 = vmul.f32 1.0, %v2177
  %v2179 = vtanh.pop %v2160
  %v2180 = vmul.f32 %v2176, %v1953
  %v2181 = vmul.f32 %v2174, %v2179
  %v2182 = vadd.f32 %v2180, %v2181
  %v2183 = vtanh.pop %v2182
  %v2184 = vmul.f32 %v2178, %v2183
  %s2185 = smul.u32 6, 4
  %s2186 = smul.addr %s2185, 8
  %s2187 = scalar_lea.vmem %s0, %s2186
  %v2188 = vld [vmem:[%s2187] sm:$0xff]
  %v2189 = vld [vmem:[%s2187 + $0x8] sm:$0xff]
  %v2190 = vld [vmem:[%s2187 + $0x10] sm:$0xff]
  %v2191 = vld [vmem:[%s2187 + $0x18] sm:$0xff]
  %v2192 = vadd.f32 %v2188, %v2110
  %v2193 = vadd.f32 %v2189, %v2112
  %v2194 = vadd.f32 %v2190, %v2151
  %v2195 = vadd.f32 %v2191, %v2153
  %v2196 = vxor.u32 %v2192, 2147483648
  %v2197 = vxor.u32 %v2193, 2147483648
  %v2198 = vxor.u32 %v2194, 2147483648
  %v2199 = vmul.f32 %v2196, 1.442695
  %v2200 = vpow.pop %v2199
  %v2201 = vmul.f32 %v2197, 1.442695
  %v2202 = vpow.pop %v2201
  %v2203 = vmul.f32 %v2198, 1.442695
  %v2204 = vpow.pop %v2203
  %v2205 = vadd.f32 %v2200, 1.0
  %v2206 = vadd.f32 %v2202, 1.0
  %v2207 = vadd.f32 %v2204, 1.0
  %v2208 = vrcp.pop %v2205
  %v2209 = vmul.f32 1.0, %v2208
  %v2210 = vrcp.pop %v2206
  %v2211 = vmul.f32 1.0, %v2210
  %v2212 = vrcp.pop %v2207
  %v2213 = vmul.f32 1.0, %v2212
  %v2214 = vtanh.pop %v2195
  %v2215 = vmul.f32 %v2211, %v1988
  %v2216 = vmul.f32 %v2209, %v2214
  %v2217 = vadd.f32 %v2215, %v2216
  %v2218 = vtanh.pop %v2217
  %v2219 = vmul.f32 %v2213, %v2218
  %v2220 = vpack.c.bf16 %v2219, %v2219
  %v2221 = vpack.c.bf16 %v2184, %v2184
  %2222 = vmatprep.subr.bf16.mxu0 %v571
  %2223 = vmatpush1.bf16.msra.mxu0 %v570
  %2224 = vmatprep.subr.bf16.mxu0 %v579
  %2225 = vmatpush1.bf16.msra.mxu0 %v578
  %2226 = vmatprep.subr.bf16.mxu0 %v587
  %2227 = vmatpush1.bf16.msra.mxu0 %v586
  %2228 = vmatprep.subr.bf16.mxu0 %v595
  %2229 = vmatpush1.bf16.msra.mxu0 %v594
  %2230 = vmatprep.subr.bf16.mxu0 %v603
  %2231 = vmatpush1.bf16.msra.mxu0 %v602
  %2232 = vmatprep.subr.bf16.mxu0 %v611
  %2233 = vmatpush1.bf16.msra.mxu0 %v610
  %2234 = vmatprep.subr.bf16.mxu0 %v619
  %2235 = vmatpush1.bf16.msra.mxu0 %v618
  %2236 = vmatprep.subr.bf16.mxu0 %v627
  %2237 = vmatpush1.bf16.msra.mxu0 %v626
  %2238 = vmatprep.subr.bf16.mxu0 %v635
  %2239 = vmatpush1.bf16.msra.mxu0 %v634
  %2240 = vmatprep.subr.bf16.mxu0 %v643
  %2241 = vmatpush1.bf16.msra.mxu0 %v642
  %2242 = vmatprep.subr.bf16.mxu0 %v651
  %2243 = vmatpush1.bf16.msra.mxu0 %v650
  %2244 = vmatprep.subr.bf16.mxu0 %v659
  %2245 = vmatpush1.bf16.msra.mxu0 %v658
  %2246 = vmatprep.subr.bf16.mxu0 %v667
  %2247 = vmatpush1.bf16.msra.mxu0 %v666
  %2248 = vmatprep.subr.bf16.mxu0 %v675
  %2249 = vmatpush1.bf16.msra.mxu0 %v674
  %2250 = vmatprep.subr.bf16.mxu0 %v683
  %2251 = vmatpush1.bf16.msra.mxu0 %v682
  %2252 = vmatprep.subr.bf16.mxu0 %v691
  %2253 = vmatpush1.bf16.msra.mxu0 %v690
  %2254 = vmatprep.mubr.bf16.mxu0 %v2221
  %2255 = vmatmul.mubr.bf16.gmra.mrb[0].mxu0 %v2220
  %v2256 = vpop.f32.mrb[0].mxu0
  %v2257 = vadd.f32 0.0, %v2256
  %v2258 = vpop.f32.mrb[0].mxu0
  %v2259 = vadd.f32 0.0, %v2258
  %v2260 = vpop.f32.mrb[0].mxu0
  %v2261 = vpop.f32.mrb[0].mxu0
  %2262 = vdwg.mxu0
  %2263 = vmatprep.subr.bf16.mxu0 %v573
  %2264 = vmatpush1.bf16.msra.mxu0 %v572
  %2265 = vmatprep.subr.bf16.mxu0 %v581
  %2266 = vmatpush1.bf16.msra.mxu0 %v580
  %2267 = vmatprep.subr.bf16.mxu0 %v589
  %2268 = vmatpush1.bf16.msra.mxu0 %v588
  %2269 = vmatprep.subr.bf16.mxu0 %v597
  %2270 = vmatpush1.bf16.msra.mxu0 %v596
  %2271 = vmatprep.subr.bf16.mxu0 %v605
  %2272 = vmatpush1.bf16.msra.mxu0 %v604
  %2273 = vmatprep.subr.bf16.mxu0 %v613
  %2274 = vmatpush1.bf16.msra.mxu0 %v612
  %2275 = vmatprep.subr.bf16.mxu0 %v621
  %2276 = vmatpush1.bf16.msra.mxu0 %v620
  %2277 = vmatprep.subr.bf16.mxu0 %v629
  %2278 = vmatpush1.bf16.msra.mxu0 %v628
  %2279 = vmatprep.subr.bf16.mxu0 %v637
  %2280 = vmatpush1.bf16.msra.mxu0 %v636
  %2281 = vmatprep.subr.bf16.mxu0 %v645
  %2282 = vmatpush1.bf16.msra.mxu0 %v644
  %2283 = vmatprep.subr.bf16.mxu0 %v653
  %2284 = vmatpush1.bf16.msra.mxu0 %v652
  %2285 = vmatprep.subr.bf16.mxu0 %v661
  %2286 = vmatpush1.bf16.msra.mxu0 %v660
  %2287 = vmatprep.subr.bf16.mxu0 %v669
  %2288 = vmatpush1.bf16.msra.mxu0 %v668
  %2289 = vmatprep.subr.bf16.mxu0 %v677
  %2290 = vmatpush1.bf16.msra.mxu0 %v676
  %2291 = vmatprep.subr.bf16.mxu0 %v685
  %2292 = vmatpush1.bf16.msra.mxu0 %v684
  %2293 = vmatprep.subr.bf16.mxu0 %v693
  %2294 = vmatpush1.bf16.msra.mxu0 %v692
  %2295 = vmatprep.mubr.bf16.mxu0 %v2221
  %2296 = vmatmul.mubr.bf16.gmra.mrb[0].mxu0 %v2220
  %v2297 = vpop.f32.mrb[0].mxu0
  %v2298 = vadd.f32 0.0, %v2297
  %v2299 = vpop.f32.mrb[0].mxu0
  %v2300 = vadd.f32 0.0, %v2299
  %v2301 = vpop.f32.mrb[0].mxu0
  %v2302 = vpop.f32.mrb[0].mxu0
  %2303 = vdwg.mxu0
  %2304 = vmatprep.subr.bf16.mxu0 %v575
  %2305 = vmatpush1.bf16.msra.mxu0 %v574
  %2306 = vmatprep.subr.bf16.mxu0 %v583
  %2307 = vmatpush1.bf16.msra.mxu0 %v582
  %2308 = vmatprep.subr.bf16.mxu0 %v591
  %2309 = vmatpush1.bf16.msra.mxu0 %v590
  %2310 = vmatprep.subr.bf16.mxu0 %v599
  %2311 = vmatpush1.bf16.msra.mxu0 %v598
  %2312 = vmatprep.subr.bf16.mxu0 %v607
  %2313 = vmatpush1.bf16.msra.mxu0 %v606
  %2314 = vmatprep.subr.bf16.mxu0 %v615
  %2315 = vmatpush1.bf16.msra.mxu0 %v614
  %2316 = vmatprep.subr.bf16.mxu0 %v623
  %2317 = vmatpush1.bf16.msra.mxu0 %v622
  %2318 = vmatprep.subr.bf16.mxu0 %v631
  %2319 = vmatpush1.bf16.msra.mxu0 %v630
  %2320 = vmatprep.subr.bf16.mxu0 %v639
  %2321 = vmatpush1.bf16.msra.mxu0 %v638
  %2322 = vmatprep.subr.bf16.mxu0 %v647
  %2323 = vmatpush1.bf16.msra.mxu0 %v646
  %2324 = vmatprep.subr.bf16.mxu0 %v655
  %2325 = vmatpush1.bf16.msra.mxu0 %v654
  %2326 = vmatprep.subr.bf16.mxu0 %v663
  %2327 = vmatpush1.bf16.msra.mxu0 %v662
  %2328 = vmatprep.subr.bf16.mxu0 %v671
  %2329 = vmatpush1.bf16.msra.mxu0 %v670
  %2330 = vmatprep.subr.bf16.mxu0 %v679
  %2331 = vmatpush1.bf16.msra.mxu0 %v678
  %2332 = vmatprep.subr.bf16.mxu0 %v687
  %2333 = vmatpush1.bf16.msra.mxu0 %v686
  %2334 = vmatprep.subr.bf16.mxu0 %v695
  %2335 = vmatpush1.bf16.msra.mxu0 %v694
  %2336 = vmatprep.mubr.bf16.mxu0 %v2221
  %2337 = vmatmul.mubr.bf16.gmra.mrb[0].mxu0 %v2220
  %v2338 = vpop.f32.mrb[0].mxu0
  %v2339 = vadd.f32 0.0, %v2338
  %v2340 = vpop.f32.mrb[0].mxu0
  %v2341 = vadd.f32 0.0, %v2340
  %v2342 = vpop.f32.mrb[0].mxu0
  %v2343 = vpop.f32.mrb[0].mxu0
  %2344 = vdwg.mxu0
  %2345 = vmatprep.subr.bf16.mxu0 %v577
  %2346 = vmatpush1.bf16.msra.mxu0 %v576
  %2347 = vmatprep.subr.bf16.mxu0 %v585
  %2348 = vmatpush1.bf16.msra.mxu0 %v584
  %2349 = vmatprep.subr.bf16.mxu0 %v593
  %2350 = vmatpush1.bf16.msra.mxu0 %v592
  %2351 = vmatprep.subr.bf16.mxu0 %v601
  %2352 = vmatpush1.bf16.msra.mxu0 %v600
  %2353 = vmatprep.subr.bf16.mxu0 %v609
  %2354 = vmatpush1.bf16.msra.mxu0 %v608
  %2355 = vmatprep.subr.bf16.mxu0 %v617
  %2356 = vmatpush1.bf16.msra.mxu0 %v616
  %2357 = vmatprep.subr.bf16.mxu0 %v625
  %2358 = vmatpush1.bf16.msra.mxu0 %v624
  %2359 = vmatprep.subr.bf16.mxu0 %v633
  %2360 = vmatpush1.bf16.msra.mxu0 %v632
  %2361 = vmatprep.subr.bf16.mxu0 %v641
  %2362 = vmatpush1.bf16.msra.mxu0 %v640
  %2363 = vmatprep.subr.bf16.mxu0 %v649
  %2364 = vmatpush1.bf16.msra.mxu0 %v648
  %2365 = vmatprep.subr.bf16.mxu0 %v657
  %2366 = vmatpush1.bf16.msra.mxu0 %v656
  %2367 = vmatprep.subr.bf16.mxu0 %v665
  %2368 = vmatpush1.bf16.msra.mxu0 %v664
  %2369 = vmatprep.subr.bf16.mxu0 %v673
  %2370 = vmatpush1.bf16.msra.mxu0 %v672
  %2371 = vmatprep.subr.bf16.mxu0 %v681
  %2372 = vmatpush1.bf16.msra.mxu0 %v680
  %2373 = vmatprep.subr.bf16.mxu0 %v689
  %2374 = vmatpush1.bf16.msra.mxu0 %v688
  %2375 = vmatprep.subr.bf16.mxu0 %v697
  %2376 = vmatpush1.bf16.msra.mxu0 %v696
  %2377 = vmatprep.mubr.bf16.mxu0 %v2221
  %2378 = vmatmul.mubr.bf16.gmra.mrb[0].mxu0 %v2220
  %v2379 = vpop.f32.mrb[0].mxu0
  %v2380 = vadd.f32 0.0, %v2379
  %v2381 = vpop.f32.mrb[0].mxu0
  %v2382 = vadd.f32 0.0, %v2381
  %v2383 = vpop.f32.mrb[0].mxu0
  %v2384 = vpop.f32.mrb[0].mxu0
  %2385 = vdwg.mxu0
  %v2386 = vadd.f32 %v2257, %v995
  %v2387 = vadd.f32 %v2259, %v999
  %v2388 = vadd.f32 %v2298, %v1003
  %v2389 = vadd.f32 %v2300, %v1007
  %v2390 = vxor.u32 %v2386, 2147483648
  %v2391 = vxor.u32 %v2387, 2147483648
  %v2392 = vxor.u32 %v2388, 2147483648
  %v2393 = vmul.f32 %v2390, 1.442695
  %v2394 = vpow.pop %v2393
  %v2395 = vmul.f32 %v2391, 1.442695
  %v2396 = vpow.pop %v2395
  %v2397 = vmul.f32 %v2392, 1.442695
  %v2398 = vpow.pop %v2397
  %v2399 = vadd.f32 %v2394, 1.0
  %v2400 = vadd.f32 %v2396, 1.0
  %v2401 = vadd.f32 %v2398, 1.0
  %v2402 = vrcp.pop %v2399
  %v2403 = vmul.f32 1.0, %v2402
  %v2404 = vrcp.pop %v2400
  %v2405 = vmul.f32 1.0, %v2404
  %v2406 = vrcp.pop %v2401
  %v2407 = vmul.f32 1.0, %v2406
  %v2408 = vtanh.pop %v2389
  %v2409 = vmul.f32 %v2405, %v2182
  %v2410 = vmul.f32 %v2403, %v2408
  %v2411 = vadd.f32 %v2409, %v2410
  %v2412 = vtanh.pop %v2411
  %v2413 = vmul.f32 %v2407, %v2412
  %s2414 = smul.u32 7, 4
  %s2415 = smul.addr %s2414, 8
  %s2416 = scalar_lea.vmem %s0, %s2415
  %v2417 = vld [vmem:[%s2416] sm:$0xff]
  %v2418 = vld [vmem:[%s2416 + $0x8] sm:$0xff]
  %v2419 = vld [vmem:[%s2416 + $0x10] sm:$0xff]
  %v2420 = vld [vmem:[%s2416 + $0x18] sm:$0xff]
  %v2421 = vadd.f32 %v2417, %v2339
  %v2422 = vadd.f32 %v2418, %v2341
  %v2423 = vadd.f32 %v2419, %v2380
  %v2424 = vadd.f32 %v2420, %v2382
  %v2425 = vxor.u32 %v2421, 2147483648
  %v2426 = vxor.u32 %v2422, 2147483648
  %v2427 = vxor.u32 %v2423, 2147483648
  %v2428 = vmul.f32 %v2425, 1.442695
  %v2429 = vpow.pop %v2428
  %v2430 = vmul.f32 %v2426, 1.442695
  %v2431 = vpow.pop %v2430
  %v2432 = vmul.f32 %v2427, 1.442695
  %v2433 = vpow.pop %v2432
  %v2434 = vadd.f32 %v2429, 1.0
  %v2435 = vadd.f32 %v2431, 1.0
  %v2436 = vadd.f32 %v2433, 1.0
  %v2437 = vrcp.pop %v2434
  %v2438 = vmul.f32 1.0, %v2437
  %v2439 = vrcp.pop %v2435
  %v2440 = vmul.f32 1.0, %v2439
  %v2441 = vrcp.pop %v2436
  %v2442 = vmul.f32 1.0, %v2441
  %v2443 = vtanh.pop %v2424
  %v2444 = vmul.f32 %v2440, %v2217
  %v2445 = vmul.f32 %v2438, %v2443
  %v2446 = vadd.f32 %v2444, %v2445
  %v2447 = vtanh.pop %v2446
  %v2448 = vmul.f32 %v2442, %v2447
  %v2449 = vpack.c.bf16 %v2448, %v2448
  %v2450 = vpack.c.bf16 %v2413, %v2413
  %2451 = vmatprep.subr.bf16.mxu0 %v571
  %2452 = vmatpush1.bf16.msra.mxu0 %v570
  %2453 = vmatprep.subr.bf16.mxu0 %v579
  %2454 = vmatpush1.bf16.msra.mxu0 %v578
  %2455 = vmatprep.subr.bf16.mxu0 %v587
  %2456 = vmatpush1.bf16.msra.mxu0 %v586
  %2457 = vmatprep.subr.bf16.mxu0 %v595
  %2458 = vmatpush1.bf16.msra.mxu0 %v594
  %2459 = vmatprep.subr.bf16.mxu0 %v603
  %2460 = vmatpush1.bf16.msra.mxu0 %v602
  %2461 = vmatprep.subr.bf16.mxu0 %v611
  %2462 = vmatpush1.bf16.msra.mxu0 %v610
  %2463 = vmatprep.subr.bf16.mxu0 %v619
  %2464 = vmatpush1.bf16.msra.mxu0 %v618
  %2465 = vmatprep.subr.bf16.mxu0 %v627
  %2466 = vmatpush1.bf16.msra.mxu0 %v626
  %2467 = vmatprep.subr.bf16.mxu0 %v635
  %2468 = vmatpush1.bf16.msra.mxu0 %v634
  %2469 = vmatprep.subr.bf16.mxu0 %v643
  %2470 = vmatpush1.bf16.msra.mxu0 %v642
  %2471 = vmatprep.subr.bf16.mxu0 %v651
  %2472 = vmatpush1.bf16.msra.mxu0 %v650
  %2473 = vmatprep.subr.bf16.mxu0 %v659
  %2474 = vmatpush1.bf16.msra.mxu0 %v658
  %2475 = vmatprep.subr.bf16.mxu0 %v667
  %2476 = vmatpush1.bf16.msra.mxu0 %v666
  %2477 = vmatprep.subr.bf16.mxu0 %v675
  %2478 = vmatpush1.bf16.msra.mxu0 %v674
  %2479 = vmatprep.subr.bf16.mxu0 %v683
  %2480 = vmatpush1.bf16.msra.mxu0 %v682
  %2481 = vmatprep.subr.bf16.mxu0 %v691
  %2482 = vmatpush1.bf16.msra.mxu0 %v690
  %2483 = vmatprep.mubr.bf16.mxu0 %v2450
  %2484 = vmatmul.mubr.bf16.gmra.mrb[0].mxu0 %v2449
  %v2485 = vpop.f32.mrb[0].mxu0
  %v2486 = vadd.f32 0.0, %v2485
  %v2487 = vpop.f32.mrb[0].mxu0
  %v2488 = vadd.f32 0.0, %v2487
  %v2489 = vpop.f32.mrb[0].mxu0
  %v2490 = vpop.f32.mrb[0].mxu0
  %2491 = vdwg.mxu0
  %2492 = vmatprep.subr.bf16.mxu0 %v573
  %2493 = vmatpush1.bf16.msra.mxu0 %v572
  %2494 = vmatprep.subr.bf16.mxu0 %v581
  %2495 = vmatpush1.bf16.msra.mxu0 %v580
  %2496 = vmatprep.subr.bf16.mxu0 %v589
  %2497 = vmatpush1.bf16.msra.mxu0 %v588
  %2498 = vmatprep.subr.bf16.mxu0 %v597
  %2499 = vmatpush1.bf16.msra.mxu0 %v596
  %2500 = vmatprep.subr.bf16.mxu0 %v605
  %2501 = vmatpush1.bf16.msra.mxu0 %v604
  %2502 = vmatprep.subr.bf16.mxu0 %v613
  %2503 = vmatpush1.bf16.msra.mxu0 %v612
  %2504 = vmatprep.subr.bf16.mxu0 %v621
  %2505 = vmatpush1.bf16.msra.mxu0 %v620
  %2506 = vmatprep.subr.bf16.mxu0 %v629
  %2507 = vmatpush1.bf16.msra.mxu0 %v628
  %2508 = vmatprep.subr.bf16.mxu0 %v637
  %2509 = vmatpush1.bf16.msra.mxu0 %v636
  %2510 = vmatprep.subr.bf16.mxu0 %v645
  %2511 = vmatpush1.bf16.msra.mxu0 %v644
  %2512 = vmatprep.subr.bf16.mxu0 %v653
  %2513 = vmatpush1.bf16.msra.mxu0 %v652
  %2514 = vmatprep.subr.bf16.mxu0 %v661
  %2515 = vmatpush1.bf16.msra.mxu0 %v660
  %2516 = vmatprep.subr.bf16.mxu0 %v669
  %2517 = vmatpush1.bf16.msra.mxu0 %v668
  %2518 = vmatprep.subr.bf16.mxu0 %v677
  %2519 = vmatpush1.bf16.msra.mxu0 %v676
  %2520 = vmatprep.subr.bf16.mxu0 %v685
  %2521 = vmatpush1.bf16.msra.mxu0 %v684
  %2522 = vmatprep.subr.bf16.mxu0 %v693
  %2523 = vmatpush1.bf16.msra.mxu0 %v692
  %2524 = vmatprep.mubr.bf16.mxu0 %v2450
  %2525 = vmatmul.mubr.bf16.gmra.mrb[0].mxu0 %v2449
  %v2526 = vpop.f32.mrb[0].mxu0
  %v2527 = vadd.f32 0.0, %v2526
  %v2528 = vpop.f32.mrb[0].mxu0
  %v2529 = vadd.f32 0.0, %v2528
  %v2530 = vpop.f32.mrb[0].mxu0
  %v2531 = vpop.f32.mrb[0].mxu0
  %2532 = vdwg.mxu0
  %v2533 = vadd.f32 %v2486, %v995
  %v2534 = vadd.f32 %v2488, %v999
  %v2535 = vadd.f32 %v2527, %v1003
  %v2536 = vadd.f32 %v2529, %v1007
  %v2537 = vxor.u32 %v2533, 2147483648
  %v2538 = vxor.u32 %v2534, 2147483648
  %v2539 = vxor.u32 %v2535, 2147483648
  %v2540 = vmul.f32 %v2537, 1.442695
  %v2541 = vpow.pop %v2540
  %v2542 = vmul.f32 %v2538, 1.442695
  %v2543 = vpow.pop %v2542
  %v2544 = vmul.f32 %v2539, 1.442695
  %v2545 = vpow.pop %v2544
  %v2546 = vadd.f32 %v2541, 1.0
  %v2547 = vadd.f32 %v2543, 1.0
  %v2548 = vadd.f32 %v2545, 1.0
  %v2549 = vrcp.pop %v2546
  %v2550 = vmul.f32 1.0, %v2549
  %v2551 = vrcp.pop %v2547
  %v2552 = vmul.f32 1.0, %v2551
  %v2553 = vrcp.pop %v2548
  %v2554 = vmul.f32 1.0, %v2553
  %v2555 = vtanh.pop %v2536
  %v2556 = vmul.f32 %v2552, %v2411
  %v2557 = vmul.f32 %v2550, %v2555
  %v2558 = vadd.f32 %v2556, %v2557
  %v2559 = vtanh.pop %v2558
  %v2560 = vmul.f32 %v2554, %v2559
  %v2561 = vpack.c.bf16 %v2560, %v2560
  %v2562 = vld [vmem:[%s3] sm:$0xf]
  %v2563 = vld [vmem:[%s3 + $0x4] sm:$0xf]
  %v2564 = vld [vmem:[%s3 + $0x8] sm:$0xf]
  %v2565 = vld [vmem:[%s3 + $0xc] sm:$0xf]
  %v2566 = vld [vmem:[%s3 + $0x10] sm:$0xf]
  %v2567 = vld [vmem:[%s3 + $0x14] sm:$0xf]
  %v2568 = vld [vmem:[%s3 + $0x18] sm:$0xf]
  %v2569 = vld [vmem:[%s3 + $0x1c] sm:$0xf]
  %v2570 = vld [vmem:[%s3 + $0x20] sm:$0xf]
  %v2571 = vld [vmem:[%s3 + $0x24] sm:$0xf]
  %v2572 = vld [vmem:[%s3 + $0x28] sm:$0xf]
  %v2573 = vld [vmem:[%s3 + $0x2c] sm:$0xf]
  %v2574 = vld [vmem:[%s3 + $0x30] sm:$0xf]
  %v2575 = vld [vmem:[%s3 + $0x34] sm:$0xf]
  %v2576 = vld [vmem:[%s3 + $0x38] sm:$0xf]
  %v2577 = vld [vmem:[%s3 + $0x3c] sm:$0xf]
  %v2578 = vld [vmem:[%s4] sm:$0x1]
  %v2580 = vlaneseq
  %v2581 = vshrl.u32 %v2580, 7
  %v2582 = vsub.s32 0, %v2581
  %v2583 = vrot.slane %v2578, %v2582
  %v2601 = vunpack.c.l.b16 %v2562
  %v2602 = vunpack.c.l.b16 %v2563
  %v2603 = vunpack.c.l.b16 %v2564
  %v2604 = vunpack.c.l.b16 %v2565
  %v2605 = vunpack.c.l.b16 %v2566
  %v2606 = vunpack.c.l.b16 %v2567
  %v2607 = vunpack.c.l.b16 %v2568
  %v2608 = vunpack.c.l.b16 %v2569
  %v2609 = vunpack.c.l.b16 %v2570
  %v2610 = vunpack.c.l.b16 %v2571
  %v2611 = vunpack.c.l.b16 %v2572
  %v2612 = vunpack.c.l.b16 %v2573
  %v2613 = vunpack.c.l.b16 %v2574
  %v2614 = vunpack.c.l.b16 %v2575
  %v2615 = vunpack.c.l.b16 %v2576
  %v2616 = vunpack.c.l.b16 %v2577
  %v2617 = vpack.c.b16 %v2602, %v2601
  %v2618 = vpack.c.b16 %v2604, %v2603
  %v2619 = vpack.c.b16 %v2606, %v2605
  %v2620 = vpack.c.b16 %v2608, %v2607
  %v2621 = vpack.c.b16 %v2610, %v2609
  %v2622 = vpack.c.b16 %v2612, %v2611
  %v2623 = vpack.c.b16 %v2614, %v2613
  %v2624 = vpack.c.b16 %v2616, %v2615
  %2633 = vmatprep.subr.bf16.mxu0 0
  %2634 = vmatpush1.bf16.msra.mxu0 %v2617
  %2635 = vmatprep.subr.bf16.mxu0 0
  %2636 = vmatpush1.bf16.msra.mxu0 %v2618
  %2637 = vmatprep.subr.bf16.mxu0 0
  %2638 = vmatpush1.bf16.msra.mxu0 %v2619
  %2639 = vmatprep.subr.bf16.mxu0 0
  %2640 = vmatpush1.bf16.msra.mxu0 %v2620
  %2641 = vmatprep.subr.bf16.mxu0 0
  %2642 = vmatpush1.bf16.msra.mxu0 %v2621
  %2643 = vmatprep.subr.bf16.mxu0 0
  %2644 = vmatpush1.bf16.msra.mxu0 %v2622
  %2645 = vmatprep.subr.bf16.mxu0 0
  %2646 = vmatpush1.bf16.msra.mxu0 %v2623
  %2647 = vmatprep.subr.bf16.mxu0 0
  %2648 = vmatpush1.bf16.msra.mxu0 %v2624
  %2649 = vmatprep.subr.bf16.mxu0 0
  %2650 = vmatpush1.bf16.msra.mxu0 0
  %2651 = vmatprep.subr.bf16.mxu0 0
  %2652 = vmatpush1.bf16.msra.mxu0 0
  %2653 = vmatprep.subr.bf16.mxu0 0
  %2654 = vmatpush1.bf16.msra.mxu0 0
  %2655 = vmatprep.subr.bf16.mxu0 0
  %2656 = vmatpush1.bf16.msra.mxu0 0
  %2657 = vmatprep.subr.bf16.mxu0 0
  %2658 = vmatpush1.bf16.msra.mxu0 0
  %2659 = vmatprep.subr.bf16.mxu0 0
  %2660 = vmatpush1.bf16.msra.mxu0 0
  %2661 = vmatprep.subr.bf16.mxu0 0
  %2662 = vmatpush1.bf16.msra.mxu0 0
  %2663 = vmatprep.subr.bf16.mxu0 0
  %2664 = vmatpush1.bf16.msra.mxu0 0
  %2665 = vmatprep.mubr.bf16.mxu0 0
  %2666 = vmatmul.mubr.bf16.gmra.mrb[0].mxu0 %v2561
  %v2667 = vpop.f32.mrb[0].mxu0
  %v2668 = vadd.f32 %v2583, %v2667
  %v2669 = vpop.f32.mrb[0].mxu0
  %v2670 = vpop.f32.mrb[0].mxu0
  %v2671 = vpop.f32.mrb[0].mxu0
  %2672 = vdwg.mxu0
  %v2673 = vlaneseq
  %v2674 = vand.u32 %v2673, 127
  %vm2675 = vcmp.ge.s32.totalorder %v2674, 0
  %vm2676 = vcmp.lt.s32.totalorder %v2674, 4
  %vm2677 = vmand %vm2675, %vm2676
  %v2678 = vsel %vm2677, %v2668, -inf
  %2679 = vmax.xlane.f32.xlu0 %v2678
  %v2680 = vpop.xlane.xlu0 %2679
  %v2681 = vsub.f32 %v2668, %v2680
  %v2682 = vmul.f32 %v2681, 1.442695
  %v2683 = vpow.pop %v2682
  %v2684 = vsel %vm2677, %v2683, 0.0
  %2685 = vadd.xlane.f32.xlu0 %v2684
  %v2686 = vpop.xlane.xlu0 %2685
  %v2687 = vrcp.pop %v2686
  %v2688 = vmul.f32 %v2684, %v2687
  %vm2689 = vcmp.ge.s32.totalorder %v2674, 4
  %vm2690 = vcmp.lt.s32.totalorder %v2674, 10
  %vm2691 = vmand %vm2689, %vm2690
  %v2692 = vsel %vm2691, %v2668, -inf
  %2693 = vmax.xlane.f32.xlu0 %v2692
  %v2694 = vpop.xlane.xlu0 %2693
  %v2695 = vsub.f32 %v2668, %v2694
  %v2696 = vmul.f32 %v2695, 1.442695
  %v2697 = vpow.pop %v2696
  %v2698 = vsel %vm2691, %v2697, 0.0
  %2699 = vadd.xlane.f32.xlu0 %v2698
  %v2700 = vpop.xlane.xlu0 %2699
  %v2701 = vrcp.pop %v2700
  %v2702 = vmul.f32 %v2698, %v2701
  %v2703 = vadd.f32 %v2688, %v2702
  %2704 = vst [vmem:[%s5] sm:$0xff] %v2703
  // Predicated region
  $region22: #{myrnn_forward.1} parent=0 // pred_check
    _
  $region23: #{myrnn_forward.1} parent=0 // pred_check_branch
    %2706 = sbr.rel (0) target = $region25
  $region24: #{myrnn_forward.1} parent=0 // pred_region
    _
  $region25: #{myrnn_forward.1} parent=0 // pred_fallthru
    _
  // Predicated region
  $region26: #{myrnn_forward.1} parent=0 // pred_check
    _
  $region27: #{myrnn_forward.1} parent=0 // pred_check_branch
    %2708 = sbr.rel (0) target = $region29
  $region28: #{myrnn_forward.1} parent=0 // pred_region
    _
  $region29: #{myrnn_forward.1} parent=0 // pred_fallthru
    _

</llo_original>
